<compile_context>
chip_gen: v7x
topology: tpu7x:2x2x1
jax: 0.10.0
libtpu: 0.0.40
codegen_flags: <defaults>
</compile_context>

<pallas_src>
import functools
import math

import jax
import jax.numpy as jnp
from jax import lax
from jax.experimental import pallas as pl
from jax.experimental.pallas import tpu as pltpu


COMPUTE_DTYPE = jnp.bfloat16   # MXU operand dtype; accumulation/epilogue are f32


def _round_up(x, m):
    return (x + m - 1) // m * m


# ----------------------------------------------------------------------------
# Fused SpatioTemporalConv Pallas kernel
# ----------------------------------------------------------------------------
def _st_conv_kernel(x_ref, ws_ref, ss_ref, bs_ref, wt_ref, st_ref, bt_ref, *rest,
                    taps, cinp, kt, pad_t, stride_t, d_in, d_out, pix, relu_out,
                    has_res):
    """Fused (1,k,k) conv + BN + ReLU + (kt,1,1) conv + BN (+res) (+ReLU).

    x_ref : (1, d_in, n_planes*cinp, L)  channels-first padded/flattened planes
    ws_ref: (midp, len(taps)*cinp)       spatial weight (pre-transposed)
    wt_ref: (coutp, kt*midp)             temporal weight (pre-transposed)
    ss/bs : (midp, 1)   folded BN scale/bias after the spatial conv
    st/bt : (coutp, 1)  folded BN scale/bias after the temporal conv
    rest  : ([res_ref (1,d_out,coutp,pix)], out_ref (1,d_out,coutp,pix),
             spat_ref VMEM scratch (d_in + 2*pad_t, midp, pix))
    """
    if has_res:
        r_ref, o_ref, spat_ref = rest
    else:
        o_ref, spat_ref = rest

    ws = ws_ref[...]                       # (midp, KK)   bf16
    ss = ss_ref[...]                       # (midp, 1)    f32 (hoisted once)
    bs = bs_ref[...]
    midp = ws.shape[0]

    # Temporal zero-padding frames live only in the VMEM scratch.
    for f in range(pad_t):
        zeros = jnp.zeros((midp, pix), spat_ref.dtype)
        spat_ref[f] = zeros
        spat_ref[d_in + 2 * pad_t - 1 - f] = zeros

    # ---- spatial (1,k,k) conv: one im2col matmul per frame, pixels on lanes --
    for di in range(d_in):
        parts = [x_ref[0, di, blk * cinp:(blk + 1) * cinp, off:off + pix]
                 for blk, off in taps]
        patch = parts[0] if len(parts) == 1 else jnp.concatenate(parts, axis=0)
        s = jnp.dot(ws, patch, preferred_element_type=jnp.float32)   # (midp, pix)
        s = jnp.maximum(s * ss + bs, 0.0)                            # BN + ReLU (f32)
        spat_ref[pad_t + di] = s.astype(spat_ref.dtype)

    # ---- temporal (kt,1,1) conv + BN (+residual) (+ReLU), pixels on lanes ----
    wt = wt_ref[...]                       # (coutp, kt*midp)
    st = st_ref[...]
    bt = bt_ref[...]
    for t in range(d_out):
        base = t * stride_t
        parts = [spat_ref[base + kd] for kd in range(kt)]
        tp = parts[0] if len(parts) == 1 else jnp.concatenate(parts, axis=0)
        y = jnp.dot(wt, tp, preferred_element_type=jnp.float32)      # (coutp, pix)
        y = y * st + bt
        if has_res:
            y = y + r_ref[0, t]
        if relu_out:
            y = jnp.maximum(y, 0.0)
        o_ref[0, t] = y


# ----------------------------------------------------------------------------
# Wrapper-side layout helpers (cheap XLA plumbing around the fused kernel)
# ----------------------------------------------------------------------------
def _build_planes(x, *, k, pad, stride, cinp):
    """NDHWC -> channels-first padded 'plane' layout (N, D, B*cinp, L).

    stride 1: one plane (padded frame, row width wq = W + 2*pad).
    stride 2: four parity planes so the strided conv becomes unstrided taps.
    Tap (ky,kx) of the conv is then the contiguous lane slice
    [blk*cinp:(blk+1)*cinp, off:off+pix] of one frame.
    """
    n, d, h, w, c = x.shape
    ho = (h + 2 * pad - k) // stride + 1
    wo = (w + 2 * pad - k) // stride + 1
    xt = jnp.transpose(x, (0, 1, 4, 2, 3))                            # (N,D,C,H,W)
    xt = jnp.pad(xt, ((0, 0), (0, 0), (0, cinp - c), (pad, pad), (pad, pad)))
    hp, wp = h + 2 * pad, w + 2 * pad
    if stride == 1:
        nplanes, hq, wq = 1, hp, wp
        planes = xt.reshape(n, d, 1, cinp, hq, wq)
        taps = [(0, ky * wq + kx) for ky in range(k) for kx in range(k)]
    else:
        assert stride == 2, "only strides 1 and 2 occur in this block"
        hq, wq = -(-hp // 2), -(-wp // 2)
        xt = jnp.pad(xt, ((0, 0), (0, 0), (0, 0), (0, 2 * hq - hp), (0, 2 * wq - wp)))
        xr = xt.reshape(n, d, cinp, hq, 2, wq, 2)
        planes = jnp.transpose(xr, (0, 1, 4, 6, 2, 3, 5)).reshape(n, d, 4, cinp, hq, wq)
        nplanes = 4
        taps = [((ky % 2) * 2 + (kx % 2), (ky // 2) * wq + (kx // 2))
                for ky in range(k) for kx in range(k)]
    pix = _round_up(ho * wq, 128)          # lane-dense pixel block (extra cols are junk)
    max_off = max(off for _, off in taps)
    flat_len = _round_up(max(max_off + pix, hq * wq), 128)
    flat = planes.reshape(n, d, nplanes * cinp, hq * wq)
    flat = jnp.pad(flat, ((0, 0), (0, 0), (0, 0), (0, flat_len - hq * wq)))
    return flat.astype(COMPUTE_DTYPE), taps, wq, ho, wo, pix


def _prep_spatial_w(w, cinp, midp):
    k, _, cin, mid = w.shape
    wp = jnp.zeros((k, k, cinp, midp), jnp.float32).at[:, :, :cin, :mid].set(w)
    return wp.reshape(k * k * cinp, midp).T.astype(COMPUTE_DTYPE)     # (midp, KK)


def _prep_temporal_w(w, midp, coutp):
    kt, mid, cout = w.shape
    wp = jnp.zeros((kt, midp, coutp), jnp.float32).at[:, :mid, :cout].set(w)
    return wp.reshape(kt * midp, coutp).T.astype(COMPUTE_DTYPE)       # (coutp, kt*midp)


def _prep_vec(v, n_pad):
    return jnp.zeros((n_pad,), jnp.float32).at[:v.shape[0]].set(v).reshape(n_pad, 1)


def _residual_to_flat(res, coutp, wq, pix):
    """NDHWC residual -> (N, D, coutp, pix) matching the kernel output layout."""
    n, d, h, w, c = res.shape
    rt = jnp.transpose(res, (0, 1, 4, 2, 3))
    rt = jnp.pad(rt, ((0, 0), (0, 0), (0, coutp - c), (0, 0), (0, wq - w)))
    rt = rt.reshape(n, d, coutp, h * wq)
    return jnp.pad(rt, ((0, 0), (0, 0), (0, 0), (0, pix - h * wq)))


def _flat_to_ndhwc(out, cout, ho, wo, wq):
    n, d_out = out.shape[0], out.shape[1]
    y = out[:, :, :cout, :ho * wq].reshape(n, d_out, cout, ho, wq)[..., :wo]
    return jnp.transpose(y, (0, 1, 3, 4, 2))


# ----------------------------------------------------------------------------
# Fused SpatioTemporalConv entry point
# ----------------------------------------------------------------------------
def fused_st_conv(x, s_w, s_scale, s_bias, t_w, t_scale, t_bias, *,
                  k, padding, stride, relu_out, residual=None):
    """One full SpatioTemporalConv with folded BNs, optional residual/ReLU.

    x: (N, D, H, W, Cin) f32 NDHWC.  Returns (N, Dout, Ho, Wo, Cout) f32.
    """
    n, d_in, h, w, cin = x.shape
    kt, mid, cout = t_w.shape
    sub = 16 if COMPUTE_DTYPE == jnp.bfloat16 else 8
    cinp = _round_up(cin, sub)
    midp = _round_up(mid, sub)
    coutp = _round_up(cout, 8)

    planes, taps, wq, ho, wo, pix = _build_planes(
        x, k=k, pad=padding, stride=stride, cinp=cinp)
    d_out = (d_in + 2 * padding - kt) // stride + 1

    ws = _prep_spatial_w(s_w, cinp, midp)
    wt = _prep_temporal_w(t_w, midp, coutp)
    ss, bs = _prep_vec(s_scale, midp), _prep_vec(s_bias, midp)
    st, bt = _prep_vec(t_scale, coutp), _prep_vec(t_bias, coutp)

    args = [planes, ws, ss, bs, wt, st, bt]
    in_specs = [
        pl.BlockSpec((1,) + planes.shape[1:], lambda i: (i, 0, 0, 0)),
        pl.BlockSpec(ws.shape, lambda i: (0, 0)),
        pl.BlockSpec(ss.shape, lambda i: (0, 0)),
        pl.BlockSpec(bs.shape, lambda i: (0, 0)),
        pl.BlockSpec(wt.shape, lambda i: (0, 0)),
        pl.BlockSpec(st.shape, lambda i: (0, 0)),
        pl.BlockSpec(bt.shape, lambda i: (0, 0)),
    ]
    has_res = residual is not None
    if has_res:
        assert (stride == 1 and residual.shape[1] == d_out
                and residual.shape[2] == ho and residual.shape[3] == wo)
        args.append(_residual_to_flat(residual, coutp, wq, pix))
        in_specs.append(pl.BlockSpec((1, d_out, coutp, pix), lambda i: (i, 0, 0, 0)))

    kernel = functools.partial(
        _st_conv_kernel, taps=taps, cinp=cinp, kt=kt, pad_t=padding,
        stride_t=stride, d_in=d_in, d_out=d_out, pix=pix,
        relu_out=relu_out, has_res=has_res)

    # NOTE: for production D/H/W one would also tile the D axis (with a kt-1
    # frame halo) or the pixel axis to deepen the grid (v7x: 2 TCs) and
    # re-budget tiles against 64 MiB VMEM; at these sizes grid=(N,) suffices.
    out = pl.pallas_call(
        kernel,
        out_shape=jax.ShapeDtypeStruct((n, d_out, coutp, pix), jnp.float32),
        grid=(n,),
        in_specs=in_specs,
        out_specs=pl.BlockSpec((1, d_out, coutp, pix), lambda i: (i, 0, 0, 0)),
        scratch_shapes=[pltpu.VMEM((d_in + 2 * padding, midp, pix), COMPUTE_DTYPE)],
        compiler_params=pltpu.CompilerParams(dimension_semantics=("parallel",)),
    )(*args)
    return _flat_to_ndhwc(out, cout, ho, wo, wq)


# ----------------------------------------------------------------------------
# Parameters (deterministic, synthetic) and module forward
# ----------------------------------------------------------------------------
def init_bn(key, c):
    k1, k2, k3, k4 = jax.random.split(key, 4)
    return dict(
        gamma=1.0 + 0.1 * jax.random.normal(k1, (c,), jnp.float32),
        beta=0.1 * jax.random.normal(k2, (c,), jnp.float32),
        mean=0.1 * jax.random.normal(k3, (c,), jnp.float32),
        var=1.0 + 0.5 * jax.random.uniform(k4, (c,), jnp.float32),
    )


def init_stconv(key, cin, cout, k):
    # R(2+1)D intermediate channel count (same formula as the PyTorch module).
    mid = int(math.floor((k * k * k * cin * cout) / (k * k * cin + k * cout)))
    mid = max(mid, 1)
    keys = jax.random.split(key, 5)
    return dict(
        s_w=0.1 * jax.random.normal(keys[0], (k, k, cin, mid), jnp.float32),
        s_b=0.1 * jax.random.normal(keys[1], (mid,), jnp.float32),
        bn_s=init_bn(keys[2], mid),
        t_w=0.1 * jax.random.normal(keys[3], (k, mid, cout), jnp.float32),
        t_b=0.1 * jax.random.normal(keys[4], (cout,), jnp.float32),
    )


def init_block(key, cin, cout, k, downsample):
    keys = jax.random.split(key, 6)
    params = dict(
        conv1=init_stconv(keys[0], cin, cout, k),
        bn1=init_bn(keys[1], cout),
        conv2=init_stconv(keys[2], cout, cout, k),
        bn2=init_bn(keys[3], cout),
    )
    if downsample:
        params["dconv"] = init_stconv(keys[4], cin, cout, 1)
        params["dbn"] = init_bn(keys[5], cout)
    return params


def bn_fold(bn, conv_bias, eps=1e-5):
    scale = bn["gamma"] / jnp.sqrt(bn["var"] + eps)
    bias = bn["beta"] + scale * (conv_bias - bn["mean"])
    return scale, bias


def spatio_temporal_conv(x, p, *, k, padding, stride, out_bn, out_relu, residual=None):
    # spatial conv -> internal BN -> ReLU -> temporal conv -> block BN
    # (+residual, +ReLU): all fused into a single pallas_call.
    s_scale, s_bias = bn_fold(p["bn_s"], p["s_b"])
    t_scale, t_bias = bn_fold(out_bn, p["t_b"])
    if k == 1 and stride > 1:
        # Pointwise conv: a stride-s conv == stride-1 conv of the subsampled input.
        x = x[:, ::stride, ::stride, ::stride, :]
        stride = 1
    return fused_st_conv(x, p["s_w"], s_scale, s_bias, p["t_w"], t_scale, t_bias,
                         k=k, padding=padding, stride=stride, relu_out=out_relu,
                         residual=residual)


def res_block_forward(x, params, k, downsample):
    pad = k // 2
    if downsample:
        identity = spatio_temporal_conv(x, params["dconv"], k=1, padding=0, stride=2,
                                        out_bn=params["dbn"], out_relu=False)
        stride1 = 2
    else:
        identity = x
        stride1 = 1
    res = spatio_temporal_conv(x, params["conv1"], k=k, padding=pad, stride=stride1,
                               out_bn=params["bn1"], out_relu=True)
    # conv2's kernel fuses bn2, the residual add and the final ReLU.
    out = spatio_temporal_conv(res, params["conv2"], k=k, padding=pad, stride=1,
                               out_bn=params["bn2"], out_relu=True, residual=identity)
    return out


# ----------------------------------------------------------------------------
# Pure-JAX reference (for correctness check only)
# ----------------------------------------------------------------------------
def _conv3d_ref(x, w, b, strides, padding):
    dn = lax.conv_dimension_numbers(x.shape, w.shape, ("NDHWC", "DHWIO", "NDHWC"))
    y = lax.conv_general_dilated(x, w, window_strides=strides,
                                 padding=[(p, p) for p in padding],
                                 dimension_numbers=dn)
    return y + b


def _bn_ref(x, bn, eps=1e-5):
    return bn["gamma"] * (x - bn["mean"]) / jnp.sqrt(bn["var"] + eps) + bn["beta"]


def _stconv_ref(x, p, k, padding, stride):
    h = _conv3d_ref(x, p["s_w"][None], p["s_b"], (1, stride, stride), (0, padding, padding))
    h = jax.nn.relu(_bn_ref(h, p["bn_s"]))
    return _conv3d_ref(h, p["t_w"][:, None, None], p["t_b"], (stride, 1, 1), (padding, 0, 0))


def _block_ref(x, params, k, downsample):
    pad = k // 2
    stride = 2 if downsample else 1
    res = jax.nn.relu(_bn_ref(_stconv_ref(x, params["conv1"], k, pad, stride), params["bn1"]))
    res = _bn_ref(_stconv_ref(res, params["conv2"], k, pad, 1), params["bn2"])
    if downsample:
        identity = _bn_ref(_stconv_ref(x, params["dconv"], 1, 0, 2), params["dbn"])
    else:
        identity = x
    return jax.nn.relu(identity + res)


# ----------------------------------------------------------------------------
if __name__ == "__main__":
    key = jax.random.PRNGKey(0)
    kernel_size = 3

    # Case 1: downsample=True  (Cin=4 -> Cout=8, spatial/temporal stride 2)
    kx1, kp1, key = jax.random.split(key, 3)
    x1 = jax.random.normal(kx1, (2, 8, 16, 16, 4), jnp.float32)   # NDHWC
    params1 = init_block(kp1, 4, 8, kernel_size, downsample=True)
    fwd1 = jax.jit(functools.partial(res_block_forward, k=kernel_size, downsample=True))
    out1 = jax.block_until_ready(fwd1(x1, params1))
    ref1 = _block_ref(x1, params1, kernel_size, True)
    assert out1.shape == (2, 4, 8, 8, 8), out1.shape
    err1 = float(jnp.max(jnp.abs(out1 - ref1)))
    tol1 = 5e-2 * float(jnp.max(jnp.abs(ref1))) + 1e-5   # bf16 MXU operands, f32 accum
    assert err1 <= tol1, (err1, tol1)

    # Case 2: downsample=False (identity residual, Cin=Cout=8)
    kx2, kp2, key = jax.random.split(key, 3)
    x2 = jax.random.normal(kx2, (2, 8, 16, 16, 8), jnp.float32)   # NDHWC
    params2 = init_block(kp2, 8, 8, kernel_size, downsample=False)
    fwd2 = jax.jit(functools.partial(res_block_forward, k=kernel_size, downsample=False))
    out2 = jax.block_until_ready(fwd2(x2, params2))
    ref2 = _block_ref(x2, params2, kernel_size, False)
    assert out2.shape == (2, 8, 16, 16, 8), out2.shape
    err2 = float(jnp.max(jnp.abs(out2 - ref2)))
    tol2 = 5e-2 * float(jnp.max(jnp.abs(ref2))) + 1e-5
    assert err2 <= tol2, (err2, tol2)

    # TODO(synk): BatchNorm3d is applied in inference mode (running stats folded
    # into scale/bias); PyTorch train-mode batch statistics are not reproduced.
    print("KERNEL_OK")
</pallas_src>

<mosaic_0001>
module attributes {stable_mosaic.version = 11 : i64} {
  func.func @_st_conv_kernel(%arg0: i32, %arg1: memref<1x4x16x128xbf16, #tpu.memory_space<vmem>>, %arg2: memref<16x16xbf16, #tpu.memory_space<vmem>>, %arg3: memref<16x1xf32, #tpu.memory_space<vmem>>, %arg4: memref<16x1xf32, #tpu.memory_space<vmem>>, %arg5: memref<8x16xbf16, #tpu.memory_space<vmem>>, %arg6: memref<8x1xf32, #tpu.memory_space<vmem>>, %arg7: memref<8x1xf32, #tpu.memory_space<vmem>>, %arg8: memref<1x4x8x128xf32, #tpu.memory_space<vmem>>, %arg9: memref<4x16x128xbf16, #tpu.memory_space<vmem>>) attributes {dimension_semantics = [#tpu.dimension_semantics<parallel>], iteration_bounds = array<i64: 2>, scalar_prefetch = 0 : i64, scratch_operands = 1 : i64, tpu.core_type = #tpu.core_type<tc>, window_params = [{transform_indices = @transform_0, window_bounds = array<i64: 1, 4, 16, 128>}, {pipeline_mode = #tpu.pipeline_mode<synchronous>, transform_indices = @transform_1, window_bounds = array<i64: 16, 16>}, {pipeline_mode = #tpu.pipeline_mode<synchronous>, transform_indices = @transform_2, window_bounds = array<i64: 16, 1>}, {pipeline_mode = #tpu.pipeline_mode<synchronous>, transform_indices = @transform_3, window_bounds = array<i64: 16, 1>}, {pipeline_mode = #tpu.pipeline_mode<synchronous>, transform_indices = @transform_4, window_bounds = array<i64: 8, 16>}, {pipeline_mode = #tpu.pipeline_mode<synchronous>, transform_indices = @transform_5, window_bounds = array<i64: 8, 1>}, {pipeline_mode = #tpu.pipeline_mode<synchronous>, transform_indices = @transform_6, window_bounds = array<i64: 8, 1>}, {transform_indices = @transform_7, window_bounds = array<i64: 1, 4, 8, 128>}]} {
    %c0 = arith.constant 0 : index
    %c0_0 = arith.constant 0 : index
    %0 = vector.load %arg2[%c0, %c0_0] : memref<16x16xbf16, #tpu.memory_space<vmem>>, vector<16x16xbf16>
    %c0_1 = arith.constant 0 : index
    %c0_2 = arith.constant 0 : index
    %1 = vector.load %arg3[%c0_1, %c0_2] : memref<16x1xf32, #tpu.memory_space<vmem>>, vector<16x1xf32>
    %c0_3 = arith.constant 0 : index
    %c0_4 = arith.constant 0 : index
    %2 = vector.load %arg4[%c0_3, %c0_4] : memref<16x1xf32, #tpu.memory_space<vmem>>, vector<16x1xf32>
    %c0_5 = arith.constant 0 : index
    %c0_6 = arith.constant 0 : index
    %c0_7 = arith.constant 0 : index
    %c0_8 = arith.constant 0 : index
    %3 = vector.load %arg1[%c0_5, %c0_6, %c0_7, %c0_8] : memref<1x4x16x128xbf16, #tpu.memory_space<vmem>>, vector<1x1x16x128xbf16>
    %4 = vector.shape_cast %3 : vector<1x1x16x128xbf16> to vector<16x128xbf16>
    %cst = arith.constant dense<0.000000e+00> : vector<16x128xf32>
    %5 = tpu.matmul %0, %4, %cst {dimension_numbers = #tpu.dot_dimension_numbers<[1], [0], [0], [1], [0, 0, 1, 1], [], []>} : vector<16x16xbf16>, vector<16x128xbf16>, vector<16x128xf32> -> vector<16x128xf32>
    %6 = vector.broadcast %1 : vector<16x1xf32> to vector<16x128xf32>
    %7 = arith.mulf %5, %6 : vector<16x128xf32>
    %8 = vector.broadcast %2 : vector<16x1xf32> to vector<16x128xf32>
    %9 = arith.addf %7, %8 : vector<16x128xf32>
    %cst_9 = arith.constant 0.000000e+00 : f32
    %10 = vector.broadcast %cst_9 : f32 to vector<16x128xf32>
    %11 = arith.maximumf %9, %10 : vector<16x128xf32>
    %12 = arith.truncf %11 : vector<16x128xf32> to vector<16x128xbf16>
    %c0_10 = arith.constant 0 : index
    %c0_11 = arith.constant 0 : index
    %c0_12 = arith.constant 0 : index
    %13 = vector.load %arg9[%c0_10, %c0_11, %c0_12] : memref<4x16x128xbf16, #tpu.memory_space<vmem>>, vector<1x16x128xbf16>
    %14 = vector.shape_cast %13 : vector<1x16x128xbf16> to vector<16x128xbf16>
    %15 = vector.shape_cast %12 : vector<16x128xbf16> to vector<1x16x128xbf16>
    tpu.vector_store %arg9[%c0_10, %c0_11, %c0_12], %15 {strides = array<i32>} : memref<4x16x128xbf16, #tpu.memory_space<vmem>>, vector<1x16x128xbf16>,
    %c0_13 = arith.constant 0 : index
    %c1 = arith.constant 1 : index
    %c0_14 = arith.constant 0 : index
    %c0_15 = arith.constant 0 : index
    %16 = vector.load %arg1[%c0_13, %c1, %c0_14, %c0_15] : memref<1x4x16x128xbf16, #tpu.memory_space<vmem>>, vector<1x1x16x128xbf16>
    %17 = vector.shape_cast %16 : vector<1x1x16x128xbf16> to vector<16x128xbf16>
    %cst_16 = arith.constant dense<0.000000e+00> : vector<16x128xf32>
    %18 = tpu.matmul %0, %17, %cst_16 {dimension_numbers = #tpu.dot_dimension_numbers<[1], [0], [0], [1], [0, 0, 1, 1], [], []>} : vector<16x16xbf16>, vector<16x128xbf16>, vector<16x128xf32> -> vector<16x128xf32>
    %19 = vector.broadcast %1 : vector<16x1xf32> to vector<16x128xf32>
    %20 = arith.mulf %18, %19 : vector<16x128xf32>
    %21 = vector.broadcast %2 : vector<16x1xf32> to vector<16x128xf32>
    %22 = arith.addf %20, %21 : vector<16x128xf32>
    %cst_17 = arith.constant 0.000000e+00 : f32
    %23 = vector.broadcast %cst_17 : f32 to vector<16x128xf32>
    %24 = arith.maximumf %22, %23 : vector<16x128xf32>
    %25 = arith.truncf %24 : vector<16x128xf32> to vector<16x128xbf16>
    %c1_18 = arith.constant 1 : index
    %c0_19 = arith.constant 0 : index
    %c0_20 = arith.constant 0 : index
    %26 = vector.load %arg9[%c1_18, %c0_19, %c0_20] : memref<4x16x128xbf16, #tpu.memory_space<vmem>>, vector<1x16x128xbf16>
    %27 = vector.shape_cast %26 : vector<1x16x128xbf16> to vector<16x128xbf16>
    %28 = vector.shape_cast %25 : vector<16x128xbf16> to vector<1x16x128xbf16>
    tpu.vector_store %arg9[%c1_18, %c0_19, %c0_20], %28 {strides = array<i32>} : memref<4x16x128xbf16, #tpu.memory_space<vmem>>, vector<1x16x128xbf16>,
    %c0_21 = arith.constant 0 : index
    %c2 = arith.constant 2 : index
    %c0_22 = arith.constant 0 : index
    %c0_23 = arith.constant 0 : index
    %29 = vector.load %arg1[%c0_21, %c2, %c0_22, %c0_23] : memref<1x4x16x128xbf16, #tpu.memory_space<vmem>>, vector<1x1x16x128xbf16>
    %30 = vector.shape_cast %29 : vector<1x1x16x128xbf16> to vector<16x128xbf16>
    %cst_24 = arith.constant dense<0.000000e+00> : vector<16x128xf32>
    %31 = tpu.matmul %0, %30, %cst_24 {dimension_numbers = #tpu.dot_dimension_numbers<[1], [0], [0], [1], [0, 0, 1, 1], [], []>} : vector<16x16xbf16>, vector<16x128xbf16>, vector<16x128xf32> -> vector<16x128xf32>
    %32 = vector.broadcast %1 : vector<16x1xf32> to vector<16x128xf32>
    %33 = arith.mulf %31, %32 : vector<16x128xf32>
    %34 = vector.broadcast %2 : vector<16x1xf32> to vector<16x128xf32>
    %35 = arith.addf %33, %34 : vector<16x128xf32>
    %cst_25 = arith.constant 0.000000e+00 : f32
    %36 = vector.broadcast %cst_25 : f32 to vector<16x128xf32>
    %37 = arith.maximumf %35, %36 : vector<16x128xf32>
    %38 = arith.truncf %37 : vector<16x128xf32> to vector<16x128xbf16>
    %c2_26 = arith.constant 2 : index
    %c0_27 = arith.constant 0 : index
    %c0_28 = arith.constant 0 : index
    %39 = vector.load %arg9[%c2_26, %c0_27, %c0_28] : memref<4x16x128xbf16, #tpu.memory_space<vmem>>, vector<1x16x128xbf16>
    %40 = vector.shape_cast %39 : vector<1x16x128xbf16> to vector<16x128xbf16>
    %41 = vector.shape_cast %38 : vector<16x128xbf16> to vector<1x16x128xbf16>
    tpu.vector_store %arg9[%c2_26, %c0_27, %c0_28], %41 {strides = array<i32>} : memref<4x16x128xbf16, #tpu.memory_space<vmem>>, vector<1x16x128xbf16>,
    %c0_29 = arith.constant 0 : index
    %c3 = arith.constant 3 : index
    %c0_30 = arith.constant 0 : index
    %c0_31 = arith.constant 0 : index
    %42 = vector.load %arg1[%c0_29, %c3, %c0_30, %c0_31] : memref<1x4x16x128xbf16, #tpu.memory_space<vmem>>, vector<1x1x16x128xbf16>
    %43 = vector.shape_cast %42 : vector<1x1x16x128xbf16> to vector<16x128xbf16>
    %cst_32 = arith.constant dense<0.000000e+00> : vector<16x128xf32>
    %44 = tpu.matmul %0, %43, %cst_32 {dimension_numbers = #tpu.dot_dimension_numbers<[1], [0], [0], [1], [0, 0, 1, 1], [], []>} : vector<16x16xbf16>, vector<16x128xbf16>, vector<16x128xf32> -> vector<16x128xf32>
    %45 = vector.broadcast %1 : vector<16x1xf32> to vector<16x128xf32>
    %46 = arith.mulf %44, %45 : vector<16x128xf32>
    %47 = vector.broadcast %2 : vector<16x1xf32> to vector<16x128xf32>
    %48 = arith.addf %46, %47 : vector<16x128xf32>
    %cst_33 = arith.constant 0.000000e+00 : f32
    %49 = vector.broadcast %cst_33 : f32 to vector<16x128xf32>
    %50 = arith.maximumf %48, %49 : vector<16x128xf32>
    %51 = arith.truncf %50 : vector<16x128xf32> to vector<16x128xbf16>
    %c3_34 = arith.constant 3 : index
    %c0_35 = arith.constant 0 : index
    %c0_36 = arith.constant 0 : index
    %52 = vector.load %arg9[%c3_34, %c0_35, %c0_36] : memref<4x16x128xbf16, #tpu.memory_space<vmem>>, vector<1x16x128xbf16>
    %53 = vector.shape_cast %52 : vector<1x16x128xbf16> to vector<16x128xbf16>
    %54 = vector.shape_cast %51 : vector<16x128xbf16> to vector<1x16x128xbf16>
    tpu.vector_store %arg9[%c3_34, %c0_35, %c0_36], %54 {strides = array<i32>} : memref<4x16x128xbf16, #tpu.memory_space<vmem>>, vector<1x16x128xbf16>,
    %c0_37 = arith.constant 0 : index
    %c0_38 = arith.constant 0 : index
    %55 = vector.load %arg5[%c0_37, %c0_38] : memref<8x16xbf16, #tpu.memory_space<vmem>>, vector<8x16xbf16>
    %c0_39 = arith.constant 0 : index
    %c0_40 = arith.constant 0 : index
    %56 = vector.load %arg6[%c0_39, %c0_40] : memref<8x1xf32, #tpu.memory_space<vmem>>, vector<8x1xf32>
    %c0_41 = arith.constant 0 : index
    %c0_42 = arith.constant 0 : index
    %57 = vector.load %arg7[%c0_41, %c0_42] : memref<8x1xf32, #tpu.memory_space<vmem>>, vector<8x1xf32>
    %c0_43 = arith.constant 0 : index
    %c0_44 = arith.constant 0 : index
    %c0_45 = arith.constant 0 : index
    %58 = vector.load %arg9[%c0_43, %c0_44, %c0_45] : memref<4x16x128xbf16, #tpu.memory_space<vmem>>, vector<1x16x128xbf16>
    %59 = vector.shape_cast %58 : vector<1x16x128xbf16> to vector<16x128xbf16>
    %cst_46 = arith.constant dense<0.000000e+00> : vector<8x128xf32>
    %60 = tpu.matmul %55, %59, %cst_46 {dimension_numbers = #tpu.dot_dimension_numbers<[1], [0], [0], [1], [0, 0, 1, 1], [], []>} : vector<8x16xbf16>, vector<16x128xbf16>, vector<8x128xf32> -> vector<8x128xf32>
    %61 = vector.broadcast %56 : vector<8x1xf32> to vector<8x128xf32>
    %62 = arith.mulf %60, %61 : vector<8x128xf32>
    %63 = vector.broadcast %57 : vector<8x1xf32> to vector<8x128xf32>
    %64 = arith.addf %62, %63 : vector<8x128xf32>
    %c0_47 = arith.constant 0 : index
    %c0_48 = arith.constant 0 : index
    %c0_49 = arith.constant 0 : index
    %c0_50 = arith.constant 0 : index
    %65 = vector.load %arg8[%c0_47, %c0_48, %c0_49, %c0_50] : memref<1x4x8x128xf32, #tpu.memory_space<vmem>>, vector<1x1x8x128xf32>
    %66 = vector.shape_cast %65 : vector<1x1x8x128xf32> to vector<8x128xf32>
    %67 = vector.shape_cast %64 : vector<8x128xf32> to vector<1x1x8x128xf32>
    tpu.vector_store %arg8[%c0_47, %c0_48, %c0_49, %c0_50], %67 {strides = array<i32>} : memref<1x4x8x128xf32, #tpu.memory_space<vmem>>, vector<1x1x8x128xf32>,
    %c1_51 = arith.constant 1 : index
    %c0_52 = arith.constant 0 : index
    %c0_53 = arith.constant 0 : index
    %68 = vector.load %arg9[%c1_51, %c0_52, %c0_53] : memref<4x16x128xbf16, #tpu.memory_space<vmem>>, vector<1x16x128xbf16>
    %69 = vector.shape_cast %68 : vector<1x16x128xbf16> to vector<16x128xbf16>
    %cst_54 = arith.constant dense<0.000000e+00> : vector<8x128xf32>
    %70 = tpu.matmul %55, %69, %cst_54 {dimension_numbers = #tpu.dot_dimension_numbers<[1], [0], [0], [1], [0, 0, 1, 1], [], []>} : vector<8x16xbf16>, vector<16x128xbf16>, vector<8x128xf32> -> vector<8x128xf32>
    %71 = vector.broadcast %56 : vector<8x1xf32> to vector<8x128xf32>
    %72 = arith.mulf %70, %71 : vector<8x128xf32>
    %73 = vector.broadcast %57 : vector<8x1xf32> to vector<8x128xf32>
    %74 = arith.addf %72, %73 : vector<8x128xf32>
    %c0_55 = arith.constant 0 : index
    %c1_56 = arith.constant 1 : index
    %c0_57 = arith.constant 0 : index
    %c0_58 = arith.constant 0 : index
    %75 = vector.load %arg8[%c0_55, %c1_56, %c0_57, %c0_58] : memref<1x4x8x128xf32, #tpu.memory_space<vmem>>, vector<1x1x8x128xf32>
    %76 = vector.shape_cast %75 : vector<1x1x8x128xf32> to vector<8x128xf32>
    %77 = vector.shape_cast %74 : vector<8x128xf32> to vector<1x1x8x128xf32>
    tpu.vector_store %arg8[%c0_55, %c1_56, %c0_57, %c0_58], %77 {strides = array<i32>} : memref<1x4x8x128xf32, #tpu.memory_space<vmem>>, vector<1x1x8x128xf32>,
    %c2_59 = arith.constant 2 : index
    %c0_60 = arith.constant 0 : index
    %c0_61 = arith.constant 0 : index
    %78 = vector.load %arg9[%c2_59, %c0_60, %c0_61] : memref<4x16x128xbf16, #tpu.memory_space<vmem>>, vector<1x16x128xbf16>
    %79 = vector.shape_cast %78 : vector<1x16x128xbf16> to vector<16x128xbf16>
    %cst_62 = arith.constant dense<0.000000e+00> : vector<8x128xf32>
    %80 = tpu.matmul %55, %79, %cst_62 {dimension_numbers = #tpu.dot_dimension_numbers<[1], [0], [0], [1], [0, 0, 1, 1], [], []>} : vector<8x16xbf16>, vector<16x128xbf16>, vector<8x128xf32> -> vector<8x128xf32>
    %81 = vector.broadcast %56 : vector<8x1xf32> to vector<8x128xf32>
    %82 = arith.mulf %80, %81 : vector<8x128xf32>
    %83 = vector.broadcast %57 : vector<8x1xf32> to vector<8x128xf32>
    %84 = arith.addf %82, %83 : vector<8x128xf32>
    %c0_63 = arith.constant 0 : index
    %c2_64 = arith.constant 2 : index
    %c0_65 = arith.constant 0 : index
    %c0_66 = arith.constant 0 : index
    %85 = vector.load %arg8[%c0_63, %c2_64, %c0_65, %c0_66] : memref<1x4x8x128xf32, #tpu.memory_space<vmem>>, vector<1x1x8x128xf32>
    %86 = vector.shape_cast %85 : vector<1x1x8x128xf32> to vector<8x128xf32>
    %87 = vector.shape_cast %84 : vector<8x128xf32> to vector<1x1x8x128xf32>
    tpu.vector_store %arg8[%c0_63, %c2_64, %c0_65, %c0_66], %87 {strides = array<i32>} : memref<1x4x8x128xf32, #tpu.memory_space<vmem>>, vector<1x1x8x128xf32>,
    %c3_67 = arith.constant 3 : index
    %c0_68 = arith.constant 0 : index
    %c0_69 = arith.constant 0 : index
    %88 = vector.load %arg9[%c3_67, %c0_68, %c0_69] : memref<4x16x128xbf16, #tpu.memory_space<vmem>>, vector<1x16x128xbf16>
    %89 = vector.shape_cast %88 : vector<1x16x128xbf16> to vector<16x128xbf16>
    %cst_70 = arith.constant dense<0.000000e+00> : vector<8x128xf32>
    %90 = tpu.matmul %55, %89, %cst_70 {dimension_numbers = #tpu.dot_dimension_numbers<[1], [0], [0], [1], [0, 0, 1, 1], [], []>} : vector<8x16xbf16>, vector<16x128xbf16>, vector<8x128xf32> -> vector<8x128xf32>
    %91 = vector.broadcast %56 : vector<8x1xf32> to vector<8x128xf32>
    %92 = arith.mulf %90, %91 : vector<8x128xf32>
    %93 = vector.broadcast %57 : vector<8x1xf32> to vector<8x128xf32>
    %94 = arith.addf %92, %93 : vector<8x128xf32>
    %c0_71 = arith.constant 0 : index
    %c3_72 = arith.constant 3 : index
    %c0_73 = arith.constant 0 : index
    %c0_74 = arith.constant 0 : index
    %95 = vector.load %arg8[%c0_71, %c3_72, %c0_73, %c0_74] : memref<1x4x8x128xf32, #tpu.memory_space<vmem>>, vector<1x1x8x128xf32>
    %96 = vector.shape_cast %95 : vector<1x1x8x128xf32> to vector<8x128xf32>
    %97 = vector.shape_cast %94 : vector<8x128xf32> to vector<1x1x8x128xf32>
    tpu.vector_store %arg8[%c0_71, %c3_72, %c0_73, %c0_74], %97 {strides = array<i32>} : memref<1x4x8x128xf32, #tpu.memory_space<vmem>>, vector<1x1x8x128xf32>,
    return
  }
  func.func @transform_0(%arg0: i32) -> (i32, i32, i32, i32) {
    %c0_i32 = arith.constant 0 : i32
    %c0_i32_0 = arith.constant 0 : i32
    %c0_i32_1 = arith.constant 0 : i32
    %c0_i32_2 = arith.constant 0 : i32
    return %arg0, %c0_i32, %c0_i32_0, %c0_i32_1 : i32, i32, i32, i32
  }
  func.func @transform_1(%arg0: i32) -> (i32, i32) {
    %c0_i32 = arith.constant 0 : i32
    %c0_i32_0 = arith.constant 0 : i32
    %c0_i32_1 = arith.constant 0 : i32
    return %c0_i32, %c0_i32_0 : i32, i32
  }
  func.func @transform_2(%arg0: i32) -> (i32, i32) {
    %c0_i32 = arith.constant 0 : i32
    %c0_i32_0 = arith.constant 0 : i32
    %c0_i32_1 = arith.constant 0 : i32
    return %c0_i32, %c0_i32_0 : i32, i32
  }
  func.func @transform_3(%arg0: i32) -> (i32, i32) {
    %c0_i32 = arith.constant 0 : i32
    %c0_i32_0 = arith.constant 0 : i32
    %c0_i32_1 = arith.constant 0 : i32
    return %c0_i32, %c0_i32_0 : i32, i32
  }
  func.func @transform_4(%arg0: i32) -> (i32, i32) {
    %c0_i32 = arith.constant 0 : i32
    %c0_i32_0 = arith.constant 0 : i32
    %c0_i32_1 = arith.constant 0 : i32
    return %c0_i32, %c0_i32_0 : i32, i32
  }
  func.func @transform_5(%arg0: i32) -> (i32, i32) {
    %c0_i32 = arith.constant 0 : i32
    %c0_i32_0 = arith.constant 0 : i32
    %c0_i32_1 = arith.constant 0 : i32
    return %c0_i32, %c0_i32_0 : i32, i32
  }
  func.func @transform_6(%arg0: i32) -> (i32, i32) {
    %c0_i32 = arith.constant 0 : i32
    %c0_i32_0 = arith.constant 0 : i32
    %c0_i32_1 = arith.constant 0 : i32
    return %c0_i32, %c0_i32_0 : i32, i32
  }
  func.func @transform_7(%arg0: i32) -> (i32, i32, i32, i32) {
    %c0_i32 = arith.constant 0 : i32
    %c0_i32_0 = arith.constant 0 : i32
    %c0_i32_1 = arith.constant 0 : i32
    %c0_i32_2 = arith.constant 0 : i32
    return %arg0, %c0_i32, %c0_i32_0, %c0_i32_1 : i32, i32, i32, i32
  }
}

module attributes {stable_mosaic.version = 11 : i64} {
  func.func @_st_conv_kernel(%arg0: i32, %arg1: memref<1x8x64x256xbf16, #tpu.memory_space<vmem>>, %arg2: memref<16x144xbf16, #tpu.memory_space<vmem>>, %arg3: memref<16x1xf32, #tpu.memory_space<vmem>>, %arg4: memref<16x1xf32, #tpu.memory_space<vmem>>, %arg5: memref<8x48xbf16, #tpu.memory_space<vmem>>, %arg6: memref<8x1xf32, #tpu.memory_space<vmem>>, %arg7: memref<8x1xf32, #tpu.memory_space<vmem>>, %arg8: memref<1x4x8x128xf32, #tpu.memory_space<vmem>>, %arg9: memref<10x16x128xbf16, #tpu.memory_space<vmem>>) attributes {dimension_semantics = [#tpu.dimension_semantics<parallel>], iteration_bounds = array<i64: 2>, scalar_prefetch = 0 : i64, scratch_operands = 1 : i64, tpu.core_type = #tpu.core_type<tc>, window_params = [{transform_indices = @transform_0, window_bounds = array<i64: 1, 8, 64, 256>}, {pipeline_mode = #tpu.pipeline_mode<synchronous>, transform_indices = @transform_1, window_bounds = array<i64: 16, 144>}, {pipeline_mode = #tpu.pipeline_mode<synchronous>, transform_indices = @transform_2, window_bounds = array<i64: 16, 1>}, {pipeline_mode = #tpu.pipeline_mode<synchronous>, transform_indices = @transform_3, window_bounds = array<i64: 16, 1>}, {pipeline_mode = #tpu.pipeline_mode<synchronous>, transform_indices = @transform_4, window_bounds = array<i64: 8, 48>}, {pipeline_mode = #tpu.pipeline_mode<synchronous>, transform_indices = @transform_5, window_bounds = array<i64: 8, 1>}, {pipeline_mode = #tpu.pipeline_mode<synchronous>, transform_indices = @transform_6, window_bounds = array<i64: 8, 1>}, {transform_indices = @transform_7, window_bounds = array<i64: 1, 4, 8, 128>}]} {
    %c0 = arith.constant 0 : index
    %c0_0 = arith.constant 0 : index
    %0 = vector.load %arg2[%c0, %c0_0] : memref<16x144xbf16, #tpu.memory_space<vmem>>, vector<16x144xbf16>
    %c0_1 = arith.constant 0 : index
    %c0_2 = arith.constant 0 : index
    %1 = vector.load %arg3[%c0_1, %c0_2] : memref<16x1xf32, #tpu.memory_space<vmem>>, vector<16x1xf32>
    %c0_3 = arith.constant 0 : index
    %c0_4 = arith.constant 0 : index
    %2 = vector.load %arg4[%c0_3, %c0_4] : memref<16x1xf32, #tpu.memory_space<vmem>>, vector<16x1xf32>
    %cst = arith.constant 0.000000e+00 : bf16
    %3 = vector.broadcast %cst : bf16 to vector<16x128xbf16>
    %c0_5 = arith.constant 0 : index
    %c0_6 = arith.constant 0 : index
    %c0_7 = arith.constant 0 : index
    %4 = vector.load %arg9[%c0_5, %c0_6, %c0_7] : memref<10x16x128xbf16, #tpu.memory_space<vmem>>, vector<1x16x128xbf16>
    %5 = vector.shape_cast %4 : vector<1x16x128xbf16> to vector<16x128xbf16>
    %6 = vector.shape_cast %3 : vector<16x128xbf16> to vector<1x16x128xbf16>
    tpu.vector_store %arg9[%c0_5, %c0_6, %c0_7], %6 {strides = array<i32>} : memref<10x16x128xbf16, #tpu.memory_space<vmem>>, vector<1x16x128xbf16>,
    %c9 = arith.constant 9 : index
    %c0_8 = arith.constant 0 : index
    %c0_9 = arith.constant 0 : index
    %7 = vector.load %arg9[%c9, %c0_8, %c0_9] : memref<10x16x128xbf16, #tpu.memory_space<vmem>>, vector<1x16x128xbf16>
    %8 = vector.shape_cast %7 : vector<1x16x128xbf16> to vector<16x128xbf16>
    %9 = vector.shape_cast %3 : vector<16x128xbf16> to vector<1x16x128xbf16>
    tpu.vector_store %arg9[%c9, %c0_8, %c0_9], %9 {strides = array<i32>} : memref<10x16x128xbf16, #tpu.memory_space<vmem>>, vector<1x16x128xbf16>,
    %c0_10 = arith.constant 0 : index
    %c0_11 = arith.constant 0 : index
    %c0_12 = arith.constant 0 : index
    %c0_13 = arith.constant 0 : index
    %10 = vector.load %arg1[%c0_10, %c0_11, %c0_12, %c0_13] : memref<1x8x64x256xbf16, #tpu.memory_space<vmem>>, vector<1x1x16x128xbf16>
    %11 = vector.shape_cast %10 : vector<1x1x16x128xbf16> to vector<16x128xbf16>
    %c0_14 = arith.constant 0 : index
    %c0_15 = arith.constant 0 : index
    %c16 = arith.constant 16 : index
    %c0_16 = arith.constant 0 : index
    %12 = vector.load %arg1[%c0_14, %c0_15, %c16, %c0_16] : memref<1x8x64x256xbf16, #tpu.memory_space<vmem>>, vector<1x1x16x128xbf16>
    %13 = vector.shape_cast %12 : vector<1x1x16x128xbf16> to vector<16x128xbf16>
    %c0_17 = arith.constant 0 : index
    %c0_18 = arith.constant 0 : index
    %c0_19 = arith.constant 0 : index
    %c1 = arith.constant 1 : index
    %14 = vector.load %arg1[%c0_17, %c0_18, %c0_19, %c1] : memref<1x8x64x256xbf16, #tpu.memory_space<vmem>>, vector<1x1x16x128xbf16>
    %15 = vector.shape_cast %14 : vector<1x1x16x128xbf16> to vector<16x128xbf16>
    %c0_20 = arith.constant 0 : index
    %c0_21 = arith.constant 0 : index
    %c32 = arith.constant 32 : index
    %c0_22 = arith.constant 0 : index
    %16 = vector.load %arg1[%c0_20, %c0_21, %c32, %c0_22] : memref<1x8x64x256xbf16, #tpu.memory_space<vmem>>, vector<1x1x16x128xbf16>
    %17 = vector.shape_cast %16 : vector<1x1x16x128xbf16> to vector<16x128xbf16>
    %c0_23 = arith.constant 0 : index
    %c0_24 = arith.constant 0 : index
    %c48 = arith.constant 48 : index
    %c0_25 = arith.constant 0 : index
    %18 = vector.load %arg1[%c0_23, %c0_24, %c48, %c0_25] : memref<1x8x64x256xbf16, #tpu.memory_space<vmem>>, vector<1x1x16x128xbf16>
    %19 = vector.shape_cast %18 : vector<1x1x16x128xbf16> to vector<16x128xbf16>
    %c0_26 = arith.constant 0 : index
    %c0_27 = arith.constant 0 : index
    %c32_28 = arith.constant 32 : index
    %c1_29 = arith.constant 1 : index
    %20 = vector.load %arg1[%c0_26, %c0_27, %c32_28, %c1_29] : memref<1x8x64x256xbf16, #tpu.memory_space<vmem>>, vector<1x1x16x128xbf16>
    %21 = vector.shape_cast %20 : vector<1x1x16x128xbf16> to vector<16x128xbf16>
    %c0_30 = arith.constant 0 : index
    %c0_31 = arith.constant 0 : index
    %c0_32 = arith.constant 0 : index
    %c9_33 = arith.constant 9 : index
    %22 = vector.load %arg1[%c0_30, %c0_31, %c0_32, %c9_33] : memref<1x8x64x256xbf16, #tpu.memory_space<vmem>>, vector<1x1x16x128xbf16>
    %23 = vector.shape_cast %22 : vector<1x1x16x128xbf16> to vector<16x128xbf16>
    %c0_34 = arith.constant 0 : index
    %c0_35 = arith.constant 0 : index
    %c16_36 = arith.constant 16 : index
    %c9_37 = arith.constant 9 : index
    %24 = vector.load %arg1[%c0_34, %c0_35, %c16_36, %c9_37] : memref<1x8x64x256xbf16, #tpu.memory_space<vmem>>, vector<1x1x16x128xbf16>
    %25 = vector.shape_cast %24 : vector<1x1x16x128xbf16> to vector<16x128xbf16>
    %c0_38 = arith.constant 0 : index
    %c0_39 = arith.constant 0 : index
    %c0_40 = arith.constant 0 : index
    %c10 = arith.constant 10 : index
    %26 = vector.load %arg1[%c0_38, %c0_39, %c0_40, %c10] : memref<1x8x64x256xbf16, #tpu.memory_space<vmem>>, vector<1x1x16x128xbf16>
    %27 = vector.shape_cast %26 : vector<1x1x16x128xbf16> to vector<16x128xbf16>
    %28 = tpu.concatenate %11, %13, %15, %17, %19, %21, %23, %25, %27 in 0 : vector<16x128xbf16>, vector<16x128xbf16>, vector<16x128xbf16>, vector<16x128xbf16>, vector<16x128xbf16>, vector<16x128xbf16>, vector<16x128xbf16>, vector<16x128xbf16>, vector<16x128xbf16> -> vector<144x128xbf16>
    %cst_41 = arith.constant dense<0.000000e+00> : vector<16x128xf32>
    %29 = tpu.matmul %0, %28, %cst_41 {dimension_numbers = #tpu.dot_dimension_numbers<[1], [0], [0], [1], [0, 0, 1, 1], [], []>} : vector<16x144xbf16>, vector<144x128xbf16>, vector<16x128xf32> -> vector<16x128xf32>
    %30 = vector.broadcast %1 : vector<16x1xf32> to vector<16x128xf32>
    %31 = arith.mulf %29, %30 : vector<16x128xf32>
    %32 = vector.broadcast %2 : vector<16x1xf32> to vector<16x128xf32>
    %33 = arith.addf %31, %32 : vector<16x128xf32>
    %cst_42 = arith.constant 0.000000e+00 : f32
    %34 = vector.broadcast %cst_42 : f32 to vector<16x128xf32>
    %35 = arith.maximumf %33, %34 : vector<16x128xf32>
    %36 = arith.truncf %35 : vector<16x128xf32> to vector<16x128xbf16>
    %c1_43 = arith.constant 1 : index
    %c0_44 = arith.constant 0 : index
    %c0_45 = arith.constant 0 : index
    %37 = vector.load %arg9[%c1_43, %c0_44, %c0_45] : memref<10x16x128xbf16, #tpu.memory_space<vmem>>, vector<1x16x128xbf16>
    %38 = vector.shape_cast %37 : vector<1x16x128xbf16> to vector<16x128xbf16>
    %39 = vector.shape_cast %36 : vector<16x128xbf16> to vector<1x16x128xbf16>
    tpu.vector_store %arg9[%c1_43, %c0_44, %c0_45], %39 {strides = array<i32>} : memref<10x16x128xbf16, #tpu.memory_space<vmem>>, vector<1x16x128xbf16>,
    %c0_46 = arith.constant 0 : index
    %c1_47 = arith.constant 1 : index
    %c0_48 = arith.constant 0 : index
    %c0_49 = arith.constant 0 : index
    %40 = vector.load %arg1[%c0_46, %c1_47, %c0_48, %c0_49] : memref<1x8x64x256xbf16, #tpu.memory_space<vmem>>, vector<1x1x16x128xbf16>
    %41 = vector.shape_cast %40 : vector<1x1x16x128xbf16> to vector<16x128xbf16>
    %c0_50 = arith.constant 0 : index
    %c1_51 = arith.constant 1 : index
    %c16_52 = arith.constant 16 : index
    %c0_53 = arith.constant 0 : index
    %42 = vector.load %arg1[%c0_50, %c1_51, %c16_52, %c0_53] : memref<1x8x64x256xbf16, #tpu.memory_space<vmem>>, vector<1x1x16x128xbf16>
    %43 = vector.shape_cast %42 : vector<1x1x16x128xbf16> to vector<16x128xbf16>
    %c0_54 = arith.constant 0 : index
    %c1_55 = arith.constant 1 : index
    %c0_56 = arith.constant 0 : index
    %c1_57 = arith.constant 1 : index
    %44 = vector.load %arg1[%c0_54, %c1_55, %c0_56, %c1_57] : memref<1x8x64x256xbf16, #tpu.memory_space<vmem>>, vector<1x1x16x128xbf16>
    %45 = vector.shape_cast %44 : vector<1x1x16x128xbf16> to vector<16x128xbf16>
    %c0_58 = arith.constant 0 : index
    %c1_59 = arith.constant 1 : index
    %c32_60 = arith.constant 32 : index
    %c0_61 = arith.constant 0 : index
    %46 = vector.load %arg1[%c0_58, %c1_59, %c32_60, %c0_61] : memref<1x8x64x256xbf16, #tpu.memory_space<vmem>>, vector<1x1x16x128xbf16>
    %47 = vector.shape_cast %46 : vector<1x1x16x128xbf16> to vector<16x128xbf16>
    %c0_62 = arith.constant 0 : index
    %c1_63 = arith.constant 1 : index
    %c48_64 = arith.constant 48 : index
    %c0_65 = arith.constant 0 : index
    %48 = vector.load %arg1[%c0_62, %c1_63, %c48_64, %c0_65] : memref<1x8x64x256xbf16, #tpu.memory_space<vmem>>, vector<1x1x16x128xbf16>
    %49 = vector.shape_cast %48 : vector<1x1x16x128xbf16> to vector<16x128xbf16>
    %c0_66 = arith.constant 0 : index
    %c1_67 = arith.constant 1 : index
    %c32_68 = arith.constant 32 : index
    %c1_69 = arith.constant 1 : index
    %50 = vector.load %arg1[%c0_66, %c1_67, %c32_68, %c1_69] : memref<1x8x64x256xbf16, #tpu.memory_space<vmem>>, vector<1x1x16x128xbf16>
    %51 = vector.shape_cast %50 : vector<1x1x16x128xbf16> to vector<16x128xbf16>
    %c0_70 = arith.constant 0 : index
    %c1_71 = arith.constant 1 : index
    %c0_72 = arith.constant 0 : index
    %c9_73 = arith.constant 9 : index
    %52 = vector.load %arg1[%c0_70, %c1_71, %c0_72, %c9_73] : memref<1x8x64x256xbf16, #tpu.memory_space<vmem>>, vector<1x1x16x128xbf16>
    %53 = vector.shape_cast %52 : vector<1x1x16x128xbf16> to vector<16x128xbf16>
    %c0_74 = arith.constant 0 : index
    %c1_75 = arith.constant 1 : index
    %c16_76 = arith.constant 16 : index
    %c9_77 = arith.constant 9 : index
    %54 = vector.load %arg1[%c0_74, %c1_75, %c16_76, %c9_77] : memref<1x8x64x256xbf16, #tpu.memory_space<vmem>>, vector<1x1x16x128xbf16>
    %55 = vector.shape_cast %54 : vector<1x1x16x128xbf16> to vector<16x128xbf16>
    %c0_78 = arith.constant 0 : index
    %c1_79 = arith.constant 1 : index
    %c0_80 = arith.constant 0 : index
    %c10_81 = arith.constant 10 : index
    %56 = vector.load %arg1[%c0_78, %c1_79, %c0_80, %c10_81] : memref<1x8x64x256xbf16, #tpu.memory_space<vmem>>, vector<1x1x16x128xbf16>
    %57 = vector.shape_cast %56 : vector<1x1x16x128xbf16> to vector<16x128xbf16>
    %58 = tpu.concatenate %41, %43, %45, %47, %49, %51, %53, %55, %57 in 0 : vector<16x128xbf16>, vector<16x128xbf16>, vector<16x128xbf16>, vector<16x128xbf16>, vector<16x128xbf16>, vector<16x128xbf16>, vector<16x128xbf16>, vector<16x128xbf16>, vector<16x128xbf16> -> vector<144x128xbf16>
    %cst_82 = arith.constant dense<0.000000e+00> : vector<16x128xf32>
    %59 = tpu.matmul %0, %58, %cst_82 {dimension_numbers = #tpu.dot_dimension_numbers<[1], [0], [0], [1], [0, 0, 1, 1], [], []>} : vector<16x144xbf16>, vector<144x128xbf16>, vector<16x128xf32> -> vector<16x128xf32>
    %60 = vector.broadcast %1 : vector<16x1xf32> to vector<16x128xf32>
    %61 = arith.mulf %59, %60 : vector<16x128xf32>
    %62 = vector.broadcast %2 : vector<16x1xf32> to vector<16x128xf32>
    %63 = arith.addf %61, %62 : vector<16x128xf32>
    %cst_83 = arith.constant 0.000000e+00 : f32
    %64 = vector.broadcast %cst_83 : f32 to vector<16x128xf32>
    %65 = arith.maximumf %63, %64 : vector<16x128xf32>
    %66 = arith.truncf %65 : vector<16x128xf32> to vector<16x128xbf16>
    %c2 = arith.constant 2 : index
    %c0_84 = arith.constant 0 : index
    %c0_85 = arith.constant 0 : index
    %67 = vector.load %arg9[%c2, %c0_84, %c0_85] : memref<10x16x128xbf16, #tpu.memory_space<vmem>>, vector<1x16x128xbf16>
    %68 = vector.shape_cast %67 : vector<1x16x128xbf16> to vector<16x128xbf16>
    %69 = vector.shape_cast %66 : vector<16x128xbf16> to vector<1x16x128xbf16>
    tpu.vector_store %arg9[%c2, %c0_84, %c0_85], %69 {strides = array<i32>} : memref<10x16x128xbf16, #tpu.memory_space<vmem>>, vector<1x16x128xbf16>,
    %c0_86 = arith.constant 0 : index
    %c2_87 = arith.constant 2 : index
    %c0_88 = arith.constant 0 : index
    %c0_89 = arith.constant 0 : index
    %70 = vector.load %arg1[%c0_86, %c2_87, %c0_88, %c0_89] : memref<1x8x64x256xbf16, #tpu.memory_space<vmem>>, vector<1x1x16x128xbf16>
    %71 = vector.shape_cast %70 : vector<1x1x16x128xbf16> to vector<16x128xbf16>
    %c0_90 = arith.constant 0 : index
    %c2_91 = arith.constant 2 : index
    %c16_92 = arith.constant 16 : index
    %c0_93 = arith.constant 0 : index
    %72 = vector.load %arg1[%c0_90, %c2_91, %c16_92, %c0_93] : memref<1x8x64x256xbf16, #tpu.memory_space<vmem>>, vector<1x1x16x128xbf16>
    %73 = vector.shape_cast %72 : vector<1x1x16x128xbf16> to vector<16x128xbf16>
    %c0_94 = arith.constant 0 : index
    %c2_95 = arith.constant 2 : index
    %c0_96 = arith.constant 0 : index
    %c1_97 = arith.constant 1 : index
    %74 = vector.load %arg1[%c0_94, %c2_95, %c0_96, %c1_97] : memref<1x8x64x256xbf16, #tpu.memory_space<vmem>>, vector<1x1x16x128xbf16>
    %75 = vector.shape_cast %74 : vector<1x1x16x128xbf16> to vector<16x128xbf16>
    %c0_98 = arith.constant 0 : index
    %c2_99 = arith.constant 2 : index
    %c32_100 = arith.constant 32 : index
    %c0_101 = arith.constant 0 : index
    %76 = vector.load %arg1[%c0_98, %c2_99, %c32_100, %c0_101] : memref<1x8x64x256xbf16, #tpu.memory_space<vmem>>, vector<1x1x16x128xbf16>
    %77 = vector.shape_cast %76 : vector<1x1x16x128xbf16> to vector<16x128xbf16>
    %c0_102 = arith.constant 0 : index
    %c2_103 = arith.constant 2 : index
    %c48_104 = arith.constant 48 : index
    %c0_105 = arith.constant 0 : index
    %78 = vector.load %arg1[%c0_102, %c2_103, %c48_104, %c0_105] : memref<1x8x64x256xbf16, #tpu.memory_space<vmem>>, vector<1x1x16x128xbf16>
    %79 = vector.shape_cast %78 : vector<1x1x16x128xbf16> to vector<16x128xbf16>
    %c0_106 = arith.constant 0 : index
    %c2_107 = arith.constant 2 : index
    %c32_108 = arith.constant 32 : index
    %c1_109 = arith.constant 1 : index
    %80 = vector.load %arg1[%c0_106, %c2_107, %c32_108, %c1_109] : memref<1x8x64x256xbf16, #tpu.memory_space<vmem>>, vector<1x1x16x128xbf16>
    %81 = vector.shape_cast %80 : vector<1x1x16x128xbf16> to vector<16x128xbf16>
    %c0_110 = arith.constant 0 : index
    %c2_111 = arith.constant 2 : index
    %c0_112 = arith.constant 0 : index
    %c9_113 = arith.constant 9 : index
    %82 = vector.load %arg1[%c0_110, %c2_111, %c0_112, %c9_113] : memref<1x8x64x256xbf16, #tpu.memory_space<vmem>>, vector<1x1x16x128xbf16>
    %83 = vector.shape_cast %82 : vector<1x1x16x128xbf16> to vector<16x128xbf16>
    %c0_114 = arith.constant 0 : index
    %c2_115 = arith.constant 2 : index
    %c16_116 = arith.constant 16 : index
    %c9_117 = arith.constant 9 : index
    %84 = vector.load %arg1[%c0_114, %c2_115, %c16_116, %c9_117] : memref<1x8x64x256xbf16, #tpu.memory_space<vmem>>, vector<1x1x16x128xbf16>
    %85 = vector.shape_cast %84 : vector<1x1x16x128xbf16> to vector<16x128xbf16>
    %c0_118 = arith.constant 0 : index
    %c2_119 = arith.constant 2 : index
    %c0_120 = arith.constant 0 : index
    %c10_121 = arith.constant 10 : index
    %86 = vector.load %arg1[%c0_118, %c2_119, %c0_120, %c10_121] : memref<1x8x64x256xbf16, #tpu.memory_space<vmem>>, vector<1x1x16x128xbf16>
    %87 = vector.shape_cast %86 : vector<1x1x16x128xbf16> to vector<16x128xbf16>
    %88 = tpu.concatenate %71, %73, %75, %77, %79, %81, %83, %85, %87 in 0 : vector<16x128xbf16>, vector<16x128xbf16>, vector<16x128xbf16>, vector<16x128xbf16>, vector<16x128xbf16>, vector<16x128xbf16>, vector<16x128xbf16>, vector<16x128xbf16>, vector<16x128xbf16> -> vector<144x128xbf16>
    %cst_122 = arith.constant dense<0.000000e+00> : vector<16x128xf32>
    %89 = tpu.matmul %0, %88, %cst_122 {dimension_numbers = #tpu.dot_dimension_numbers<[1], [0], [0], [1], [0, 0, 1, 1], [], []>} : vector<16x144xbf16>, vector<144x128xbf16>, vector<16x128xf32> -> vector<16x128xf32>
    %90 = vector.broadcast %1 : vector<16x1xf32> to vector<16x128xf32>
    %91 = arith.mulf %89, %90 : vector<16x128xf32>
    %92 = vector.broadcast %2 : vector<16x1xf32> to vector<16x128xf32>
    %93 = arith.addf %91, %92 : vector<16x128xf32>
    %cst_123 = arith.constant 0.000000e+00 : f32
    %94 = vector.broadcast %cst_123 : f32 to vector<16x128xf32>
    %95 = arith.maximumf %93, %94 : vector<16x128xf32>
    %96 = arith.truncf %95 : vector<16x128xf32> to vector<16x128xbf16>
    %c3 = arith.constant 3 : index
    %c0_124 = arith.constant 0 : index
    %c0_125 = arith.constant 0 : index
    %97 = vector.load %arg9[%c3, %c0_124, %c0_125] : memref<10x16x128xbf16, #tpu.memory_space<vmem>>, vector<1x16x128xbf16>
    %98 = vector.shape_cast %97 : vector<1x16x128xbf16> to vector<16x128xbf16>
    %99 = vector.shape_cast %96 : vector<16x128xbf16> to vector<1x16x128xbf16>
    tpu.vector_store %arg9[%c3, %c0_124, %c0_125], %99 {strides = array<i32>} : memref<10x16x128xbf16, #tpu.memory_space<vmem>>, vector<1x16x128xbf16>,
    %c0_126 = arith.constant 0 : index
    %c3_127 = arith.constant 3 : index
    %c0_128 = arith.constant 0 : index
    %c0_129 = arith.constant 0 : index
    %100 = vector.load %arg1[%c0_126, %c3_127, %c0_128, %c0_129] : memref<1x8x64x256xbf16, #tpu.memory_space<vmem>>, vector<1x1x16x128xbf16>
    %101 = vector.shape_cast %100 : vector<1x1x16x128xbf16> to vector<16x128xbf16>
    %c0_130 = arith.constant 0 : index
    %c3_131 = arith.constant 3 : index
    %c16_132 = arith.constant 16 : index
    %c0_133 = arith.constant 0 : index
    %102 = vector.load %arg1[%c0_130, %c3_131, %c16_132, %c0_133] : memref<1x8x64x256xbf16, #tpu.memory_space<vmem>>, vector<1x1x16x128xbf16>
    %103 = vector.shape_cast %102 : vector<1x1x16x128xbf16> to vector<16x128xbf16>
    %c0_134 = arith.constant 0 : index
    %c3_135 = arith.constant 3 : index
    %c0_136 = arith.constant 0 : index
    %c1_137 = arith.constant 1 : index
    %104 = vector.load %arg1[%c0_134, %c3_135, %c0_136, %c1_137] : memref<1x8x64x256xbf16, #tpu.memory_space<vmem>>, vector<1x1x16x128xbf16>
    %105 = vector.shape_cast %104 : vector<1x1x16x128xbf16> to vector<16x128xbf16>
    %c0_138 = arith.constant 0 : index
    %c3_139 = arith.constant 3 : index
    %c32_140 = arith.constant 32 : index
    %c0_141 = arith.constant 0 : index
    %106 = vector.load %arg1[%c0_138, %c3_139, %c32_140, %c0_141] : memref<1x8x64x256xbf16, #tpu.memory_space<vmem>>, vector<1x1x16x128xbf16>
    %107 = vector.shape_cast %106 : vector<1x1x16x128xbf16> to vector<16x128xbf16>
    %c0_142 = arith.constant 0 : index
    %c3_143 = arith.constant 3 : index
    %c48_144 = arith.constant 48 : index
    %c0_145 = arith.constant 0 : index
    %108 = vector.load %arg1[%c0_142, %c3_143, %c48_144, %c0_145] : memref<1x8x64x256xbf16, #tpu.memory_space<vmem>>, vector<1x1x16x128xbf16>
    %109 = vector.shape_cast %108 : vector<1x1x16x128xbf16> to vector<16x128xbf16>
    %c0_146 = arith.constant 0 : index
    %c3_147 = arith.constant 3 : index
    %c32_148 = arith.constant 32 : index
    %c1_149 = arith.constant 1 : index
    %110 = vector.load %arg1[%c0_146, %c3_147, %c32_148, %c1_149] : memref<1x8x64x256xbf16, #tpu.memory_space<vmem>>, vector<1x1x16x128xbf16>
    %111 = vector.shape_cast %110 : vector<1x1x16x128xbf16> to vector<16x128xbf16>
    %c0_150 = arith.constant 0 : index
    %c3_151 = arith.constant 3 : index
    %c0_152 = arith.constant 0 : index
    %c9_153 = arith.constant 9 : index
    %112 = vector.load %arg1[%c0_150, %c3_151, %c0_152, %c9_153] : memref<1x8x64x256xbf16, #tpu.memory_space<vmem>>, vector<1x1x16x128xbf16>
    %113 = vector.shape_cast %112 : vector<1x1x16x128xbf16> to vector<16x128xbf16>
    %c0_154 = arith.constant 0 : index
    %c3_155 = arith.constant 3 : index
    %c16_156 = arith.constant 16 : index
    %c9_157 = arith.constant 9 : index
    %114 = vector.load %arg1[%c0_154, %c3_155, %c16_156, %c9_157] : memref<1x8x64x256xbf16, #tpu.memory_space<vmem>>, vector<1x1x16x128xbf16>
    %115 = vector.shape_cast %114 : vector<1x1x16x128xbf16> to vector<16x128xbf16>
    %c0_158 = arith.constant 0 : index
    %c3_159 = arith.constant 3 : index
    %c0_160 = arith.constant 0 : index
    %c10_161 = arith.constant 10 : index
    %116 = vector.load %arg1[%c0_158, %c3_159, %c0_160, %c10_161] : memref<1x8x64x256xbf16, #tpu.memory_space<vmem>>, vector<1x1x16x128xbf16>
    %117 = vector.shape_cast %116 : vector<1x1x16x128xbf16> to vector<16x128xbf16>
    %118 = tpu.concatenate %101, %103, %105, %107, %109, %111, %113, %115, %117 in 0 : vector<16x128xbf16>, vector<16x128xbf16>, vector<16x128xbf16>, vector<16x128xbf16>, vector<16x128xbf16>, vector<16x128xbf16>, vector<16x128xbf16>, vector<16x128xbf16>, vector<16x128xbf16> -> vector<144x128xbf16>
    %cst_162 = arith.constant dense<0.000000e+00> : vector<16x128xf32>
    %119 = tpu.matmul %0, %118, %cst_162 {dimension_numbers = #tpu.dot_dimension_numbers<[1], [0], [0], [1], [0, 0, 1, 1], [], []>} : vector<16x144xbf16>, vector<144x128xbf16>, vector<16x128xf32> -> vector<16x128xf32>
    %120 = vector.broadcast %1 : vector<16x1xf32> to vector<16x128xf32>
    %121 = arith.mulf %119, %120 : vector<16x128xf32>
    %122 = vector.broadcast %2 : vector<16x1xf32> to vector<16x128xf32>
    %123 = arith.addf %121, %122 : vector<16x128xf32>
    %cst_163 = arith.constant 0.000000e+00 : f32
    %124 = vector.broadcast %cst_163 : f32 to vector<16x128xf32>
    %125 = arith.maximumf %123, %124 : vector<16x128xf32>
    %126 = arith.truncf %125 : vector<16x128xf32> to vector<16x128xbf16>
    %c4 = arith.constant 4 : index
    %c0_164 = arith.constant 0 : index
    %c0_165 = arith.constant 0 : index
    %127 = vector.load %arg9[%c4, %c0_164, %c0_165] : memref<10x16x128xbf16, #tpu.memory_space<vmem>>, vector<1x16x128xbf16>
    %128 = vector.shape_cast %127 : vector<1x16x128xbf16> to vector<16x128xbf16>
    %129 = vector.shape_cast %126 : vector<16x128xbf16> to vector<1x16x128xbf16>
    tpu.vector_store %arg9[%c4, %c0_164, %c0_165], %129 {strides = array<i32>} : memref<10x16x128xbf16, #tpu.memory_space<vmem>>, vector<1x16x128xbf16>,
    %c0_166 = arith.constant 0 : index
    %c4_167 = arith.constant 4 : index
    %c0_168 = arith.constant 0 : index
    %c0_169 = arith.constant 0 : index
    %130 = vector.load %arg1[%c0_166, %c4_167, %c0_168, %c0_169] : memref<1x8x64x256xbf16, #tpu.memory_space<vmem>>, vector<1x1x16x128xbf16>
    %131 = vector.shape_cast %130 : vector<1x1x16x128xbf16> to vector<16x128xbf16>
    %c0_170 = arith.constant 0 : index
    %c4_171 = arith.constant 4 : index
    %c16_172 = arith.constant 16 : index
    %c0_173 = arith.constant 0 : index
    %132 = vector.load %arg1[%c0_170, %c4_171, %c16_172, %c0_173] : memref<1x8x64x256xbf16, #tpu.memory_space<vmem>>, vector<1x1x16x128xbf16>
    %133 = vector.shape_cast %132 : vector<1x1x16x128xbf16> to vector<16x128xbf16>
    %c0_174 = arith.constant 0 : index
    %c4_175 = arith.constant 4 : index
    %c0_176 = arith.constant 0 : index
    %c1_177 = arith.constant 1 : index
    %134 = vector.load %arg1[%c0_174, %c4_175, %c0_176, %c1_177] : memref<1x8x64x256xbf16, #tpu.memory_space<vmem>>, vector<1x1x16x128xbf16>
    %135 = vector.shape_cast %134 : vector<1x1x16x128xbf16> to vector<16x128xbf16>
    %c0_178 = arith.constant 0 : index
    %c4_179 = arith.constant 4 : index
    %c32_180 = arith.constant 32 : index
    %c0_181 = arith.constant 0 : index
    %136 = vector.load %arg1[%c0_178, %c4_179, %c32_180, %c0_181] : memref<1x8x64x256xbf16, #tpu.memory_space<vmem>>, vector<1x1x16x128xbf16>
    %137 = vector.shape_cast %136 : vector<1x1x16x128xbf16> to vector<16x128xbf16>
    %c0_182 = arith.constant 0 : index
    %c4_183 = arith.constant 4 : index
    %c48_184 = arith.constant 48 : index
    %c0_185 = arith.constant 0 : index
    %138 = vector.load %arg1[%c0_182, %c4_183, %c48_184, %c0_185] : memref<1x8x64x256xbf16, #tpu.memory_space<vmem>>, vector<1x1x16x128xbf16>
    %139 = vector.shape_cast %138 : vector<1x1x16x128xbf16> to vector<16x128xbf16>
    %c0_186 = arith.constant 0 : index
    %c4_187 = arith.constant 4 : index
    %c32_188 = arith.constant 32 : index
    %c1_189 = arith.constant 1 : index
    %140 = vector.load %arg1[%c0_186, %c4_187, %c32_188, %c1_189] : memref<1x8x64x256xbf16, #tpu.memory_space<vmem>>, vector<1x1x16x128xbf16>
    %141 = vector.shape_cast %140 : vector<1x1x16x128xbf16> to vector<16x128xbf16>
    %c0_190 = arith.constant 0 : index
    %c4_191 = arith.constant 4 : index
    %c0_192 = arith.constant 0 : index
    %c9_193 = arith.constant 9 : index
    %142 = vector.load %arg1[%c0_190, %c4_191, %c0_192, %c9_193] : memref<1x8x64x256xbf16, #tpu.memory_space<vmem>>, vector<1x1x16x128xbf16>
    %143 = vector.shape_cast %142 : vector<1x1x16x128xbf16> to vector<16x128xbf16>
    %c0_194 = arith.constant 0 : index
    %c4_195 = arith.constant 4 : index
    %c16_196 = arith.constant 16 : index
    %c9_197 = arith.constant 9 : index
    %144 = vector.load %arg1[%c0_194, %c4_195, %c16_196, %c9_197] : memref<1x8x64x256xbf16, #tpu.memory_space<vmem>>, vector<1x1x16x128xbf16>
    %145 = vector.shape_cast %144 : vector<1x1x16x128xbf16> to vector<16x128xbf16>
    %c0_198 = arith.constant 0 : index
    %c4_199 = arith.constant 4 : index
    %c0_200 = arith.constant 0 : index
    %c10_201 = arith.constant 10 : index
    %146 = vector.load %arg1[%c0_198, %c4_199, %c0_200, %c10_201] : memref<1x8x64x256xbf16, #tpu.memory_space<vmem>>, vector<1x1x16x128xbf16>
    %147 = vector.shape_cast %146 : vector<1x1x16x128xbf16> to vector<16x128xbf16>
    %148 = tpu.concatenate %131, %133, %135, %137, %139, %141, %143, %145, %147 in 0 : vector<16x128xbf16>, vector<16x128xbf16>, vector<16x128xbf16>, vector<16x128xbf16>, vector<16x128xbf16>, vector<16x128xbf16>, vector<16x128xbf16>, vector<16x128xbf16>, vector<16x128xbf16> -> vector<144x128xbf16>
    %cst_202 = arith.constant dense<0.000000e+00> : vector<16x128xf32>
    %149 = tpu.matmul %0, %148, %cst_202 {dimension_numbers = #tpu.dot_dimension_numbers<[1], [0], [0], [1], [0, 0, 1, 1], [], []>} : vector<16x144xbf16>, vector<144x128xbf16>, vector<16x128xf32> -> vector<16x128xf32>
    %150 = vector.broadcast %1 : vector<16x1xf32> to vector<16x128xf32>
    %151 = arith.mulf %149, %150 : vector<16x128xf32>
    %152 = vector.broadcast %2 : vector<16x1xf32> to vector<16x128xf32>
    %153 = arith.addf %151, %152 : vector<16x128xf32>
    %cst_203 = arith.constant 0.000000e+00 : f32
    %154 = vector.broadcast %cst_203 : f32 to vector<16x128xf32>
    %155 = arith.maximumf %153, %154 : vector<16x128xf32>
    %156 = arith.truncf %155 : vector<16x128xf32> to vector<16x128xbf16>
    %c5 = arith.constant 5 : index
    %c0_204 = arith.constant 0 : index
    %c0_205 = arith.constant 0 : index
    %157 = vector.load %arg9[%c5, %c0_204, %c0_205] : memref<10x16x128xbf16, #tpu.memory_space<vmem>>, vector<1x16x128xbf16>
    %158 = vector.shape_cast %157 : vector<1x16x128xbf16> to vector<16x128xbf16>
    %159 = vector.shape_cast %156 : vector<16x128xbf16> to vector<1x16x128xbf16>
    tpu.vector_store %arg9[%c5, %c0_204, %c0_205], %159 {strides = array<i32>} : memref<10x16x128xbf16, #tpu.memory_space<vmem>>, vector<1x16x128xbf16>,
    %c0_206 = arith.constant 0 : index
    %c5_207 = arith.constant 5 : index
    %c0_208 = arith.constant 0 : index
    %c0_209 = arith.constant 0 : index
    %160 = vector.load %arg1[%c0_206, %c5_207, %c0_208, %c0_209] : memref<1x8x64x256xbf16, #tpu.memory_space<vmem>>, vector<1x1x16x128xbf16>
    %161 = vector.shape_cast %160 : vector<1x1x16x128xbf16> to vector<16x128xbf16>
    %c0_210 = arith.constant 0 : index
    %c5_211 = arith.constant 5 : index
    %c16_212 = arith.constant 16 : index
    %c0_213 = arith.constant 0 : index
    %162 = vector.load %arg1[%c0_210, %c5_211, %c16_212, %c0_213] : memref<1x8x64x256xbf16, #tpu.memory_space<vmem>>, vector<1x1x16x128xbf16>
    %163 = vector.shape_cast %162 : vector<1x1x16x128xbf16> to vector<16x128xbf16>
    %c0_214 = arith.constant 0 : index
    %c5_215 = arith.constant 5 : index
    %c0_216 = arith.constant 0 : index
    %c1_217 = arith.constant 1 : index
    %164 = vector.load %arg1[%c0_214, %c5_215, %c0_216, %c1_217] : memref<1x8x64x256xbf16, #tpu.memory_space<vmem>>, vector<1x1x16x128xbf16>
    %165 = vector.shape_cast %164 : vector<1x1x16x128xbf16> to vector<16x128xbf16>
    %c0_218 = arith.constant 0 : index
    %c5_219 = arith.constant 5 : index
    %c32_220 = arith.constant 32 : index
    %c0_221 = arith.constant 0 : index
    %166 = vector.load %arg1[%c0_218, %c5_219, %c32_220, %c0_221] : memref<1x8x64x256xbf16, #tpu.memory_space<vmem>>, vector<1x1x16x128xbf16>
    %167 = vector.shape_cast %166 : vector<1x1x16x128xbf16> to vector<16x128xbf16>
    %c0_222 = arith.constant 0 : index
    %c5_223 = arith.constant 5 : index
    %c48_224 = arith.constant 48 : index
    %c0_225 = arith.constant 0 : index
    %168 = vector.load %arg1[%c0_222, %c5_223, %c48_224, %c0_225] : memref<1x8x64x256xbf16, #tpu.memory_space<vmem>>, vector<1x1x16x128xbf16>
    %169 = vector.shape_cast %168 : vector<1x1x16x128xbf16> to vector<16x128xbf16>
    %c0_226 = arith.constant 0 : index
    %c5_227 = arith.constant 5 : index
    %c32_228 = arith.constant 32 : index
    %c1_229 = arith.constant 1 : index
    %170 = vector.load %arg1[%c0_226, %c5_227, %c32_228, %c1_229] : memref<1x8x64x256xbf16, #tpu.memory_space<vmem>>, vector<1x1x16x128xbf16>
    %171 = vector.shape_cast %170 : vector<1x1x16x128xbf16> to vector<16x128xbf16>
    %c0_230 = arith.constant 0 : index
    %c5_231 = arith.constant 5 : index
    %c0_232 = arith.constant 0 : index
    %c9_233 = arith.constant 9 : index
    %172 = vector.load %arg1[%c0_230, %c5_231, %c0_232, %c9_233] : memref<1x8x64x256xbf16, #tpu.memory_space<vmem>>, vector<1x1x16x128xbf16>
    %173 = vector.shape_cast %172 : vector<1x1x16x128xbf16> to vector<16x128xbf16>
    %c0_234 = arith.constant 0 : index
    %c5_235 = arith.constant 5 : index
    %c16_236 = arith.constant 16 : index
    %c9_237 = arith.constant 9 : index
    %174 = vector.load %arg1[%c0_234, %c5_235, %c16_236, %c9_237] : memref<1x8x64x256xbf16, #tpu.memory_space<vmem>>, vector<1x1x16x128xbf16>
    %175 = vector.shape_cast %174 : vector<1x1x16x128xbf16> to vector<16x128xbf16>
    %c0_238 = arith.constant 0 : index
    %c5_239 = arith.constant 5 : index
    %c0_240 = arith.constant 0 : index
    %c10_241 = arith.constant 10 : index
    %176 = vector.load %arg1[%c0_238, %c5_239, %c0_240, %c10_241] : memref<1x8x64x256xbf16, #tpu.memory_space<vmem>>, vector<1x1x16x128xbf16>
    %177 = vector.shape_cast %176 : vector<1x1x16x128xbf16> to vector<16x128xbf16>
    %178 = tpu.concatenate %161, %163, %165, %167, %169, %171, %173, %175, %177 in 0 : vector<16x128xbf16>, vector<16x128xbf16>, vector<16x128xbf16>, vector<16x128xbf16>, vector<16x128xbf16>, vector<16x128xbf16>, vector<16x128xbf16>, vector<16x128xbf16>, vector<16x128xbf16> -> vector<144x128xbf16>
    %cst_242 = arith.constant dense<0.000000e+00> : vector<16x128xf32>
    %179 = tpu.matmul %0, %178, %cst_242 {dimension_numbers = #tpu.dot_dimension_numbers<[1], [0], [0], [1], [0, 0, 1, 1], [], []>} : vector<16x144xbf16>, vector<144x128xbf16>, vector<16x128xf32> -> vector<16x128xf32>
    %180 = vector.broadcast %1 : vector<16x1xf32> to vector<16x128xf32>
    %181 = arith.mulf %179, %180 : vector<16x128xf32>
    %182 = vector.broadcast %2 : vector<16x1xf32> to vector<16x128xf32>
    %183 = arith.addf %181, %182 : vector<16x128xf32>
    %cst_243 = arith.constant 0.000000e+00 : f32
    %184 = vector.broadcast %cst_243 : f32 to vector<16x128xf32>
    %185 = arith.maximumf %183, %184 : vector<16x128xf32>
    %186 = arith.truncf %185 : vector<16x128xf32> to vector<16x128xbf16>
    %c6 = arith.constant 6 : index
    %c0_244 = arith.constant 0 : index
    %c0_245 = arith.constant 0 : index
    %187 = vector.load %arg9[%c6, %c0_244, %c0_245] : memref<10x16x128xbf16, #tpu.memory_space<vmem>>, vector<1x16x128xbf16>
    %188 = vector.shape_cast %187 : vector<1x16x128xbf16> to vector<16x128xbf16>
    %189 = vector.shape_cast %186 : vector<16x128xbf16> to vector<1x16x128xbf16>
    tpu.vector_store %arg9[%c6, %c0_244, %c0_245], %189 {strides = array<i32>} : memref<10x16x128xbf16, #tpu.memory_space<vmem>>, vector<1x16x128xbf16>,
    %c0_246 = arith.constant 0 : index
    %c6_247 = arith.constant 6 : index
    %c0_248 = arith.constant 0 : index
    %c0_249 = arith.constant 0 : index
    %190 = vector.load %arg1[%c0_246, %c6_247, %c0_248, %c0_249] : memref<1x8x64x256xbf16, #tpu.memory_space<vmem>>, vector<1x1x16x128xbf16>
    %191 = vector.shape_cast %190 : vector<1x1x16x128xbf16> to vector<16x128xbf16>
    %c0_250 = arith.constant 0 : index
    %c6_251 = arith.constant 6 : index
    %c16_252 = arith.constant 16 : index
    %c0_253 = arith.constant 0 : index
    %192 = vector.load %arg1[%c0_250, %c6_251, %c16_252, %c0_253] : memref<1x8x64x256xbf16, #tpu.memory_space<vmem>>, vector<1x1x16x128xbf16>
    %193 = vector.shape_cast %192 : vector<1x1x16x128xbf16> to vector<16x128xbf16>
    %c0_254 = arith.constant 0 : index
    %c6_255 = arith.constant 6 : index
    %c0_256 = arith.constant 0 : index
    %c1_257 = arith.constant 1 : index
    %194 = vector.load %arg1[%c0_254, %c6_255, %c0_256, %c1_257] : memref<1x8x64x256xbf16, #tpu.memory_space<vmem>>, vector<1x1x16x128xbf16>
    %195 = vector.shape_cast %194 : vector<1x1x16x128xbf16> to vector<16x128xbf16>
    %c0_258 = arith.constant 0 : index
    %c6_259 = arith.constant 6 : index
    %c32_260 = arith.constant 32 : index
    %c0_261 = arith.constant 0 : index
    %196 = vector.load %arg1[%c0_258, %c6_259, %c32_260, %c0_261] : memref<1x8x64x256xbf16, #tpu.memory_space<vmem>>, vector<1x1x16x128xbf16>
    %197 = vector.shape_cast %196 : vector<1x1x16x128xbf16> to vector<16x128xbf16>
    %c0_262 = arith.constant 0 : index
    %c6_263 = arith.constant 6 : index
    %c48_264 = arith.constant 48 : index
    %c0_265 = arith.constant 0 : index
    %198 = vector.load %arg1[%c0_262, %c6_263, %c48_264, %c0_265] : memref<1x8x64x256xbf16, #tpu.memory_space<vmem>>, vector<1x1x16x128xbf16>
    %199 = vector.shape_cast %198 : vector<1x1x16x128xbf16> to vector<16x128xbf16>
    %c0_266 = arith.constant 0 : index
    %c6_267 = arith.constant 6 : index
    %c32_268 = arith.constant 32 : index
    %c1_269 = arith.constant 1 : index
    %200 = vector.load %arg1[%c0_266, %c6_267, %c32_268, %c1_269] : memref<1x8x64x256xbf16, #tpu.memory_space<vmem>>, vector<1x1x16x128xbf16>
    %201 = vector.shape_cast %200 : vector<1x1x16x128xbf16> to vector<16x128xbf16>
    %c0_270 = arith.constant 0 : index
    %c6_271 = arith.constant 6 : index
    %c0_272 = arith.constant 0 : index
    %c9_273 = arith.constant 9 : index
    %202 = vector.load %arg1[%c0_270, %c6_271, %c0_272, %c9_273] : memref<1x8x64x256xbf16, #tpu.memory_space<vmem>>, vector<1x1x16x128xbf16>
    %203 = vector.shape_cast %202 : vector<1x1x16x128xbf16> to vector<16x128xbf16>
    %c0_274 = arith.constant 0 : index
    %c6_275 = arith.constant 6 : index
    %c16_276 = arith.constant 16 : index
    %c9_277 = arith.constant 9 : index
    %204 = vector.load %arg1[%c0_274, %c6_275, %c16_276, %c9_277] : memref<1x8x64x256xbf16, #tpu.memory_space<vmem>>, vector<1x1x16x128xbf16>
    %205 = vector.shape_cast %204 : vector<1x1x16x128xbf16> to vector<16x128xbf16>
    %c0_278 = arith.constant 0 : index
    %c6_279 = arith.constant 6 : index
    %c0_280 = arith.constant 0 : index
    %c10_281 = arith.constant 10 : index
    %206 = vector.load %arg1[%c0_278, %c6_279, %c0_280, %c10_281] : memref<1x8x64x256xbf16, #tpu.memory_space<vmem>>, vector<1x1x16x128xbf16>
    %207 = vector.shape_cast %206 : vector<1x1x16x128xbf16> to vector<16x128xbf16>
    %208 = tpu.concatenate %191, %193, %195, %197, %199, %201, %203, %205, %207 in 0 : vector<16x128xbf16>, vector<16x128xbf16>, vector<16x128xbf16>, vector<16x128xbf16>, vector<16x128xbf16>, vector<16x128xbf16>, vector<16x128xbf16>, vector<16x128xbf16>, vector<16x128xbf16> -> vector<144x128xbf16>
    %cst_282 = arith.constant dense<0.000000e+00> : vector<16x128xf32>
    %209 = tpu.matmul %0, %208, %cst_282 {dimension_numbers = #tpu.dot_dimension_numbers<[1], [0], [0], [1], [0, 0, 1, 1], [], []>} : vector<16x144xbf16>, vector<144x128xbf16>, vector<16x128xf32> -> vector<16x128xf32>
    %210 = vector.broadcast %1 : vector<16x1xf32> to vector<16x128xf32>
    %211 = arith.mulf %209, %210 : vector<16x128xf32>
    %212 = vector.broadcast %2 : vector<16x1xf32> to vector<16x128xf32>
    %213 = arith.addf %211, %212 : vector<16x128xf32>
    %cst_283 = arith.constant 0.000000e+00 : f32
    %214 = vector.broadcast %cst_283 : f32 to vector<16x128xf32>
    %215 = arith.maximumf %213, %214 : vector<16x128xf32>
    %216 = arith.truncf %215 : vector<16x128xf32> to vector<16x128xbf16>
    %c7 = arith.constant 7 : index
    %c0_284 = arith.constant 0 : index
    %c0_285 = arith.constant 0 : index
    %217 = vector.load %arg9[%c7, %c0_284, %c0_285] : memref<10x16x128xbf16, #tpu.memory_space<vmem>>, vector<1x16x128xbf16>
    %218 = vector.shape_cast %217 : vector<1x16x128xbf16> to vector<16x128xbf16>
    %219 = vector.shape_cast %216 : vector<16x128xbf16> to vector<1x16x128xbf16>
    tpu.vector_store %arg9[%c7, %c0_284, %c0_285], %219 {strides = array<i32>} : memref<10x16x128xbf16, #tpu.memory_space<vmem>>, vector<1x16x128xbf16>,
    %c0_286 = arith.constant 0 : index
    %c7_287 = arith.constant 7 : index
    %c0_288 = arith.constant 0 : index
    %c0_289 = arith.constant 0 : index
    %220 = vector.load %arg1[%c0_286, %c7_287, %c0_288, %c0_289] : memref<1x8x64x256xbf16, #tpu.memory_space<vmem>>, vector<1x1x16x128xbf16>
    %221 = vector.shape_cast %220 : vector<1x1x16x128xbf16> to vector<16x128xbf16>
    %c0_290 = arith.constant 0 : index
    %c7_291 = arith.constant 7 : index
    %c16_292 = arith.constant 16 : index
    %c0_293 = arith.constant 0 : index
    %222 = vector.load %arg1[%c0_290, %c7_291, %c16_292, %c0_293] : memref<1x8x64x256xbf16, #tpu.memory_space<vmem>>, vector<1x1x16x128xbf16>
    %223 = vector.shape_cast %222 : vector<1x1x16x128xbf16> to vector<16x128xbf16>
    %c0_294 = arith.constant 0 : index
    %c7_295 = arith.constant 7 : index
    %c0_296 = arith.constant 0 : index
    %c1_297 = arith.constant 1 : index
    %224 = vector.load %arg1[%c0_294, %c7_295, %c0_296, %c1_297] : memref<1x8x64x256xbf16, #tpu.memory_space<vmem>>, vector<1x1x16x128xbf16>
    %225 = vector.shape_cast %224 : vector<1x1x16x128xbf16> to vector<16x128xbf16>
    %c0_298 = arith.constant 0 : index
    %c7_299 = arith.constant 7 : index
    %c32_300 = arith.constant 32 : index
    %c0_301 = arith.constant 0 : index
    %226 = vector.load %arg1[%c0_298, %c7_299, %c32_300, %c0_301] : memref<1x8x64x256xbf16, #tpu.memory_space<vmem>>, vector<1x1x16x128xbf16>
    %227 = vector.shape_cast %226 : vector<1x1x16x128xbf16> to vector<16x128xbf16>
    %c0_302 = arith.constant 0 : index
    %c7_303 = arith.constant 7 : index
    %c48_304 = arith.constant 48 : index
    %c0_305 = arith.constant 0 : index
    %228 = vector.load %arg1[%c0_302, %c7_303, %c48_304, %c0_305] : memref<1x8x64x256xbf16, #tpu.memory_space<vmem>>, vector<1x1x16x128xbf16>
    %229 = vector.shape_cast %228 : vector<1x1x16x128xbf16> to vector<16x128xbf16>
    %c0_306 = arith.constant 0 : index
    %c7_307 = arith.constant 7 : index
    %c32_308 = arith.constant 32 : index
    %c1_309 = arith.constant 1 : index
    %230 = vector.load %arg1[%c0_306, %c7_307, %c32_308, %c1_309] : memref<1x8x64x256xbf16, #tpu.memory_space<vmem>>, vector<1x1x16x128xbf16>
    %231 = vector.shape_cast %230 : vector<1x1x16x128xbf16> to vector<16x128xbf16>
    %c0_310 = arith.constant 0 : index
    %c7_311 = arith.constant 7 : index
    %c0_312 = arith.constant 0 : index
    %c9_313 = arith.constant 9 : index
    %232 = vector.load %arg1[%c0_310, %c7_311, %c0_312, %c9_313] : memref<1x8x64x256xbf16, #tpu.memory_space<vmem>>, vector<1x1x16x128xbf16>
    %233 = vector.shape_cast %232 : vector<1x1x16x128xbf16> to vector<16x128xbf16>
    %c0_314 = arith.constant 0 : index
    %c7_315 = arith.constant 7 : index
    %c16_316 = arith.constant 16 : index
    %c9_317 = arith.constant 9 : index
    %234 = vector.load %arg1[%c0_314, %c7_315, %c16_316, %c9_317] : memref<1x8x64x256xbf16, #tpu.memory_space<vmem>>, vector<1x1x16x128xbf16>
    %235 = vector.shape_cast %234 : vector<1x1x16x128xbf16> to vector<16x128xbf16>
    %c0_318 = arith.constant 0 : index
    %c7_319 = arith.constant 7 : index
    %c0_320 = arith.constant 0 : index
    %c10_321 = arith.constant 10 : index
    %236 = vector.load %arg1[%c0_318, %c7_319, %c0_320, %c10_321] : memref<1x8x64x256xbf16, #tpu.memory_space<vmem>>, vector<1x1x16x128xbf16>
    %237 = vector.shape_cast %236 : vector<1x1x16x128xbf16> to vector<16x128xbf16>
    %238 = tpu.concatenate %221, %223, %225, %227, %229, %231, %233, %235, %237 in 0 : vector<16x128xbf16>, vector<16x128xbf16>, vector<16x128xbf16>, vector<16x128xbf16>, vector<16x128xbf16>, vector<16x128xbf16>, vector<16x128xbf16>, vector<16x128xbf16>, vector<16x128xbf16> -> vector<144x128xbf16>
    %cst_322 = arith.constant dense<0.000000e+00> : vector<16x128xf32>
    %239 = tpu.matmul %0, %238, %cst_322 {dimension_numbers = #tpu.dot_dimension_numbers<[1], [0], [0], [1], [0, 0, 1, 1], [], []>} : vector<16x144xbf16>, vector<144x128xbf16>, vector<16x128xf32> -> vector<16x128xf32>
    %240 = vector.broadcast %1 : vector<16x1xf32> to vector<16x128xf32>
    %241 = arith.mulf %239, %240 : vector<16x128xf32>
    %242 = vector.broadcast %2 : vector<16x1xf32> to vector<16x128xf32>
    %243 = arith.addf %241, %242 : vector<16x128xf32>
    %cst_323 = arith.constant 0.000000e+00 : f32
    %244 = vector.broadcast %cst_323 : f32 to vector<16x128xf32>
    %245 = arith.maximumf %243, %244 : vector<16x128xf32>
    %246 = arith.truncf %245 : vector<16x128xf32> to vector<16x128xbf16>
    %c8 = arith.constant 8 : index
    %c0_324 = arith.constant 0 : index
    %c0_325 = arith.constant 0 : index
    %247 = vector.load %arg9[%c8, %c0_324, %c0_325] : memref<10x16x128xbf16, #tpu.memory_space<vmem>>, vector<1x16x128xbf16>
    %248 = vector.shape_cast %247 : vector<1x16x128xbf16> to vector<16x128xbf16>
    %249 = vector.shape_cast %246 : vector<16x128xbf16> to vector<1x16x128xbf16>
    tpu.vector_store %arg9[%c8, %c0_324, %c0_325], %249 {strides = array<i32>} : memref<10x16x128xbf16, #tpu.memory_space<vmem>>, vector<1x16x128xbf16>,
    %c0_326 = arith.constant 0 : index
    %c0_327 = arith.constant 0 : index
    %250 = vector.load %arg5[%c0_326, %c0_327] : memref<8x48xbf16, #tpu.memory_space<vmem>>, vector<8x48xbf16>
    %c0_328 = arith.constant 0 : index
    %c0_329 = arith.constant 0 : index
    %251 = vector.load %arg6[%c0_328, %c0_329] : memref<8x1xf32, #tpu.memory_space<vmem>>, vector<8x1xf32>
    %c0_330 = arith.constant 0 : index
    %c0_331 = arith.constant 0 : index
    %252 = vector.load %arg7[%c0_330, %c0_331] : memref<8x1xf32, #tpu.memory_space<vmem>>, vector<8x1xf32>
    %c0_332 = arith.constant 0 : index
    %c0_333 = arith.constant 0 : index
    %c0_334 = arith.constant 0 : index
    %253 = vector.load %arg9[%c0_332, %c0_333, %c0_334] : memref<10x16x128xbf16, #tpu.memory_space<vmem>>, vector<1x16x128xbf16>
    %254 = vector.shape_cast %253 : vector<1x16x128xbf16> to vector<16x128xbf16>
    %c1_335 = arith.constant 1 : index
    %c0_336 = arith.constant 0 : index
    %c0_337 = arith.constant 0 : index
    %255 = vector.load %arg9[%c1_335, %c0_336, %c0_337] : memref<10x16x128xbf16, #tpu.memory_space<vmem>>, vector<1x16x128xbf16>
    %256 = vector.shape_cast %255 : vector<1x16x128xbf16> to vector<16x128xbf16>
    %c2_338 = arith.constant 2 : index
    %c0_339 = arith.constant 0 : index
    %c0_340 = arith.constant 0 : index
    %257 = vector.load %arg9[%c2_338, %c0_339, %c0_340] : memref<10x16x128xbf16, #tpu.memory_space<vmem>>, vector<1x16x128xbf16>
    %258 = vector.shape_cast %257 : vector<1x16x128xbf16> to vector<16x128xbf16>
    %259 = tpu.concatenate %254, %256, %258 in 0 : vector<16x128xbf16>, vector<16x128xbf16>, vector<16x128xbf16> -> vector<48x128xbf16>
    %cst_341 = arith.constant dense<0.000000e+00> : vector<8x128xf32>
    %260 = tpu.matmul %250, %259, %cst_341 {dimension_numbers = #tpu.dot_dimension_numbers<[1], [0], [0], [1], [0, 0, 1, 1], [], []>} : vector<8x48xbf16>, vector<48x128xbf16>, vector<8x128xf32> -> vector<8x128xf32>
    %261 = vector.broadcast %251 : vector<8x1xf32> to vector<8x128xf32>
    %262 = arith.mulf %260, %261 : vector<8x128xf32>
    %263 = vector.broadcast %252 : vector<8x1xf32> to vector<8x128xf32>
    %264 = arith.addf %262, %263 : vector<8x128xf32>
    %cst_342 = arith.constant 0.000000e+00 : f32
    %265 = vector.broadcast %cst_342 : f32 to vector<8x128xf32>
    %266 = arith.maximumf %264, %265 : vector<8x128xf32>
    %c0_343 = arith.constant 0 : index
    %c0_344 = arith.constant 0 : index
    %c0_345 = arith.constant 0 : index
    %c0_346 = arith.constant 0 : index
    %267 = vector.load %arg8[%c0_343, %c0_344, %c0_345, %c0_346] : memref<1x4x8x128xf32, #tpu.memory_space<vmem>>, vector<1x1x8x128xf32>
    %268 = vector.shape_cast %267 : vector<1x1x8x128xf32> to vector<8x128xf32>
    %269 = vector.shape_cast %266 : vector<8x128xf32> to vector<1x1x8x128xf32>
    tpu.vector_store %arg8[%c0_343, %c0_344, %c0_345, %c0_346], %269 {strides = array<i32>} : memref<1x4x8x128xf32, #tpu.memory_space<vmem>>, vector<1x1x8x128xf32>,
    %c2_347 = arith.constant 2 : index
    %c0_348 = arith.constant 0 : index
    %c0_349 = arith.constant 0 : index
    %270 = vector.load %arg9[%c2_347, %c0_348, %c0_349] : memref<10x16x128xbf16, #tpu.memory_space<vmem>>, vector<1x16x128xbf16>
    %271 = vector.shape_cast %270 : vector<1x16x128xbf16> to vector<16x128xbf16>
    %c3_350 = arith.constant 3 : index
    %c0_351 = arith.constant 0 : index
    %c0_352 = arith.constant 0 : index
    %272 = vector.load %arg9[%c3_350, %c0_351, %c0_352] : memref<10x16x128xbf16, #tpu.memory_space<vmem>>, vector<1x16x128xbf16>
    %273 = vector.shape_cast %272 : vector<1x16x128xbf16> to vector<16x128xbf16>
    %c4_353 = arith.constant 4 : index
    %c0_354 = arith.constant 0 : index
    %c0_355 = arith.constant 0 : index
    %274 = vector.load %arg9[%c4_353, %c0_354, %c0_355] : memref<10x16x128xbf16, #tpu.memory_space<vmem>>, vector<1x16x128xbf16>
    %275 = vector.shape_cast %274 : vector<1x16x128xbf16> to vector<16x128xbf16>
    %276 = tpu.concatenate %271, %273, %275 in 0 : vector<16x128xbf16>, vector<16x128xbf16>, vector<16x128xbf16> -> vector<48x128xbf16>
    %cst_356 = arith.constant dense<0.000000e+00> : vector<8x128xf32>
    %277 = tpu.matmul %250, %276, %cst_356 {dimension_numbers = #tpu.dot_dimension_numbers<[1], [0], [0], [1], [0, 0, 1, 1], [], []>} : vector<8x48xbf16>, vector<48x128xbf16>, vector<8x128xf32> -> vector<8x128xf32>
    %278 = vector.broadcast %251 : vector<8x1xf32> to vector<8x128xf32>
    %279 = arith.mulf %277, %278 : vector<8x128xf32>
    %280 = vector.broadcast %252 : vector<8x1xf32> to vector<8x128xf32>
    %281 = arith.addf %279, %280 : vector<8x128xf32>
    %cst_357 = arith.constant 0.000000e+00 : f32
    %282 = vector.broadcast %cst_357 : f32 to vector<8x128xf32>
    %283 = arith.maximumf %281, %282 : vector<8x128xf32>
    %c0_358 = arith.constant 0 : index
    %c1_359 = arith.constant 1 : index
    %c0_360 = arith.constant 0 : index
    %c0_361 = arith.constant 0 : index
    %284 = vector.load %arg8[%c0_358, %c1_359, %c0_360, %c0_361] : memref<1x4x8x128xf32, #tpu.memory_space<vmem>>, vector<1x1x8x128xf32>
    %285 = vector.shape_cast %284 : vector<1x1x8x128xf32> to vector<8x128xf32>
    %286 = vector.shape_cast %283 : vector<8x128xf32> to vector<1x1x8x128xf32>
    tpu.vector_store %arg8[%c0_358, %c1_359, %c0_360, %c0_361], %286 {strides = array<i32>} : memref<1x4x8x128xf32, #tpu.memory_space<vmem>>, vector<1x1x8x128xf32>,
    %c4_362 = arith.constant 4 : index
    %c0_363 = arith.constant 0 : index
    %c0_364 = arith.constant 0 : index
    %287 = vector.load %arg9[%c4_362, %c0_363, %c0_364] : memref<10x16x128xbf16, #tpu.memory_space<vmem>>, vector<1x16x128xbf16>
    %288 = vector.shape_cast %287 : vector<1x16x128xbf16> to vector<16x128xbf16>
    %c5_365 = arith.constant 5 : index
    %c0_366 = arith.constant 0 : index
    %c0_367 = arith.constant 0 : index
    %289 = vector.load %arg9[%c5_365, %c0_366, %c0_367] : memref<10x16x128xbf16, #tpu.memory_space<vmem>>, vector<1x16x128xbf16>
    %290 = vector.shape_cast %289 : vector<1x16x128xbf16> to vector<16x128xbf16>
    %c6_368 = arith.constant 6 : index
    %c0_369 = arith.constant 0 : index
    %c0_370 = arith.constant 0 : index
    %291 = vector.load %arg9[%c6_368, %c0_369, %c0_370] : memref<10x16x128xbf16, #tpu.memory_space<vmem>>, vector<1x16x128xbf16>
    %292 = vector.shape_cast %291 : vector<1x16x128xbf16> to vector<16x128xbf16>
    %293 = tpu.concatenate %288, %290, %292 in 0 : vector<16x128xbf16>, vector<16x128xbf16>, vector<16x128xbf16> -> vector<48x128xbf16>
    %cst_371 = arith.constant dense<0.000000e+00> : vector<8x128xf32>
    %294 = tpu.matmul %250, %293, %cst_371 {dimension_numbers = #tpu.dot_dimension_numbers<[1], [0], [0], [1], [0, 0, 1, 1], [], []>} : vector<8x48xbf16>, vector<48x128xbf16>, vector<8x128xf32> -> vector<8x128xf32>
    %295 = vector.broadcast %251 : vector<8x1xf32> to vector<8x128xf32>
    %296 = arith.mulf %294, %295 : vector<8x128xf32>
    %297 = vector.broadcast %252 : vector<8x1xf32> to vector<8x128xf32>
    %298 = arith.addf %296, %297 : vector<8x128xf32>
    %cst_372 = arith.constant 0.000000e+00 : f32
    %299 = vector.broadcast %cst_372 : f32 to vector<8x128xf32>
    %300 = arith.maximumf %298, %299 : vector<8x128xf32>
    %c0_373 = arith.constant 0 : index
    %c2_374 = arith.constant 2 : index
    %c0_375 = arith.constant 0 : index
    %c0_376 = arith.constant 0 : index
    %301 = vector.load %arg8[%c0_373, %c2_374, %c0_375, %c0_376] : memref<1x4x8x128xf32, #tpu.memory_space<vmem>>, vector<1x1x8x128xf32>
    %302 = vector.shape_cast %301 : vector<1x1x8x128xf32> to vector<8x128xf32>
    %303 = vector.shape_cast %300 : vector<8x128xf32> to vector<1x1x8x128xf32>
    tpu.vector_store %arg8[%c0_373, %c2_374, %c0_375, %c0_376], %303 {strides = array<i32>} : memref<1x4x8x128xf32, #tpu.memory_space<vmem>>, vector<1x1x8x128xf32>,
    %c6_377 = arith.constant 6 : index
    %c0_378 = arith.constant 0 : index
    %c0_379 = arith.constant 0 : index
    %304 = vector.load %arg9[%c6_377, %c0_378, %c0_379] : memref<10x16x128xbf16, #tpu.memory_space<vmem>>, vector<1x16x128xbf16>
    %305 = vector.shape_cast %304 : vector<1x16x128xbf16> to vector<16x128xbf16>
    %c7_380 = arith.constant 7 : index
    %c0_381 = arith.constant 0 : index
    %c0_382 = arith.constant 0 : index
    %306 = vector.load %arg9[%c7_380, %c0_381, %c0_382] : memref<10x16x128xbf16, #tpu.memory_space<vmem>>, vector<1x16x128xbf16>
    %307 = vector.shape_cast %306 : vector<1x16x128xbf16> to vector<16x128xbf16>
    %c8_383 = arith.constant 8 : index
    %c0_384 = arith.constant 0 : index
    %c0_385 = arith.constant 0 : index
    %308 = vector.load %arg9[%c8_383, %c0_384, %c0_385] : memref<10x16x128xbf16, #tpu.memory_space<vmem>>, vector<1x16x128xbf16>
    %309 = vector.shape_cast %308 : vector<1x16x128xbf16> to vector<16x128xbf16>
    %310 = tpu.concatenate %305, %307, %309 in 0 : vector<16x128xbf16>, vector<16x128xbf16>, vector<16x128xbf16> -> vector<48x128xbf16>
    %cst_386 = arith.constant dense<0.000000e+00> : vector<8x128xf32>
    %311 = tpu.matmul %250, %310, %cst_386 {dimension_numbers = #tpu.dot_dimension_numbers<[1], [0], [0], [1], [0, 0, 1, 1], [], []>} : vector<8x48xbf16>, vector<48x128xbf16>, vector<8x128xf32> -> vector<8x128xf32>
    %312 = vector.broadcast %251 : vector<8x1xf32> to vector<8x128xf32>
    %313 = arith.mulf %311, %312 : vector<8x128xf32>
    %314 = vector.broadcast %252 : vector<8x1xf32> to vector<8x128xf32>
    %315 = arith.addf %313, %314 : vector<8x128xf32>
    %cst_387 = arith.constant 0.000000e+00 : f32
    %316 = vector.broadcast %cst_387 : f32 to vector<8x128xf32>
    %317 = arith.maximumf %315, %316 : vector<8x128xf32>
    %c0_388 = arith.constant 0 : index
    %c3_389 = arith.constant 3 : index
    %c0_390 = arith.constant 0 : index
    %c0_391 = arith.constant 0 : index
    %318 = vector.load %arg8[%c0_388, %c3_389, %c0_390, %c0_391] : memref<1x4x8x128xf32, #tpu.memory_space<vmem>>, vector<1x1x8x128xf32>
    %319 = vector.shape_cast %318 : vector<1x1x8x128xf32> to vector<8x128xf32>
    %320 = vector.shape_cast %317 : vector<8x128xf32> to vector<1x1x8x128xf32>
    tpu.vector_store %arg8[%c0_388, %c3_389, %c0_390, %c0_391], %320 {strides = array<i32>} : memref<1x4x8x128xf32, #tpu.memory_space<vmem>>, vector<1x1x8x128xf32>,
    return
  }
  func.func @transform_0(%arg0: i32) -> (i32, i32, i32, i32) {
    %c0_i32 = arith.constant 0 : i32
    %c0_i32_0 = arith.constant 0 : i32
    %c0_i32_1 = arith.constant 0 : i32
    %c0_i32_2 = arith.constant 0 : i32
    return %arg0, %c0_i32, %c0_i32_0, %c0_i32_1 : i32, i32, i32, i32
  }
  func.func @transform_1(%arg0: i32) -> (i32, i32) {
    %c0_i32 = arith.constant 0 : i32
    %c0_i32_0 = arith.constant 0 : i32
    %c0_i32_1 = arith.constant 0 : i32
    return %c0_i32, %c0_i32_0 : i32, i32
  }
  func.func @transform_2(%arg0: i32) -> (i32, i32) {
    %c0_i32 = arith.constant 0 : i32
    %c0_i32_0 = arith.constant 0 : i32
    %c0_i32_1 = arith.constant 0 : i32
    return %c0_i32, %c0_i32_0 : i32, i32
  }
  func.func @transform_3(%arg0: i32) -> (i32, i32) {
    %c0_i32 = arith.constant 0 : i32
    %c0_i32_0 = arith.constant 0 : i32
    %c0_i32_1 = arith.constant 0 : i32
    return %c0_i32, %c0_i32_0 : i32, i32
  }
  func.func @transform_4(%arg0: i32) -> (i32, i32) {
    %c0_i32 = arith.constant 0 : i32
    %c0_i32_0 = arith.constant 0 : i32
    %c0_i32_1 = arith.constant 0 : i32
    return %c0_i32, %c0_i32_0 : i32, i32
  }
  func.func @transform_5(%arg0: i32) -> (i32, i32) {
    %c0_i32 = arith.constant 0 : i32
    %c0_i32_0 = arith.constant 0 : i32
    %c0_i32_1 = arith.constant 0 : i32
    return %c0_i32, %c0_i32_0 : i32, i32
  }
  func.func @transform_6(%arg0: i32) -> (i32, i32) {
    %c0_i32 = arith.constant 0 : i32
    %c0_i32_0 = arith.constant 0 : i32
    %c0_i32_1 = arith.constant 0 : i32
    return %c0_i32, %c0_i32_0 : i32, i32
  }
  func.func @transform_7(%arg0: i32) -> (i32, i32, i32, i32) {
    %c0_i32 = arith.constant 0 : i32
    %c0_i32_0 = arith.constant 0 : i32
    %c0_i32_1 = arith.constant 0 : i32
    %c0_i32_2 = arith.constant 0 : i32
    return %arg0, %c0_i32, %c0_i32_0, %c0_i32_1 : i32, i32, i32, i32
  }
}

module attributes {stable_mosaic.version = 11 : i64} {
  func.func @_st_conv_kernel(%arg0: i32, %arg1: memref<1x4x16x256xbf16, #tpu.memory_space<vmem>>, %arg2: memref<32x144xbf16, #tpu.memory_space<vmem>>, %arg3: memref<32x1xf32, #tpu.memory_space<vmem>>, %arg4: memref<32x1xf32, #tpu.memory_space<vmem>>, %arg5: memref<8x96xbf16, #tpu.memory_space<vmem>>, %arg6: memref<8x1xf32, #tpu.memory_space<vmem>>, %arg7: memref<8x1xf32, #tpu.memory_space<vmem>>, %arg8: memref<1x4x8x128xf32, #tpu.memory_space<vmem>>, %arg9: memref<1x4x8x128xf32, #tpu.memory_space<vmem>>, %arg10: memref<6x32x128xbf16, #tpu.memory_space<vmem>>) attributes {dimension_semantics = [#tpu.dimension_semantics<parallel>], iteration_bounds = array<i64: 2>, scalar_prefetch = 0 : i64, scratch_operands = 1 : i64, tpu.core_type = #tpu.core_type<tc>, window_params = [{transform_indices = @transform_0, window_bounds = array<i64: 1, 4, 16, 256>}, {pipeline_mode = #tpu.pipeline_mode<synchronous>, transform_indices = @transform_1, window_bounds = array<i64: 32, 144>}, {pipeline_mode = #tpu.pipeline_mode<synchronous>, transform_indices = @transform_2, window_bounds = array<i64: 32, 1>}, {pipeline_mode = #tpu.pipeline_mode<synchronous>, transform_indices = @transform_3, window_bounds = array<i64: 32, 1>}, {pipeline_mode = #tpu.pipeline_mode<synchronous>, transform_indices = @transform_4, window_bounds = array<i64: 8, 96>}, {pipeline_mode = #tpu.pipeline_mode<synchronous>, transform_indices = @transform_5, window_bounds = array<i64: 8, 1>}, {pipeline_mode = #tpu.pipeline_mode<synchronous>, transform_indices = @transform_6, window_bounds = array<i64: 8, 1>}, {transform_indices = @transform_7, window_bounds = array<i64: 1, 4, 8, 128>}, {transform_indices = @transform_8, window_bounds = array<i64: 1, 4, 8, 128>}]} {
    %c0 = arith.constant 0 : index
    %c0_0 = arith.constant 0 : index
    %0 = vector.load %arg2[%c0, %c0_0] : memref<32x144xbf16, #tpu.memory_space<vmem>>, vector<32x144xbf16>
    %c0_1 = arith.constant 0 : index
    %c0_2 = arith.constant 0 : index
    %1 = vector.load %arg3[%c0_1, %c0_2] : memref<32x1xf32, #tpu.memory_space<vmem>>, vector<32x1xf32>
    %c0_3 = arith.constant 0 : index
    %c0_4 = arith.constant 0 : index
    %2 = vector.load %arg4[%c0_3, %c0_4] : memref<32x1xf32, #tpu.memory_space<vmem>>, vector<32x1xf32>
    %cst = arith.constant 0.000000e+00 : bf16
    %3 = vector.broadcast %cst : bf16 to vector<32x128xbf16>
    %c0_5 = arith.constant 0 : index
    %c0_6 = arith.constant 0 : index
    %c0_7 = arith.constant 0 : index
    %4 = vector.load %arg10[%c0_5, %c0_6, %c0_7] : memref<6x32x128xbf16, #tpu.memory_space<vmem>>, vector<1x32x128xbf16>
    %5 = vector.shape_cast %4 : vector<1x32x128xbf16> to vector<32x128xbf16>
    %6 = vector.shape_cast %3 : vector<32x128xbf16> to vector<1x32x128xbf16>
    tpu.vector_store %arg10[%c0_5, %c0_6, %c0_7], %6 {strides = array<i32>} : memref<6x32x128xbf16, #tpu.memory_space<vmem>>, vector<1x32x128xbf16>,
    %c5 = arith.constant 5 : index
    %c0_8 = arith.constant 0 : index
    %c0_9 = arith.constant 0 : index
    %7 = vector.load %arg10[%c5, %c0_8, %c0_9] : memref<6x32x128xbf16, #tpu.memory_space<vmem>>, vector<1x32x128xbf16>
    %8 = vector.shape_cast %7 : vector<1x32x128xbf16> to vector<32x128xbf16>
    %9 = vector.shape_cast %3 : vector<32x128xbf16> to vector<1x32x128xbf16>
    tpu.vector_store %arg10[%c5, %c0_8, %c0_9], %9 {strides = array<i32>} : memref<6x32x128xbf16, #tpu.memory_space<vmem>>, vector<1x32x128xbf16>,
    %c0_10 = arith.constant 0 : index
    %c0_11 = arith.constant 0 : index
    %c0_12 = arith.constant 0 : index
    %c0_13 = arith.constant 0 : index
    %10 = vector.load %arg1[%c0_10, %c0_11, %c0_12, %c0_13] : memref<1x4x16x256xbf16, #tpu.memory_space<vmem>>, vector<1x1x16x128xbf16>
    %11 = vector.shape_cast %10 : vector<1x1x16x128xbf16> to vector<16x128xbf16>
    %c0_14 = arith.constant 0 : index
    %c0_15 = arith.constant 0 : index
    %c0_16 = arith.constant 0 : index
    %c1 = arith.constant 1 : index
    %12 = vector.load %arg1[%c0_14, %c0_15, %c0_16, %c1] : memref<1x4x16x256xbf16, #tpu.memory_space<vmem>>, vector<1x1x16x128xbf16>
    %13 = vector.shape_cast %12 : vector<1x1x16x128xbf16> to vector<16x128xbf16>
    %c0_17 = arith.constant 0 : index
    %c0_18 = arith.constant 0 : index
    %c0_19 = arith.constant 0 : index
    %c2 = arith.constant 2 : index
    %14 = vector.load %arg1[%c0_17, %c0_18, %c0_19, %c2] : memref<1x4x16x256xbf16, #tpu.memory_space<vmem>>, vector<1x1x16x128xbf16>
    %15 = vector.shape_cast %14 : vector<1x1x16x128xbf16> to vector<16x128xbf16>
    %c0_20 = arith.constant 0 : index
    %c0_21 = arith.constant 0 : index
    %c0_22 = arith.constant 0 : index
    %c10 = arith.constant 10 : index
    %16 = vector.load %arg1[%c0_20, %c0_21, %c0_22, %c10] : memref<1x4x16x256xbf16, #tpu.memory_space<vmem>>, vector<1x1x16x128xbf16>
    %17 = vector.shape_cast %16 : vector<1x1x16x128xbf16> to vector<16x128xbf16>
    %c0_23 = arith.constant 0 : index
    %c0_24 = arith.constant 0 : index
    %c0_25 = arith.constant 0 : index
    %c11 = arith.constant 11 : index
    %18 = vector.load %arg1[%c0_23, %c0_24, %c0_25, %c11] : memref<1x4x16x256xbf16, #tpu.memory_space<vmem>>, vector<1x1x16x128xbf16>
    %19 = vector.shape_cast %18 : vector<1x1x16x128xbf16> to vector<16x128xbf16>
    %c0_26 = arith.constant 0 : index
    %c0_27 = arith.constant 0 : index
    %c0_28 = arith.constant 0 : index
    %c12 = arith.constant 12 : index
    %20 = vector.load %arg1[%c0_26, %c0_27, %c0_28, %c12] : memref<1x4x16x256xbf16, #tpu.memory_space<vmem>>, vector<1x1x16x128xbf16>
    %21 = vector.shape_cast %20 : vector<1x1x16x128xbf16> to vector<16x128xbf16>
    %c0_29 = arith.constant 0 : index
    %c0_30 = arith.constant 0 : index
    %c0_31 = arith.constant 0 : index
    %c20 = arith.constant 20 : index
    %22 = vector.load %arg1[%c0_29, %c0_30, %c0_31, %c20] : memref<1x4x16x256xbf16, #tpu.memory_space<vmem>>, vector<1x1x16x128xbf16>
    %23 = vector.shape_cast %22 : vector<1x1x16x128xbf16> to vector<16x128xbf16>
    %c0_32 = arith.constant 0 : index
    %c0_33 = arith.constant 0 : index
    %c0_34 = arith.constant 0 : index
    %c21 = arith.constant 21 : index
    %24 = vector.load %arg1[%c0_32, %c0_33, %c0_34, %c21] : memref<1x4x16x256xbf16, #tpu.memory_space<vmem>>, vector<1x1x16x128xbf16>
    %25 = vector.shape_cast %24 : vector<1x1x16x128xbf16> to vector<16x128xbf16>
    %c0_35 = arith.constant 0 : index
    %c0_36 = arith.constant 0 : index
    %c0_37 = arith.constant 0 : index
    %c22 = arith.constant 22 : index
    %26 = vector.load %arg1[%c0_35, %c0_36, %c0_37, %c22] : memref<1x4x16x256xbf16, #tpu.memory_space<vmem>>, vector<1x1x16x128xbf16>
    %27 = vector.shape_cast %26 : vector<1x1x16x128xbf16> to vector<16x128xbf16>
    %28 = tpu.concatenate %11, %13, %15, %17, %19, %21, %23, %25, %27 in 0 : vector<16x128xbf16>, vector<16x128xbf16>, vector<16x128xbf16>, vector<16x128xbf16>, vector<16x128xbf16>, vector<16x128xbf16>, vector<16x128xbf16>, vector<16x128xbf16>, vector<16x128xbf16> -> vector<144x128xbf16>
    %cst_38 = arith.constant dense<0.000000e+00> : vector<32x128xf32>
    %29 = tpu.matmul %0, %28, %cst_38 {dimension_numbers = #tpu.dot_dimension_numbers<[1], [0], [0], [1], [0, 0, 1, 1], [], []>} : vector<32x144xbf16>, vector<144x128xbf16>, vector<32x128xf32> -> vector<32x128xf32>
    %30 = vector.broadcast %1 : vector<32x1xf32> to vector<32x128xf32>
    %31 = arith.mulf %29, %30 : vector<32x128xf32>
    %32 = vector.broadcast %2 : vector<32x1xf32> to vector<32x128xf32>
    %33 = arith.addf %31, %32 : vector<32x128xf32>
    %cst_39 = arith.constant 0.000000e+00 : f32
    %34 = vector.broadcast %cst_39 : f32 to vector<32x128xf32>
    %35 = arith.maximumf %33, %34 : vector<32x128xf32>
    %36 = arith.truncf %35 : vector<32x128xf32> to vector<32x128xbf16>
    %c1_40 = arith.constant 1 : index
    %c0_41 = arith.constant 0 : index
    %c0_42 = arith.constant 0 : index
    %37 = vector.load %arg10[%c1_40, %c0_41, %c0_42] : memref<6x32x128xbf16, #tpu.memory_space<vmem>>, vector<1x32x128xbf16>
    %38 = vector.shape_cast %37 : vector<1x32x128xbf16> to vector<32x128xbf16>
    %39 = vector.shape_cast %36 : vector<32x128xbf16> to vector<1x32x128xbf16>
    tpu.vector_store %arg10[%c1_40, %c0_41, %c0_42], %39 {strides = array<i32>} : memref<6x32x128xbf16, #tpu.memory_space<vmem>>, vector<1x32x128xbf16>,
    %c0_43 = arith.constant 0 : index
    %c1_44 = arith.constant 1 : index
    %c0_45 = arith.constant 0 : index
    %c0_46 = arith.constant 0 : index
    %40 = vector.load %arg1[%c0_43, %c1_44, %c0_45, %c0_46] : memref<1x4x16x256xbf16, #tpu.memory_space<vmem>>, vector<1x1x16x128xbf16>
    %41 = vector.shape_cast %40 : vector<1x1x16x128xbf16> to vector<16x128xbf16>
    %c0_47 = arith.constant 0 : index
    %c1_48 = arith.constant 1 : index
    %c0_49 = arith.constant 0 : index
    %c1_50 = arith.constant 1 : index
    %42 = vector.load %arg1[%c0_47, %c1_48, %c0_49, %c1_50] : memref<1x4x16x256xbf16, #tpu.memory_space<vmem>>, vector<1x1x16x128xbf16>
    %43 = vector.shape_cast %42 : vector<1x1x16x128xbf16> to vector<16x128xbf16>
    %c0_51 = arith.constant 0 : index
    %c1_52 = arith.constant 1 : index
    %c0_53 = arith.constant 0 : index
    %c2_54 = arith.constant 2 : index
    %44 = vector.load %arg1[%c0_51, %c1_52, %c0_53, %c2_54] : memref<1x4x16x256xbf16, #tpu.memory_space<vmem>>, vector<1x1x16x128xbf16>
    %45 = vector.shape_cast %44 : vector<1x1x16x128xbf16> to vector<16x128xbf16>
    %c0_55 = arith.constant 0 : index
    %c1_56 = arith.constant 1 : index
    %c0_57 = arith.constant 0 : index
    %c10_58 = arith.constant 10 : index
    %46 = vector.load %arg1[%c0_55, %c1_56, %c0_57, %c10_58] : memref<1x4x16x256xbf16, #tpu.memory_space<vmem>>, vector<1x1x16x128xbf16>
    %47 = vector.shape_cast %46 : vector<1x1x16x128xbf16> to vector<16x128xbf16>
    %c0_59 = arith.constant 0 : index
    %c1_60 = arith.constant 1 : index
    %c0_61 = arith.constant 0 : index
    %c11_62 = arith.constant 11 : index
    %48 = vector.load %arg1[%c0_59, %c1_60, %c0_61, %c11_62] : memref<1x4x16x256xbf16, #tpu.memory_space<vmem>>, vector<1x1x16x128xbf16>
    %49 = vector.shape_cast %48 : vector<1x1x16x128xbf16> to vector<16x128xbf16>
    %c0_63 = arith.constant 0 : index
    %c1_64 = arith.constant 1 : index
    %c0_65 = arith.constant 0 : index
    %c12_66 = arith.constant 12 : index
    %50 = vector.load %arg1[%c0_63, %c1_64, %c0_65, %c12_66] : memref<1x4x16x256xbf16, #tpu.memory_space<vmem>>, vector<1x1x16x128xbf16>
    %51 = vector.shape_cast %50 : vector<1x1x16x128xbf16> to vector<16x128xbf16>
    %c0_67 = arith.constant 0 : index
    %c1_68 = arith.constant 1 : index
    %c0_69 = arith.constant 0 : index
    %c20_70 = arith.constant 20 : index
    %52 = vector.load %arg1[%c0_67, %c1_68, %c0_69, %c20_70] : memref<1x4x16x256xbf16, #tpu.memory_space<vmem>>, vector<1x1x16x128xbf16>
    %53 = vector.shape_cast %52 : vector<1x1x16x128xbf16> to vector<16x128xbf16>
    %c0_71 = arith.constant 0 : index
    %c1_72 = arith.constant 1 : index
    %c0_73 = arith.constant 0 : index
    %c21_74 = arith.constant 21 : index
    %54 = vector.load %arg1[%c0_71, %c1_72, %c0_73, %c21_74] : memref<1x4x16x256xbf16, #tpu.memory_space<vmem>>, vector<1x1x16x128xbf16>
    %55 = vector.shape_cast %54 : vector<1x1x16x128xbf16> to vector<16x128xbf16>
    %c0_75 = arith.constant 0 : index
    %c1_76 = arith.constant 1 : index
    %c0_77 = arith.constant 0 : index
    %c22_78 = arith.constant 22 : index
    %56 = vector.load %arg1[%c0_75, %c1_76, %c0_77, %c22_78] : memref<1x4x16x256xbf16, #tpu.memory_space<vmem>>, vector<1x1x16x128xbf16>
    %57 = vector.shape_cast %56 : vector<1x1x16x128xbf16> to vector<16x128xbf16>
    %58 = tpu.concatenate %41, %43, %45, %47, %49, %51, %53, %55, %57 in 0 : vector<16x128xbf16>, vector<16x128xbf16>, vector<16x128xbf16>, vector<16x128xbf16>, vector<16x128xbf16>, vector<16x128xbf16>, vector<16x128xbf16>, vector<16x128xbf16>, vector<16x128xbf16> -> vector<144x128xbf16>
    %cst_79 = arith.constant dense<0.000000e+00> : vector<32x128xf32>
    %59 = tpu.matmul %0, %58, %cst_79 {dimension_numbers = #tpu.dot_dimension_numbers<[1], [0], [0], [1], [0, 0, 1, 1], [], []>} : vector<32x144xbf16>, vector<144x128xbf16>, vector<32x128xf32> -> vector<32x128xf32>
    %60 = vector.broadcast %1 : vector<32x1xf32> to vector<32x128xf32>
    %61 = arith.mulf %59, %60 : vector<32x128xf32>
    %62 = vector.broadcast %2 : vector<32x1xf32> to vector<32x128xf32>
    %63 = arith.addf %61, %62 : vector<32x128xf32>
    %cst_80 = arith.constant 0.000000e+00 : f32
    %64 = vector.broadcast %cst_80 : f32 to vector<32x128xf32>
    %65 = arith.maximumf %63, %64 : vector<32x128xf32>
    %66 = arith.truncf %65 : vector<32x128xf32> to vector<32x128xbf16>
    %c2_81 = arith.constant 2 : index
    %c0_82 = arith.constant 0 : index
    %c0_83 = arith.constant 0 : index
    %67 = vector.load %arg10[%c2_81, %c0_82, %c0_83] : memref<6x32x128xbf16, #tpu.memory_space<vmem>>, vector<1x32x128xbf16>
    %68 = vector.shape_cast %67 : vector<1x32x128xbf16> to vector<32x128xbf16>
    %69 = vector.shape_cast %66 : vector<32x128xbf16> to vector<1x32x128xbf16>
    tpu.vector_store %arg10[%c2_81, %c0_82, %c0_83], %69 {strides = array<i32>} : memref<6x32x128xbf16, #tpu.memory_space<vmem>>, vector<1x32x128xbf16>,
    %c0_84 = arith.constant 0 : index
    %c2_85 = arith.constant 2 : index
    %c0_86 = arith.constant 0 : index
    %c0_87 = arith.constant 0 : index
    %70 = vector.load %arg1[%c0_84, %c2_85, %c0_86, %c0_87] : memref<1x4x16x256xbf16, #tpu.memory_space<vmem>>, vector<1x1x16x128xbf16>
    %71 = vector.shape_cast %70 : vector<1x1x16x128xbf16> to vector<16x128xbf16>
    %c0_88 = arith.constant 0 : index
    %c2_89 = arith.constant 2 : index
    %c0_90 = arith.constant 0 : index
    %c1_91 = arith.constant 1 : index
    %72 = vector.load %arg1[%c0_88, %c2_89, %c0_90, %c1_91] : memref<1x4x16x256xbf16, #tpu.memory_space<vmem>>, vector<1x1x16x128xbf16>
    %73 = vector.shape_cast %72 : vector<1x1x16x128xbf16> to vector<16x128xbf16>
    %c0_92 = arith.constant 0 : index
    %c2_93 = arith.constant 2 : index
    %c0_94 = arith.constant 0 : index
    %c2_95 = arith.constant 2 : index
    %74 = vector.load %arg1[%c0_92, %c2_93, %c0_94, %c2_95] : memref<1x4x16x256xbf16, #tpu.memory_space<vmem>>, vector<1x1x16x128xbf16>
    %75 = vector.shape_cast %74 : vector<1x1x16x128xbf16> to vector<16x128xbf16>
    %c0_96 = arith.constant 0 : index
    %c2_97 = arith.constant 2 : index
    %c0_98 = arith.constant 0 : index
    %c10_99 = arith.constant 10 : index
    %76 = vector.load %arg1[%c0_96, %c2_97, %c0_98, %c10_99] : memref<1x4x16x256xbf16, #tpu.memory_space<vmem>>, vector<1x1x16x128xbf16>
    %77 = vector.shape_cast %76 : vector<1x1x16x128xbf16> to vector<16x128xbf16>
    %c0_100 = arith.constant 0 : index
    %c2_101 = arith.constant 2 : index
    %c0_102 = arith.constant 0 : index
    %c11_103 = arith.constant 11 : index
    %78 = vector.load %arg1[%c0_100, %c2_101, %c0_102, %c11_103] : memref<1x4x16x256xbf16, #tpu.memory_space<vmem>>, vector<1x1x16x128xbf16>
    %79 = vector.shape_cast %78 : vector<1x1x16x128xbf16> to vector<16x128xbf16>
    %c0_104 = arith.constant 0 : index
    %c2_105 = arith.constant 2 : index
    %c0_106 = arith.constant 0 : index
    %c12_107 = arith.constant 12 : index
    %80 = vector.load %arg1[%c0_104, %c2_105, %c0_106, %c12_107] : memref<1x4x16x256xbf16, #tpu.memory_space<vmem>>, vector<1x1x16x128xbf16>
    %81 = vector.shape_cast %80 : vector<1x1x16x128xbf16> to vector<16x128xbf16>
    %c0_108 = arith.constant 0 : index
    %c2_109 = arith.constant 2 : index
    %c0_110 = arith.constant 0 : index
    %c20_111 = arith.constant 20 : index
    %82 = vector.load %arg1[%c0_108, %c2_109, %c0_110, %c20_111] : memref<1x4x16x256xbf16, #tpu.memory_space<vmem>>, vector<1x1x16x128xbf16>
    %83 = vector.shape_cast %82 : vector<1x1x16x128xbf16> to vector<16x128xbf16>
    %c0_112 = arith.constant 0 : index
    %c2_113 = arith.constant 2 : index
    %c0_114 = arith.constant 0 : index
    %c21_115 = arith.constant 21 : index
    %84 = vector.load %arg1[%c0_112, %c2_113, %c0_114, %c21_115] : memref<1x4x16x256xbf16, #tpu.memory_space<vmem>>, vector<1x1x16x128xbf16>
    %85 = vector.shape_cast %84 : vector<1x1x16x128xbf16> to vector<16x128xbf16>
    %c0_116 = arith.constant 0 : index
    %c2_117 = arith.constant 2 : index
    %c0_118 = arith.constant 0 : index
    %c22_119 = arith.constant 22 : index
    %86 = vector.load %arg1[%c0_116, %c2_117, %c0_118, %c22_119] : memref<1x4x16x256xbf16, #tpu.memory_space<vmem>>, vector<1x1x16x128xbf16>
    %87 = vector.shape_cast %86 : vector<1x1x16x128xbf16> to vector<16x128xbf16>
    %88 = tpu.concatenate %71, %73, %75, %77, %79, %81, %83, %85, %87 in 0 : vector<16x128xbf16>, vector<16x128xbf16>, vector<16x128xbf16>, vector<16x128xbf16>, vector<16x128xbf16>, vector<16x128xbf16>, vector<16x128xbf16>, vector<16x128xbf16>, vector<16x128xbf16> -> vector<144x128xbf16>
    %cst_120 = arith.constant dense<0.000000e+00> : vector<32x128xf32>
    %89 = tpu.matmul %0, %88, %cst_120 {dimension_numbers = #tpu.dot_dimension_numbers<[1], [0], [0], [1], [0, 0, 1, 1], [], []>} : vector<32x144xbf16>, vector<144x128xbf16>, vector<32x128xf32> -> vector<32x128xf32>
    %90 = vector.broadcast %1 : vector<32x1xf32> to vector<32x128xf32>
    %91 = arith.mulf %89, %90 : vector<32x128xf32>
    %92 = vector.broadcast %2 : vector<32x1xf32> to vector<32x128xf32>
    %93 = arith.addf %91, %92 : vector<32x128xf32>
    %cst_121 = arith.constant 0.000000e+00 : f32
    %94 = vector.broadcast %cst_121 : f32 to vector<32x128xf32>
    %95 = arith.maximumf %93, %94 : vector<32x128xf32>
    %96 = arith.truncf %95 : vector<32x128xf32> to vector<32x128xbf16>
    %c3 = arith.constant 3 : index
    %c0_122 = arith.constant 0 : index
    %c0_123 = arith.constant 0 : index
    %97 = vector.load %arg10[%c3, %c0_122, %c0_123] : memref<6x32x128xbf16, #tpu.memory_space<vmem>>, vector<1x32x128xbf16>
    %98 = vector.shape_cast %97 : vector<1x32x128xbf16> to vector<32x128xbf16>
    %99 = vector.shape_cast %96 : vector<32x128xbf16> to vector<1x32x128xbf16>
    tpu.vector_store %arg10[%c3, %c0_122, %c0_123], %99 {strides = array<i32>} : memref<6x32x128xbf16, #tpu.memory_space<vmem>>, vector<1x32x128xbf16>,
    %c0_124 = arith.constant 0 : index
    %c3_125 = arith.constant 3 : index
    %c0_126 = arith.constant 0 : index
    %c0_127 = arith.constant 0 : index
    %100 = vector.load %arg1[%c0_124, %c3_125, %c0_126, %c0_127] : memref<1x4x16x256xbf16, #tpu.memory_space<vmem>>, vector<1x1x16x128xbf16>
    %101 = vector.shape_cast %100 : vector<1x1x16x128xbf16> to vector<16x128xbf16>
    %c0_128 = arith.constant 0 : index
    %c3_129 = arith.constant 3 : index
    %c0_130 = arith.constant 0 : index
    %c1_131 = arith.constant 1 : index
    %102 = vector.load %arg1[%c0_128, %c3_129, %c0_130, %c1_131] : memref<1x4x16x256xbf16, #tpu.memory_space<vmem>>, vector<1x1x16x128xbf16>
    %103 = vector.shape_cast %102 : vector<1x1x16x128xbf16> to vector<16x128xbf16>
    %c0_132 = arith.constant 0 : index
    %c3_133 = arith.constant 3 : index
    %c0_134 = arith.constant 0 : index
    %c2_135 = arith.constant 2 : index
    %104 = vector.load %arg1[%c0_132, %c3_133, %c0_134, %c2_135] : memref<1x4x16x256xbf16, #tpu.memory_space<vmem>>, vector<1x1x16x128xbf16>
    %105 = vector.shape_cast %104 : vector<1x1x16x128xbf16> to vector<16x128xbf16>
    %c0_136 = arith.constant 0 : index
    %c3_137 = arith.constant 3 : index
    %c0_138 = arith.constant 0 : index
    %c10_139 = arith.constant 10 : index
    %106 = vector.load %arg1[%c0_136, %c3_137, %c0_138, %c10_139] : memref<1x4x16x256xbf16, #tpu.memory_space<vmem>>, vector<1x1x16x128xbf16>
    %107 = vector.shape_cast %106 : vector<1x1x16x128xbf16> to vector<16x128xbf16>
    %c0_140 = arith.constant 0 : index
    %c3_141 = arith.constant 3 : index
    %c0_142 = arith.constant 0 : index
    %c11_143 = arith.constant 11 : index
    %108 = vector.load %arg1[%c0_140, %c3_141, %c0_142, %c11_143] : memref<1x4x16x256xbf16, #tpu.memory_space<vmem>>, vector<1x1x16x128xbf16>
    %109 = vector.shape_cast %108 : vector<1x1x16x128xbf16> to vector<16x128xbf16>
    %c0_144 = arith.constant 0 : index
    %c3_145 = arith.constant 3 : index
    %c0_146 = arith.constant 0 : index
    %c12_147 = arith.constant 12 : index
    %110 = vector.load %arg1[%c0_144, %c3_145, %c0_146, %c12_147] : memref<1x4x16x256xbf16, #tpu.memory_space<vmem>>, vector<1x1x16x128xbf16>
    %111 = vector.shape_cast %110 : vector<1x1x16x128xbf16> to vector<16x128xbf16>
    %c0_148 = arith.constant 0 : index
    %c3_149 = arith.constant 3 : index
    %c0_150 = arith.constant 0 : index
    %c20_151 = arith.constant 20 : index
    %112 = vector.load %arg1[%c0_148, %c3_149, %c0_150, %c20_151] : memref<1x4x16x256xbf16, #tpu.memory_space<vmem>>, vector<1x1x16x128xbf16>
    %113 = vector.shape_cast %112 : vector<1x1x16x128xbf16> to vector<16x128xbf16>
    %c0_152 = arith.constant 0 : index
    %c3_153 = arith.constant 3 : index
    %c0_154 = arith.constant 0 : index
    %c21_155 = arith.constant 21 : index
    %114 = vector.load %arg1[%c0_152, %c3_153, %c0_154, %c21_155] : memref<1x4x16x256xbf16, #tpu.memory_space<vmem>>, vector<1x1x16x128xbf16>
    %115 = vector.shape_cast %114 : vector<1x1x16x128xbf16> to vector<16x128xbf16>
    %c0_156 = arith.constant 0 : index
    %c3_157 = arith.constant 3 : index
    %c0_158 = arith.constant 0 : index
    %c22_159 = arith.constant 22 : index
    %116 = vector.load %arg1[%c0_156, %c3_157, %c0_158, %c22_159] : memref<1x4x16x256xbf16, #tpu.memory_space<vmem>>, vector<1x1x16x128xbf16>
    %117 = vector.shape_cast %116 : vector<1x1x16x128xbf16> to vector<16x128xbf16>
    %118 = tpu.concatenate %101, %103, %105, %107, %109, %111, %113, %115, %117 in 0 : vector<16x128xbf16>, vector<16x128xbf16>, vector<16x128xbf16>, vector<16x128xbf16>, vector<16x128xbf16>, vector<16x128xbf16>, vector<16x128xbf16>, vector<16x128xbf16>, vector<16x128xbf16> -> vector<144x128xbf16>
    %cst_160 = arith.constant dense<0.000000e+00> : vector<32x128xf32>
    %119 = tpu.matmul %0, %118, %cst_160 {dimension_numbers = #tpu.dot_dimension_numbers<[1], [0], [0], [1], [0, 0, 1, 1], [], []>} : vector<32x144xbf16>, vector<144x128xbf16>, vector<32x128xf32> -> vector<32x128xf32>
    %120 = vector.broadcast %1 : vector<32x1xf32> to vector<32x128xf32>
    %121 = arith.mulf %119, %120 : vector<32x128xf32>
    %122 = vector.broadcast %2 : vector<32x1xf32> to vector<32x128xf32>
    %123 = arith.addf %121, %122 : vector<32x128xf32>
    %cst_161 = arith.constant 0.000000e+00 : f32
    %124 = vector.broadcast %cst_161 : f32 to vector<32x128xf32>
    %125 = arith.maximumf %123, %124 : vector<32x128xf32>
    %126 = arith.truncf %125 : vector<32x128xf32> to vector<32x128xbf16>
    %c4 = arith.constant 4 : index
    %c0_162 = arith.constant 0 : index
    %c0_163 = arith.constant 0 : index
    %127 = vector.load %arg10[%c4, %c0_162, %c0_163] : memref<6x32x128xbf16, #tpu.memory_space<vmem>>, vector<1x32x128xbf16>
    %128 = vector.shape_cast %127 : vector<1x32x128xbf16> to vector<32x128xbf16>
    %129 = vector.shape_cast %126 : vector<32x128xbf16> to vector<1x32x128xbf16>
    tpu.vector_store %arg10[%c4, %c0_162, %c0_163], %129 {strides = array<i32>} : memref<6x32x128xbf16, #tpu.memory_space<vmem>>, vector<1x32x128xbf16>,
    %c0_164 = arith.constant 0 : index
    %c0_165 = arith.constant 0 : index
    %130 = vector.load %arg5[%c0_164, %c0_165] : memref<8x96xbf16, #tpu.memory_space<vmem>>, vector<8x96xbf16>
    %c0_166 = arith.constant 0 : index
    %c0_167 = arith.constant 0 : index
    %131 = vector.load %arg6[%c0_166, %c0_167] : memref<8x1xf32, #tpu.memory_space<vmem>>, vector<8x1xf32>
    %c0_168 = arith.constant 0 : index
    %c0_169 = arith.constant 0 : index
    %132 = vector.load %arg7[%c0_168, %c0_169] : memref<8x1xf32, #tpu.memory_space<vmem>>, vector<8x1xf32>
    %c0_170 = arith.constant 0 : index
    %c0_171 = arith.constant 0 : index
    %c0_172 = arith.constant 0 : index
    %133 = vector.load %arg10[%c0_170, %c0_171, %c0_172] : memref<6x32x128xbf16, #tpu.memory_space<vmem>>, vector<1x32x128xbf16>
    %134 = vector.shape_cast %133 : vector<1x32x128xbf16> to vector<32x128xbf16>
    %c1_173 = arith.constant 1 : index
    %c0_174 = arith.constant 0 : index
    %c0_175 = arith.constant 0 : index
    %135 = vector.load %arg10[%c1_173, %c0_174, %c0_175] : memref<6x32x128xbf16, #tpu.memory_space<vmem>>, vector<1x32x128xbf16>
    %136 = vector.shape_cast %135 : vector<1x32x128xbf16> to vector<32x128xbf16>
    %c2_176 = arith.constant 2 : index
    %c0_177 = arith.constant 0 : index
    %c0_178 = arith.constant 0 : index
    %137 = vector.load %arg10[%c2_176, %c0_177, %c0_178] : memref<6x32x128xbf16, #tpu.memory_space<vmem>>, vector<1x32x128xbf16>
    %138 = vector.shape_cast %137 : vector<1x32x128xbf16> to vector<32x128xbf16>
    %139 = tpu.concatenate %134, %136, %138 in 0 : vector<32x128xbf16>, vector<32x128xbf16>, vector<32x128xbf16> -> vector<96x128xbf16>
    %cst_179 = arith.constant dense<0.000000e+00> : vector<8x128xf32>
    %140 = tpu.matmul %130, %139, %cst_179 {dimension_numbers = #tpu.dot_dimension_numbers<[1], [0], [0], [1], [0, 0, 1, 1], [], []>} : vector<8x96xbf16>, vector<96x128xbf16>, vector<8x128xf32> -> vector<8x128xf32>
    %141 = vector.broadcast %131 : vector<8x1xf32> to vector<8x128xf32>
    %142 = arith.mulf %140, %141 : vector<8x128xf32>
    %143 = vector.broadcast %132 : vector<8x1xf32> to vector<8x128xf32>
    %144 = arith.addf %142, %143 : vector<8x128xf32>
    %c0_180 = arith.constant 0 : index
    %c0_181 = arith.constant 0 : index
    %c0_182 = arith.constant 0 : index
    %c0_183 = arith.constant 0 : index
    %145 = vector.load %arg8[%c0_180, %c0_181, %c0_182, %c0_183] : memref<1x4x8x128xf32, #tpu.memory_space<vmem>>, vector<1x1x8x128xf32>
    %146 = vector.shape_cast %145 : vector<1x1x8x128xf32> to vector<8x128xf32>
    %147 = arith.addf %144, %146 : vector<8x128xf32>
    %cst_184 = arith.constant 0.000000e+00 : f32
    %148 = vector.broadcast %cst_184 : f32 to vector<8x128xf32>
    %149 = arith.maximumf %147, %148 : vector<8x128xf32>
    %c0_185 = arith.constant 0 : index
    %c0_186 = arith.constant 0 : index
    %c0_187 = arith.constant 0 : index
    %c0_188 = arith.constant 0 : index
    %150 = vector.load %arg9[%c0_185, %c0_186, %c0_187, %c0_188] : memref<1x4x8x128xf32, #tpu.memory_space<vmem>>, vector<1x1x8x128xf32>
    %151 = vector.shape_cast %150 : vector<1x1x8x128xf32> to vector<8x128xf32>
    %152 = vector.shape_cast %149 : vector<8x128xf32> to vector<1x1x8x128xf32>
    tpu.vector_store %arg9[%c0_185, %c0_186, %c0_187, %c0_188], %152 {strides = array<i32>} : memref<1x4x8x128xf32, #tpu.memory_space<vmem>>, vector<1x1x8x128xf32>,
    %c1_189 = arith.constant 1 : index
    %c0_190 = arith.constant 0 : index
    %c0_191 = arith.constant 0 : index
    %153 = vector.load %arg10[%c1_189, %c0_190, %c0_191] : memref<6x32x128xbf16, #tpu.memory_space<vmem>>, vector<1x32x128xbf16>
    %154 = vector.shape_cast %153 : vector<1x32x128xbf16> to vector<32x128xbf16>
    %c2_192 = arith.constant 2 : index
    %c0_193 = arith.constant 0 : index
    %c0_194 = arith.constant 0 : index
    %155 = vector.load %arg10[%c2_192, %c0_193, %c0_194] : memref<6x32x128xbf16, #tpu.memory_space<vmem>>, vector<1x32x128xbf16>
    %156 = vector.shape_cast %155 : vector<1x32x128xbf16> to vector<32x128xbf16>
    %c3_195 = arith.constant 3 : index
    %c0_196 = arith.constant 0 : index
    %c0_197 = arith.constant 0 : index
    %157 = vector.load %arg10[%c3_195, %c0_196, %c0_197] : memref<6x32x128xbf16, #tpu.memory_space<vmem>>, vector<1x32x128xbf16>
    %158 = vector.shape_cast %157 : vector<1x32x128xbf16> to vector<32x128xbf16>
    %159 = tpu.concatenate %154, %156, %158 in 0 : vector<32x128xbf16>, vector<32x128xbf16>, vector<32x128xbf16> -> vector<96x128xbf16>
    %cst_198 = arith.constant dense<0.000000e+00> : vector<8x128xf32>
    %160 = tpu.matmul %130, %159, %cst_198 {dimension_numbers = #tpu.dot_dimension_numbers<[1], [0], [0], [1], [0, 0, 1, 1], [], []>} : vector<8x96xbf16>, vector<96x128xbf16>, vector<8x128xf32> -> vector<8x128xf32>
    %161 = vector.broadcast %131 : vector<8x1xf32> to vector<8x128xf32>
    %162 = arith.mulf %160, %161 : vector<8x128xf32>
    %163 = vector.broadcast %132 : vector<8x1xf32> to vector<8x128xf32>
    %164 = arith.addf %162, %163 : vector<8x128xf32>
    %c0_199 = arith.constant 0 : index
    %c1_200 = arith.constant 1 : index
    %c0_201 = arith.constant 0 : index
    %c0_202 = arith.constant 0 : index
    %165 = vector.load %arg8[%c0_199, %c1_200, %c0_201, %c0_202] : memref<1x4x8x128xf32, #tpu.memory_space<vmem>>, vector<1x1x8x128xf32>
    %166 = vector.shape_cast %165 : vector<1x1x8x128xf32> to vector<8x128xf32>
    %167 = arith.addf %164, %166 : vector<8x128xf32>
    %cst_203 = arith.constant 0.000000e+00 : f32
    %168 = vector.broadcast %cst_203 : f32 to vector<8x128xf32>
    %169 = arith.maximumf %167, %168 : vector<8x128xf32>
    %c0_204 = arith.constant 0 : index
    %c1_205 = arith.constant 1 : index
    %c0_206 = arith.constant 0 : index
    %c0_207 = arith.constant 0 : index
    %170 = vector.load %arg9[%c0_204, %c1_205, %c0_206, %c0_207] : memref<1x4x8x128xf32, #tpu.memory_space<vmem>>, vector<1x1x8x128xf32>
    %171 = vector.shape_cast %170 : vector<1x1x8x128xf32> to vector<8x128xf32>
    %172 = vector.shape_cast %169 : vector<8x128xf32> to vector<1x1x8x128xf32>
    tpu.vector_store %arg9[%c0_204, %c1_205, %c0_206, %c0_207], %172 {strides = array<i32>} : memref<1x4x8x128xf32, #tpu.memory_space<vmem>>, vector<1x1x8x128xf32>,
    %c2_208 = arith.constant 2 : index
    %c0_209 = arith.constant 0 : index
    %c0_210 = arith.constant 0 : index
    %173 = vector.load %arg10[%c2_208, %c0_209, %c0_210] : memref<6x32x128xbf16, #tpu.memory_space<vmem>>, vector<1x32x128xbf16>
    %174 = vector.shape_cast %173 : vector<1x32x128xbf16> to vector<32x128xbf16>
    %c3_211 = arith.constant 3 : index
    %c0_212 = arith.constant 0 : index
    %c0_213 = arith.constant 0 : index
    %175 = vector.load %arg10[%c3_211, %c0_212, %c0_213] : memref<6x32x128xbf16, #tpu.memory_space<vmem>>, vector<1x32x128xbf16>
    %176 = vector.shape_cast %175 : vector<1x32x128xbf16> to vector<32x128xbf16>
    %c4_214 = arith.constant 4 : index
    %c0_215 = arith.constant 0 : index
    %c0_216 = arith.constant 0 : index
    %177 = vector.load %arg10[%c4_214, %c0_215, %c0_216] : memref<6x32x128xbf16, #tpu.memory_space<vmem>>, vector<1x32x128xbf16>
    %178 = vector.shape_cast %177 : vector<1x32x128xbf16> to vector<32x128xbf16>
    %179 = tpu.concatenate %174, %176, %178 in 0 : vector<32x128xbf16>, vector<32x128xbf16>, vector<32x128xbf16> -> vector<96x128xbf16>
    %cst_217 = arith.constant dense<0.000000e+00> : vector<8x128xf32>
    %180 = tpu.matmul %130, %179, %cst_217 {dimension_numbers = #tpu.dot_dimension_numbers<[1], [0], [0], [1], [0, 0, 1, 1], [], []>} : vector<8x96xbf16>, vector<96x128xbf16>, vector<8x128xf32> -> vector<8x128xf32>
    %181 = vector.broadcast %131 : vector<8x1xf32> to vector<8x128xf32>
    %182 = arith.mulf %180, %181 : vector<8x128xf32>
    %183 = vector.broadcast %132 : vector<8x1xf32> to vector<8x128xf32>
    %184 = arith.addf %182, %183 : vector<8x128xf32>
    %c0_218 = arith.constant 0 : index
    %c2_219 = arith.constant 2 : index
    %c0_220 = arith.constant 0 : index
    %c0_221 = arith.constant 0 : index
    %185 = vector.load %arg8[%c0_218, %c2_219, %c0_220, %c0_221] : memref<1x4x8x128xf32, #tpu.memory_space<vmem>>, vector<1x1x8x128xf32>
    %186 = vector.shape_cast %185 : vector<1x1x8x128xf32> to vector<8x128xf32>
    %187 = arith.addf %184, %186 : vector<8x128xf32>
    %cst_222 = arith.constant 0.000000e+00 : f32
    %188 = vector.broadcast %cst_222 : f32 to vector<8x128xf32>
    %189 = arith.maximumf %187, %188 : vector<8x128xf32>
    %c0_223 = arith.constant 0 : index
    %c2_224 = arith.constant 2 : index
    %c0_225 = arith.constant 0 : index
    %c0_226 = arith.constant 0 : index
    %190 = vector.load %arg9[%c0_223, %c2_224, %c0_225, %c0_226] : memref<1x4x8x128xf32, #tpu.memory_space<vmem>>, vector<1x1x8x128xf32>
    %191 = vector.shape_cast %190 : vector<1x1x8x128xf32> to vector<8x128xf32>
    %192 = vector.shape_cast %189 : vector<8x128xf32> to vector<1x1x8x128xf32>
    tpu.vector_store %arg9[%c0_223, %c2_224, %c0_225, %c0_226], %192 {strides = array<i32>} : memref<1x4x8x128xf32, #tpu.memory_space<vmem>>, vector<1x1x8x128xf32>,
    %c3_227 = arith.constant 3 : index
    %c0_228 = arith.constant 0 : index
    %c0_229 = arith.constant 0 : index
    %193 = vector.load %arg10[%c3_227, %c0_228, %c0_229] : memref<6x32x128xbf16, #tpu.memory_space<vmem>>, vector<1x32x128xbf16>
    %194 = vector.shape_cast %193 : vector<1x32x128xbf16> to vector<32x128xbf16>
    %c4_230 = arith.constant 4 : index
    %c0_231 = arith.constant 0 : index
    %c0_232 = arith.constant 0 : index
    %195 = vector.load %arg10[%c4_230, %c0_231, %c0_232] : memref<6x32x128xbf16, #tpu.memory_space<vmem>>, vector<1x32x128xbf16>
    %196 = vector.shape_cast %195 : vector<1x32x128xbf16> to vector<32x128xbf16>
    %c5_233 = arith.constant 5 : index
    %c0_234 = arith.constant 0 : index
    %c0_235 = arith.constant 0 : index
    %197 = vector.load %arg10[%c5_233, %c0_234, %c0_235] : memref<6x32x128xbf16, #tpu.memory_space<vmem>>, vector<1x32x128xbf16>
    %198 = vector.shape_cast %197 : vector<1x32x128xbf16> to vector<32x128xbf16>
    %199 = tpu.concatenate %194, %196, %198 in 0 : vector<32x128xbf16>, vector<32x128xbf16>, vector<32x128xbf16> -> vector<96x128xbf16>
    %cst_236 = arith.constant dense<0.000000e+00> : vector<8x128xf32>
    %200 = tpu.matmul %130, %199, %cst_236 {dimension_numbers = #tpu.dot_dimension_numbers<[1], [0], [0], [1], [0, 0, 1, 1], [], []>} : vector<8x96xbf16>, vector<96x128xbf16>, vector<8x128xf32> -> vector<8x128xf32>
    %201 = vector.broadcast %131 : vector<8x1xf32> to vector<8x128xf32>
    %202 = arith.mulf %200, %201 : vector<8x128xf32>
    %203 = vector.broadcast %132 : vector<8x1xf32> to vector<8x128xf32>
    %204 = arith.addf %202, %203 : vector<8x128xf32>
    %c0_237 = arith.constant 0 : index
    %c3_238 = arith.constant 3 : index
    %c0_239 = arith.constant 0 : index
    %c0_240 = arith.constant 0 : index
    %205 = vector.load %arg8[%c0_237, %c3_238, %c0_239, %c0_240] : memref<1x4x8x128xf32, #tpu.memory_space<vmem>>, vector<1x1x8x128xf32>
    %206 = vector.shape_cast %205 : vector<1x1x8x128xf32> to vector<8x128xf32>
    %207 = arith.addf %204, %206 : vector<8x128xf32>
    %cst_241 = arith.constant 0.000000e+00 : f32
    %208 = vector.broadcast %cst_241 : f32 to vector<8x128xf32>
    %209 = arith.maximumf %207, %208 : vector<8x128xf32>
    %c0_242 = arith.constant 0 : index
    %c3_243 = arith.constant 3 : index
    %c0_244 = arith.constant 0 : index
    %c0_245 = arith.constant 0 : index
    %210 = vector.load %arg9[%c0_242, %c3_243, %c0_244, %c0_245] : memref<1x4x8x128xf32, #tpu.memory_space<vmem>>, vector<1x1x8x128xf32>
    %211 = vector.shape_cast %210 : vector<1x1x8x128xf32> to vector<8x128xf32>
    %212 = vector.shape_cast %209 : vector<8x128xf32> to vector<1x1x8x128xf32>
    tpu.vector_store %arg9[%c0_242, %c3_243, %c0_244, %c0_245], %212 {strides = array<i32>} : memref<1x4x8x128xf32, #tpu.memory_space<vmem>>, vector<1x1x8x128xf32>,
    return
  }
  func.func @transform_0(%arg0: i32) -> (i32, i32, i32, i32) {
    %c0_i32 = arith.constant 0 : i32
    %c0_i32_0 = arith.constant 0 : i32
    %c0_i32_1 = arith.constant 0 : i32
    %c0_i32_2 = arith.constant 0 : i32
    return %arg0, %c0_i32, %c0_i32_0, %c0_i32_1 : i32, i32, i32, i32
  }
  func.func @transform_1(%arg0: i32) -> (i32, i32) {
    %c0_i32 = arith.constant 0 : i32
    %c0_i32_0 = arith.constant 0 : i32
    %c0_i32_1 = arith.constant 0 : i32
    return %c0_i32, %c0_i32_0 : i32, i32
  }
  func.func @transform_2(%arg0: i32) -> (i32, i32) {
    %c0_i32 = arith.constant 0 : i32
    %c0_i32_0 = arith.constant 0 : i32
    %c0_i32_1 = arith.constant 0 : i32
    return %c0_i32, %c0_i32_0 : i32, i32
  }
  func.func @transform_3(%arg0: i32) -> (i32, i32) {
    %c0_i32 = arith.constant 0 : i32
    %c0_i32_0 = arith.constant 0 : i32
    %c0_i32_1 = arith.constant 0 : i32
    return %c0_i32, %c0_i32_0 : i32, i32
  }
  func.func @transform_4(%arg0: i32) -> (i32, i32) {
    %c0_i32 = arith.constant 0 : i32
    %c0_i32_0 = arith.constant 0 : i32
    %c0_i32_1 = arith.constant 0 : i32
    return %c0_i32, %c0_i32_0 : i32, i32
  }
  func.func @transform_5(%arg0: i32) -> (i32, i32) {
    %c0_i32 = arith.constant 0 : i32
    %c0_i32_0 = arith.constant 0 : i32
    %c0_i32_1 = arith.constant 0 : i32
    return %c0_i32, %c0_i32_0 : i32, i32
  }
  func.func @transform_6(%arg0: i32) -> (i32, i32) {
    %c0_i32 = arith.constant 0 : i32
    %c0_i32_0 = arith.constant 0 : i32
    %c0_i32_1 = arith.constant 0 : i32
    return %c0_i32, %c0_i32_0 : i32, i32
  }
  func.func @transform_7(%arg0: i32) -> (i32, i32, i32, i32) {
    %c0_i32 = arith.constant 0 : i32
    %c0_i32_0 = arith.constant 0 : i32
    %c0_i32_1 = arith.constant 0 : i32
    %c0_i32_2 = arith.constant 0 : i32
    return %arg0, %c0_i32, %c0_i32_0, %c0_i32_1 : i32, i32, i32, i32
  }
  func.func @transform_8(%arg0: i32) -> (i32, i32, i32, i32) {
    %c0_i32 = arith.constant 0 : i32
    %c0_i32_0 = arith.constant 0 : i32
    %c0_i32_1 = arith.constant 0 : i32
    %c0_i32_2 = arith.constant 0 : i32
    return %arg0, %c0_i32, %c0_i32_0, %c0_i32_1 : i32, i32, i32, i32
  }
}

</mosaic_0001>

<llo_original>
// kernel: res_block_forward.3
$region0: #{res_block_forward.3}
  #allocation0 [shape = 'u32[]', space=smem, size = 0x4, offset = 0x4, fixed_abs, tag = 'smem constant byte address 0x4 - core index']
  #allocation1 [shape = 'u32[144,128]{1,0:T(1,128)}', space=vmem, size = 0x12000, scoped, tag = 'internal scratch']
  #allocation2 [shape = 'bf16[4,16,128]{2,1,0:T(16,128)(2,1)}', space=vmem, size = 0x4000, scoped, tag = 'scratch operand']
  %s0 = inlined_call_operand.vmem [shape: bf16[2,4,16,128], index: 0, kind: input, shape index: {}]
  %s1 = inlined_call_operand.vmem [shape: bf16[16,16], index: 1, kind: input, shape index: {}]
  %s2 = inlined_call_operand.vmem [shape: f32[16,1], index: 2, kind: input, shape index: {}]
  %s3 = inlined_call_operand.vmem [shape: f32[16,1], index: 3, kind: input, shape index: {}]
  %s4 = inlined_call_operand.vmem [shape: bf16[8,16], index: 4, kind: input, shape index: {}]
  %s5 = inlined_call_operand.vmem [shape: f32[8,1], index: 5, kind: input, shape index: {}]
  %s6 = inlined_call_operand.vmem [shape: f32[8,1], index: 6, kind: input, shape index: {}]
  %s7 = inlined_call_operand.vmem [shape: f32[2,4,8,128], index: 7, kind: output, shape index: {}]
  %s8 = sld [smem:[#allocation0]]
  $region61: #{res_block_forward.3} parent=0
    _
  %s10 = ssub.s32 1, %s8
  %s11 = scalar_select 0, %s10, %s8
  loop: start=0, step=1, limit=4
  $region2: #{res_block_forward.3} parent=0 // loop_pre_header
    _
  $region3: #{res_block_forward.3} parent=0 // loop_header
    %s13 = sphi 0, %s17
    %p14 = scmp.ge.s32.totalorder %s13, 4
    %s23 = sphi 0, %s25
    %s26 = sphi 0, %s23
    %s27 = sphi 0, %s26
    %s43 = sphi 0, %s27
    %s47 = sphi 0, %s47
    %s49 = sphi 0, %s47
    %s50 = sphi 0, %s49
    %s64 = sphi 0, %s50
    %s68 = sphi 0, %s68
    %s70 = sphi 0, %s68
    %s71 = sphi 0, %s70
    %s85 = sphi 0, %s71
    %s89 = sphi 0, %s89
    %s91 = sphi 0, %s89
    %s92 = sphi 0, %s91
    %s106 = sphi 0, %s92
    %s110 = sphi 0, %s110
    %s112 = sphi 0, %s110
    %s113 = sphi 0, %s112
    %s127 = sphi 0, %s113
    %s131 = sphi 0, %s131
    %s133 = sphi 0, %s131
    %s134 = sphi 0, %s133
    %s148 = sphi 0, %s134
    %s152 = sphi 0, %s152
    %s154 = sphi 0, %s152
    %s155 = sphi 0, %s154
    %s169 = sphi 0, %s155
    %s175 = sphi 0, %s177
    %s178 = sphi 0, %s175
    %s179 = sphi 0, %s178
    %s195 = sphi 0, %s179
  $region4: #{res_block_forward.3} parent=0 // loop_header_branch
    %16 = sbr.rel (%p14) target = $region8
  $region5: #{res_block_forward.3} parent=0 // loop_body
    %s18 = ssub.s32 %s13, 1
    %s19 = ssub.s32 %s13, 2
    %s20 = sadd.s32 %s13, 1
    %s21 = ssub.s32 %s13, %s20
    %p22 = scmp.eq.s32.totalorder %s21, 0
    %s24 = sadd.s32 %s23, 1
    %s25 = scalar_select %p22, %s23, %s24
    %p28 = pneg %p22
    %p29 = scmp.eq.s32.totalorder %s13, 1
    %p30 = por %p28, %p29
    %p31 = scmp.ne.s32.totalorder %s23, %s26
    %p32 = scmp.eq.s32.totalorder %s13, 0
    %p33 = por %p31, %p32
    %p34 = scmp.ne.s32.totalorder %s23, %s26
    %p35 = scmp.eq.s32.totalorder %s18, 1
    %p36 = por %p34, %p35
    %p37 = scmp.ne.s32.totalorder %s26, %s27
    %p38 = scmp.eq.s32.totalorder %s18, 0
    %p39 = por %p37, %p38
    %p40 = scmp.ne.s32.totalorder %s26, %s27
    %p41 = scmp.eq.s32.totalorder %s19, 1
    %p42 = por %p40, %p41
    %p44 = scmp.ne.s32.totalorder %s27, %s43
    %p45 = scmp.eq.s32.totalorder %s19, 0
    %p46 = por %p44, %p45
    %s48 = sadd.s32 %s47, 1
    %p51 = scmp.eq.s32.totalorder %s13, 1
    %p52 = scmp.ne.s32.totalorder %s47, %s49
    %p53 = scmp.eq.s32.totalorder %s13, 0
    %p54 = por %p52, %p53
    %p55 = scmp.ne.s32.totalorder %s47, %s49
    %p56 = scmp.eq.s32.totalorder %s18, 1
    %p57 = por %p55, %p56
    %p58 = scmp.ne.s32.totalorder %s49, %s50
    %p59 = scmp.eq.s32.totalorder %s18, 0
    %p60 = por %p58, %p59
    %p61 = scmp.ne.s32.totalorder %s49, %s50
    %p62 = scmp.eq.s32.totalorder %s19, 1
    %p63 = por %p61, %p62
    %p65 = scmp.ne.s32.totalorder %s50, %s64
    %p66 = scmp.eq.s32.totalorder %s19, 0
    %p67 = por %p65, %p66
    %s69 = sadd.s32 %s68, 1
    %p72 = scmp.eq.s32.totalorder %s13, 1
    %p73 = scmp.ne.s32.totalorder %s68, %s70
    %p74 = scmp.eq.s32.totalorder %s13, 0
    %p75 = por %p73, %p74
    %p76 = scmp.ne.s32.totalorder %s68, %s70
    %p77 = scmp.eq.s32.totalorder %s18, 1
    %p78 = por %p76, %p77
    %p79 = scmp.ne.s32.totalorder %s70, %s71
    %p80 = scmp.eq.s32.totalorder %s18, 0
    %p81 = por %p79, %p80
    %p82 = scmp.ne.s32.totalorder %s70, %s71
    %p83 = scmp.eq.s32.totalorder %s19, 1
    %p84 = por %p82, %p83
    %p86 = scmp.ne.s32.totalorder %s71, %s85
    %p87 = scmp.eq.s32.totalorder %s19, 0
    %p88 = por %p86, %p87
    %s90 = sadd.s32 %s89, 1
    %p93 = scmp.eq.s32.totalorder %s13, 1
    %p94 = scmp.ne.s32.totalorder %s89, %s91
    %p95 = scmp.eq.s32.totalorder %s13, 0
    %p96 = por %p94, %p95
    %p97 = scmp.ne.s32.totalorder %s89, %s91
    %p98 = scmp.eq.s32.totalorder %s18, 1
    %p99 = por %p97, %p98
    %p100 = scmp.ne.s32.totalorder %s91, %s92
    %p101 = scmp.eq.s32.totalorder %s18, 0
    %p102 = por %p100, %p101
    %p103 = scmp.ne.s32.totalorder %s91, %s92
    %p104 = scmp.eq.s32.totalorder %s19, 1
    %p105 = por %p103, %p104
    %p107 = scmp.ne.s32.totalorder %s92, %s106
    %p108 = scmp.eq.s32.totalorder %s19, 0
    %p109 = por %p107, %p108
    %s111 = sadd.s32 %s110, 1
    %p114 = scmp.eq.s32.totalorder %s13, 1
    %p115 = scmp.ne.s32.totalorder %s110, %s112
    %p116 = scmp.eq.s32.totalorder %s13, 0
    %p117 = por %p115, %p116
    %p118 = scmp.ne.s32.totalorder %s110, %s112
    %p119 = scmp.eq.s32.totalorder %s18, 1
    %p120 = por %p118, %p119
    %p121 = scmp.ne.s32.totalorder %s112, %s113
    %p122 = scmp.eq.s32.totalorder %s18, 0
    %p123 = por %p121, %p122
    %p124 = scmp.ne.s32.totalorder %s112, %s113
    %p125 = scmp.eq.s32.totalorder %s19, 1
    %p126 = por %p124, %p125
    %p128 = scmp.ne.s32.totalorder %s113, %s127
    %p129 = scmp.eq.s32.totalorder %s19, 0
    %p130 = por %p128, %p129
    %s132 = sadd.s32 %s131, 1
    %p135 = scmp.eq.s32.totalorder %s13, 1
    %p136 = scmp.ne.s32.totalorder %s131, %s133
    %p137 = scmp.eq.s32.totalorder %s13, 0
    %p138 = por %p136, %p137
    %p139 = scmp.ne.s32.totalorder %s131, %s133
    %p140 = scmp.eq.s32.totalorder %s18, 1
    %p141 = por %p139, %p140
    %p142 = scmp.ne.s32.totalorder %s133, %s134
    %p143 = scmp.eq.s32.totalorder %s18, 0
    %p144 = por %p142, %p143
    %p145 = scmp.ne.s32.totalorder %s133, %s134
    %p146 = scmp.eq.s32.totalorder %s19, 1
    %p147 = por %p145, %p146
    %p149 = scmp.ne.s32.totalorder %s134, %s148
    %p150 = scmp.eq.s32.totalorder %s19, 0
    %p151 = por %p149, %p150
    %s153 = sadd.s32 %s152, 1
    %p156 = scmp.eq.s32.totalorder %s13, 1
    %p157 = scmp.ne.s32.totalorder %s152, %s154
    %p158 = scmp.eq.s32.totalorder %s13, 0
    %p159 = por %p157, %p158
    %p160 = scmp.ne.s32.totalorder %s152, %s154
    %p161 = scmp.eq.s32.totalorder %s18, 1
    %p162 = por %p160, %p161
    %p163 = scmp.ne.s32.totalorder %s154, %s155
    %p164 = scmp.eq.s32.totalorder %s18, 0
    %p165 = por %p163, %p164
    %p166 = scmp.ne.s32.totalorder %s154, %s155
    %p167 = scmp.eq.s32.totalorder %s19, 1
    %p168 = por %p166, %p167
    %p170 = scmp.ne.s32.totalorder %s155, %s169
    %p171 = scmp.eq.s32.totalorder %s19, 0
    %p172 = por %p170, %p171
    %s173 = ssub.s32 %s13, %s20
    %p174 = scmp.eq.s32.totalorder %s173, 0
    %s176 = sadd.s32 %s175, 1
    %s177 = scalar_select %p174, %s175, %s176
    %p180 = pneg %p174
    %p181 = scmp.eq.s32.totalorder %s13, 1
    %p182 = por %p180, %p181
    %p183 = scmp.ne.s32.totalorder %s175, %s178
    %p184 = scmp.eq.s32.totalorder %s13, 0
    %p185 = por %p183, %p184
    %p186 = scmp.ne.s32.totalorder %s175, %s178
    %p187 = scmp.eq.s32.totalorder %s18, 1
    %p188 = por %p186, %p187
    %p189 = scmp.ne.s32.totalorder %s178, %s179
    %p190 = scmp.eq.s32.totalorder %s18, 0
    %p191 = por %p189, %p190
    %p192 = scmp.ne.s32.totalorder %s178, %s179
    %p193 = scmp.eq.s32.totalorder %s19, 1
    %p194 = por %p192, %p193
    %p196 = scmp.ne.s32.totalorder %s179, %s195
    %p197 = scmp.eq.s32.totalorder %s19, 0
    %p198 = por %p196, %p197
    %p199 = scmp.le.s32.totalorder 1, %s13
    %p200 = scmp.lt.s32.totalorder %s13, 3
    %p201 = pnand %p199, %p200
    %p202 = pneg %p201
    // Predicated region
    $region9: #{res_block_forward.3} parent=5 // pred_check
      _
    $region10: #{res_block_forward.3} parent=5 // pred_check_branch
      %204 = sbr.rel (%p201) target = $region12
    $region11: #{res_block_forward.3} parent=5 // pred_region
      %s205 = ssub.s32 %s13, 1
      // Predicated region
      $region13: #{res_block_forward.3} parent=11 // pred_check
        %p206 = pneg %p60
      $region14: #{res_block_forward.3} parent=11 // pred_check_branch
        %208 = sbr.rel (%p206) target = $region16
      $region15: #{res_block_forward.3} parent=11 // pred_region
        _
      $region16: #{res_block_forward.3} parent=11 // pred_fallthru
        _
      // Predicated region
      $region17: #{res_block_forward.3} parent=11 // pred_check
        %p209 = pneg %p81
      $region18: #{res_block_forward.3} parent=11 // pred_check_branch
        %211 = sbr.rel (%p209) target = $region20
      $region19: #{res_block_forward.3} parent=11 // pred_region
        _
      $region20: #{res_block_forward.3} parent=11 // pred_fallthru
        _
      // Predicated region
      $region21: #{res_block_forward.3} parent=11 // pred_check
        %p212 = pneg %p102
      $region22: #{res_block_forward.3} parent=11 // pred_check_branch
        %214 = sbr.rel (%p212) target = $region24
      $region23: #{res_block_forward.3} parent=11 // pred_region
        _
      $region24: #{res_block_forward.3} parent=11 // pred_fallthru
        _
      // Predicated region
      $region25: #{res_block_forward.3} parent=11 // pred_check
        %p215 = pneg %p123
      $region26: #{res_block_forward.3} parent=11 // pred_check_branch
        %217 = sbr.rel (%p215) target = $region28
      $region27: #{res_block_forward.3} parent=11 // pred_region
        _
      $region28: #{res_block_forward.3} parent=11 // pred_fallthru
        _
      // Predicated region
      $region29: #{res_block_forward.3} parent=11 // pred_check
        %p218 = pneg %p144
      $region30: #{res_block_forward.3} parent=11 // pred_check_branch
        %220 = sbr.rel (%p218) target = $region32
      $region31: #{res_block_forward.3} parent=11 // pred_region
        _
      $region32: #{res_block_forward.3} parent=11 // pred_fallthru
        _
      // Predicated region
      $region33: #{res_block_forward.3} parent=11 // pred_check
        %p221 = pneg %p165
      $region34: #{res_block_forward.3} parent=11 // pred_check_branch
        %223 = sbr.rel (%p221) target = $region36
      $region35: #{res_block_forward.3} parent=11 // pred_region
        _
      $region36: #{res_block_forward.3} parent=11 // pred_fallthru
        _
    $region12: #{res_block_forward.3} parent=5 // pred_fallthru
      _
    %p224 = scmp.lt.s32.totalorder %s13, 2
    // Predicated region
    $region37: #{res_block_forward.3} parent=5 // pred_check
      %p225 = pneg %p224
    $region38: #{res_block_forward.3} parent=5 // pred_check_branch
      %227 = sbr.rel (%p225) target = $region40
    $region39: #{res_block_forward.3} parent=5 // pred_region
      // Predicated region
      $region41: #{res_block_forward.3} parent=39 // pred_check
        %p228 = pneg %p33
      $region42: #{res_block_forward.3} parent=39 // pred_check_branch
        %230 = sbr.rel (%p228) target = $region44
      $region43: #{res_block_forward.3} parent=39 // pred_region
        %p231 = scmp.lt.s32.totalorder %s13, 1
        %s232 = scalar_select %p231, %s13, 1
        %s233 = smul.addr %s232, 8
        %s234 = smul.addr %s233, 4
        %s235 = scalar_lea.vmem %s0, %s234
      $region44: #{res_block_forward.3} parent=39 // pred_fallthru
        _
    $region40: #{res_block_forward.3} parent=5 // pred_fallthru
      _
    %p236 = scmp.le.s32.totalorder 1, %s13
    %p237 = scmp.lt.s32.totalorder %s13, 3
    %p238 = pnand %p236, %p237
    %p239 = pneg %p238
    // Predicated region
    $region45: #{res_block_forward.3} parent=5 // pred_check
      _
    $region46: #{res_block_forward.3} parent=5 // pred_check_branch
      %241 = sbr.rel (%p238) target = $region48
    $region47: #{res_block_forward.3} parent=5 // pred_region
      %s242 = ssub.s32 %s13, 1
      %p243 = scmp.lt.s32.totalorder %s18, 1
      %s244 = scalar_select %p243, %s18, 1
      %s245 = smul.addr %s244, 8
      %s246 = smul.addr %s245, 4
      %s247 = scalar_lea.vmem %s0, %s246
      %p248 = pneg %p39
      %p249 = pneg %p36
      %p250 = pneg %p60
      %p251 = pneg %p57
      %p252 = pneg %p81
      %p253 = pneg %p78
      %p254 = pneg %p102
      %p255 = pneg %p99
      %p256 = pneg %p123
      %p257 = pneg %p120
      %p258 = pneg %p144
      %p259 = pneg %p141
      %p260 = pneg %p165
      %p261 = pneg %p162
      %p262 = pneg %p191
      %p263 = pneg %p188
      %p264 = scmp.lt.s32.totalorder %s18, 1
      %s265 = scalar_select %p264, %s18, 1
      %s266 = smul.addr %s265, 4
      %s267 = smul.addr %s266, 8
      %s268 = scalar_lea.vmem %s7, %s267
      %p269 = scmp.lt.s32.totalorder %s18, 1
      %s270 = scalar_select %p269, %s18, 1
      %s271 = smul.addr %s270, 8
      %s272 = smul.addr %s271, 4
      %s273 = scalar_lea.vmem %s0, %s272
      %p274 = scmp.lt.s32.totalorder %s18, 1
      %s275 = scalar_select %p274, %s18, 1
      %s276 = smul.addr %s275, 4
      %s277 = smul.addr %s276, 8
      %s278 = scalar_lea.vmem %s7, %s277
      %v280 = vld [vmem:[%s1] sm:$0xf]
      %v281 = vld [vmem:[%s1 + $0x4] sm:$0xf]
      %v282 = vld [vmem:[%s2] sm:$0xff]
      %v283 = vld [vmem:[%s2 + $0x8] sm:$0xff]
      %v284 = vld [vmem:[%s3] sm:$0xff]
      %v285 = vld [vmem:[%s3 + $0x8] sm:$0xff]
      %v286 = vld [vmem:[%s273] sm:$0xf]
      %v287 = vld [vmem:[%s273 + $0x4] sm:$0xf]
      %v290 = vunpack.c.l.b16 %v280
      %v291 = vunpack.c.l.b16 %v281
      %v292 = vpack.c.b16 %v291, %v290
      %v295 = vunpack.c.l.b16 %v286
      %v296 = vunpack.c.l.b16 %v287
      %v297 = vpack.c.b16 %v296, %v295
      %vm299 = vcmask 130048
      %v301 = vsel %vm299, %v292, 0
      %303 = vmatprep.subr.bf16.mxu0 0
      %304 = vmatpush1.bf16.msra.mxu0 %v297
      %305 = vmatprep.subr.bf16.mxu0 0
      %306 = vmatpush1.bf16.msra.mxu0 0
      %307 = vmatprep.subr.bf16.mxu0 0
      %308 = vmatpush1.bf16.msra.mxu0 0
      %309 = vmatprep.subr.bf16.mxu0 0
      %310 = vmatpush1.bf16.msra.mxu0 0
      %311 = vmatprep.subr.bf16.mxu0 0
      %312 = vmatpush1.bf16.msra.mxu0 0
      %313 = vmatprep.subr.bf16.mxu0 0
      %314 = vmatpush1.bf16.msra.mxu0 0
      %315 = vmatprep.subr.bf16.mxu0 0
      %316 = vmatpush1.bf16.msra.mxu0 0
      %317 = vmatprep.subr.bf16.mxu0 0
      %318 = vmatpush1.bf16.msra.mxu0 0
      %319 = vmatprep.subr.bf16.mxu0 0
      %320 = vmatpush1.bf16.msra.mxu0 0
      %321 = vmatprep.subr.bf16.mxu0 0
      %322 = vmatpush1.bf16.msra.mxu0 0
      %323 = vmatprep.subr.bf16.mxu0 0
      %324 = vmatpush1.bf16.msra.mxu0 0
      %325 = vmatprep.subr.bf16.mxu0 0
      %326 = vmatpush1.bf16.msra.mxu0 0
      %327 = vmatprep.subr.bf16.mxu0 0
      %328 = vmatpush1.bf16.msra.mxu0 0
      %329 = vmatprep.subr.bf16.mxu0 0
      %330 = vmatpush1.bf16.msra.mxu0 0
      %331 = vmatprep.subr.bf16.mxu0 0
      %332 = vmatpush1.bf16.msra.mxu0 0
      %333 = vmatprep.subr.bf16.mxu0 0
      %334 = vmatpush1.bf16.msra.mxu0 0
      %335 = vmatprep.mubr.bf16.mxu0 0
      %336 = vmatmul.mubr.bf16.gmra.mrb[0].mxu0 %v301
      %v337 = vpop.f32.mrb[0].mxu0
      %v338 = vadd.f32 0.0, %v337
      %v339 = vpop.f32.mrb[0].mxu0
      %v340 = vpop.f32.mrb[0].mxu0
      %v341 = vadd.f32 0.0, %v340
      %v342 = vpop.f32.mrb[0].mxu0
      %343 = vdwg.mxu0
      %345 = vset.pattern.permute.xlu0 0
      %346 = vperm.xlu0 %345, %v282
      %v347 = vpop.permute.xlu0 %346
      %350 = vset.pattern.permute.xlu0 0
      %351 = vperm.xlu0 %350, %v283
      %v352 = vpop.permute.xlu0 %351
      %v354 = vmul.f32 %v338, %v347
      %v355 = vmul.f32 %v341, %v352
      %357 = vset.pattern.permute.xlu0 0
      %358 = vperm.xlu0 %357, %v284
      %v359 = vpop.permute.xlu0 %358
      %362 = vset.pattern.permute.xlu0 0
      %363 = vperm.xlu0 %362, %v285
      %v364 = vpop.permute.xlu0 %363
      %v366 = vadd.f32 %v354, %v359
      %v367 = vadd.f32 %v355, %v364
      %v368 = vmax.f32 %v366, 0.0
      %v369 = vmax.f32 %v367, 0.0
      %v370 = vpack.c.bf16 %v369, %v368
      %371 = vst [vmem:[#allocation2] sm:$0xff] %v370
      %s372 = scalar_lea.vmem %s273, 8
      %v373 = vld [vmem:[%s372] sm:$0xf]
      %v374 = vld [vmem:[%s372 + $0x4] sm:$0xf]
      %v377 = vunpack.c.l.b16 %v373
      %v378 = vunpack.c.l.b16 %v374
      %v379 = vpack.c.b16 %v378, %v377
      %381 = vmatprep.subr.bf16.mxu0 0
      %382 = vmatpush1.bf16.msra.mxu0 %v379
      %383 = vmatprep.subr.bf16.mxu0 0
      %384 = vmatpush1.bf16.msra.mxu0 0
      %385 = vmatprep.subr.bf16.mxu0 0
      %386 = vmatpush1.bf16.msra.mxu0 0
      %387 = vmatprep.subr.bf16.mxu0 0
      %388 = vmatpush1.bf16.msra.mxu0 0
      %389 = vmatprep.subr.bf16.mxu0 0
      %390 = vmatpush1.bf16.msra.mxu0 0
      %391 = vmatprep.subr.bf16.mxu0 0
      %392 = vmatpush1.bf16.msra.mxu0 0
      %393 = vmatprep.subr.bf16.mxu0 0
      %394 = vmatpush1.bf16.msra.mxu0 0
      %395 = vmatprep.subr.bf16.mxu0 0
      %396 = vmatpush1.bf16.msra.mxu0 0
      %397 = vmatprep.subr.bf16.mxu0 0
      %398 = vmatpush1.bf16.msra.mxu0 0
      %399 = vmatprep.subr.bf16.mxu0 0
      %400 = vmatpush1.bf16.msra.mxu0 0
      %401 = vmatprep.subr.bf16.mxu0 0
      %402 = vmatpush1.bf16.msra.mxu0 0
      %403 = vmatprep.subr.bf16.mxu0 0
      %404 = vmatpush1.bf16.msra.mxu0 0
      %405 = vmatprep.subr.bf16.mxu0 0
      %406 = vmatpush1.bf16.msra.mxu0 0
      %407 = vmatprep.subr.bf16.mxu0 0
      %408 = vmatpush1.bf16.msra.mxu0 0
      %409 = vmatprep.subr.bf16.mxu0 0
      %410 = vmatpush1.bf16.msra.mxu0 0
      %411 = vmatprep.subr.bf16.mxu0 0
      %412 = vmatpush1.bf16.msra.mxu0 0
      %413 = vmatprep.mubr.bf16.mxu0 0
      %414 = vmatmul.mubr.bf16.gmra.mrb[0].mxu0 %v301
      %v415 = vpop.f32.mrb[0].mxu0
      %v416 = vadd.f32 0.0, %v415
      %v417 = vpop.f32.mrb[0].mxu0
      %v418 = vpop.f32.mrb[0].mxu0
      %v419 = vadd.f32 0.0, %v418
      %v420 = vpop.f32.mrb[0].mxu0
      %421 = vdwg.mxu0
      %v422 = vmul.f32 %v416, %v347
      %v423 = vmul.f32 %v419, %v352
      %v424 = vadd.f32 %v422, %v359
      %v425 = vadd.f32 %v423, %v364
      %v426 = vmax.f32 %v424, 0.0
      %v427 = vmax.f32 %v425, 0.0
      %v428 = vpack.c.bf16 %v427, %v426
      %s429 = scalar_lea.vmem [#allocation2], 8
      %430 = vst [vmem:[%s429] sm:$0xff] %v428
      %s431 = scalar_lea.vmem %s273, 16
      %v432 = vld [vmem:[%s431] sm:$0xf]
      %v433 = vld [vmem:[%s431 + $0x4] sm:$0xf]
      %v436 = vunpack.c.l.b16 %v432
      %v437 = vunpack.c.l.b16 %v433
      %v438 = vpack.c.b16 %v437, %v436
      %440 = vmatprep.subr.bf16.mxu0 0
      %441 = vmatpush1.bf16.msra.mxu0 %v438
      %442 = vmatprep.subr.bf16.mxu0 0
      %443 = vmatpush1.bf16.msra.mxu0 0
      %444 = vmatprep.subr.bf16.mxu0 0
      %445 = vmatpush1.bf16.msra.mxu0 0
      %446 = vmatprep.subr.bf16.mxu0 0
      %447 = vmatpush1.bf16.msra.mxu0 0
      %448 = vmatprep.subr.bf16.mxu0 0
      %449 = vmatpush1.bf16.msra.mxu0 0
      %450 = vmatprep.subr.bf16.mxu0 0
      %451 = vmatpush1.bf16.msra.mxu0 0
      %452 = vmatprep.subr.bf16.mxu0 0
      %453 = vmatpush1.bf16.msra.mxu0 0
      %454 = vmatprep.subr.bf16.mxu0 0
      %455 = vmatpush1.bf16.msra.mxu0 0
      %456 = vmatprep.subr.bf16.mxu0 0
      %457 = vmatpush1.bf16.msra.mxu0 0
      %458 = vmatprep.subr.bf16.mxu0 0
      %459 = vmatpush1.bf16.msra.mxu0 0
      %460 = vmatprep.subr.bf16.mxu0 0
      %461 = vmatpush1.bf16.msra.mxu0 0
      %462 = vmatprep.subr.bf16.mxu0 0
      %463 = vmatpush1.bf16.msra.mxu0 0
      %464 = vmatprep.subr.bf16.mxu0 0
      %465 = vmatpush1.bf16.msra.mxu0 0
      %466 = vmatprep.subr.bf16.mxu0 0
      %467 = vmatpush1.bf16.msra.mxu0 0
      %468 = vmatprep.subr.bf16.mxu0 0
      %469 = vmatpush1.bf16.msra.mxu0 0
      %470 = vmatprep.subr.bf16.mxu0 0
      %471 = vmatpush1.bf16.msra.mxu0 0
      %472 = vmatprep.mubr.bf16.mxu0 0
      %473 = vmatmul.mubr.bf16.gmra.mrb[0].mxu0 %v301
      %v474 = vpop.f32.mrb[0].mxu0
      %v475 = vadd.f32 0.0, %v474
      %v476 = vpop.f32.mrb[0].mxu0
      %v477 = vpop.f32.mrb[0].mxu0
      %v478 = vadd.f32 0.0, %v477
      %v479 = vpop.f32.mrb[0].mxu0
      %480 = vdwg.mxu0
      %v481 = vmul.f32 %v475, %v347
      %v482 = vmul.f32 %v478, %v352
      %v483 = vadd.f32 %v481, %v359
      %v484 = vadd.f32 %v482, %v364
      %v485 = vmax.f32 %v483, 0.0
      %v486 = vmax.f32 %v484, 0.0
      %v487 = vpack.c.bf16 %v486, %v485
      %s488 = scalar_lea.vmem [#allocation2], 16
      %489 = vst [vmem:[%s488] sm:$0xff] %v487
      %s490 = scalar_lea.vmem %s273, 24
      %v491 = vld [vmem:[%s490] sm:$0xf]
      %v492 = vld [vmem:[%s490 + $0x4] sm:$0xf]
      %v495 = vunpack.c.l.b16 %v491
      %v496 = vunpack.c.l.b16 %v492
      %v497 = vpack.c.b16 %v496, %v495
      %499 = vmatprep.subr.bf16.mxu0 0
      %500 = vmatpush1.bf16.msra.mxu0 %v497
      %501 = vmatprep.subr.bf16.mxu0 0
      %502 = vmatpush1.bf16.msra.mxu0 0
      %503 = vmatprep.subr.bf16.mxu0 0
      %504 = vmatpush1.bf16.msra.mxu0 0
      %505 = vmatprep.subr.bf16.mxu0 0
      %506 = vmatpush1.bf16.msra.mxu0 0
      %507 = vmatprep.subr.bf16.mxu0 0
      %508 = vmatpush1.bf16.msra.mxu0 0
      %509 = vmatprep.subr.bf16.mxu0 0
      %510 = vmatpush1.bf16.msra.mxu0 0
      %511 = vmatprep.subr.bf16.mxu0 0
      %512 = vmatpush1.bf16.msra.mxu0 0
      %513 = vmatprep.subr.bf16.mxu0 0
      %514 = vmatpush1.bf16.msra.mxu0 0
      %515 = vmatprep.subr.bf16.mxu0 0
      %516 = vmatpush1.bf16.msra.mxu0 0
      %517 = vmatprep.subr.bf16.mxu0 0
      %518 = vmatpush1.bf16.msra.mxu0 0
      %519 = vmatprep.subr.bf16.mxu0 0
      %520 = vmatpush1.bf16.msra.mxu0 0
      %521 = vmatprep.subr.bf16.mxu0 0
      %522 = vmatpush1.bf16.msra.mxu0 0
      %523 = vmatprep.subr.bf16.mxu0 0
      %524 = vmatpush1.bf16.msra.mxu0 0
      %525 = vmatprep.subr.bf16.mxu0 0
      %526 = vmatpush1.bf16.msra.mxu0 0
      %527 = vmatprep.subr.bf16.mxu0 0
      %528 = vmatpush1.bf16.msra.mxu0 0
      %529 = vmatprep.subr.bf16.mxu0 0
      %530 = vmatpush1.bf16.msra.mxu0 0
      %531 = vmatprep.mubr.bf16.mxu0 0
      %532 = vmatmul.mubr.bf16.gmra.mrb[0].mxu0 %v301
      %v533 = vpop.f32.mrb[0].mxu0
      %v534 = vadd.f32 0.0, %v533
      %v535 = vpop.f32.mrb[0].mxu0
      %v536 = vpop.f32.mrb[0].mxu0
      %v537 = vadd.f32 0.0, %v536
      %v538 = vpop.f32.mrb[0].mxu0
      %539 = vdwg.mxu0
      %v540 = vmul.f32 %v534, %v347
      %v541 = vmul.f32 %v537, %v352
      %v542 = vadd.f32 %v540, %v359
      %v543 = vadd.f32 %v541, %v364
      %v544 = vmax.f32 %v542, 0.0
      %v545 = vmax.f32 %v543, 0.0
      %v546 = vpack.c.bf16 %v545, %v544
      %s547 = scalar_lea.vmem [#allocation2], 24
      %548 = vst [vmem:[%s547] sm:$0xff] %v546
      %v549 = vld [vmem:[%s4] sm:$0xf]
      %v550 = vld [vmem:[%s5] sm:$0xff]
      %v551 = vld [vmem:[%s6] sm:$0xff]
      %v552 = vld [vmem:[#allocation2] sm:$0xff]
      %v554 = vsel %vm299, %v549, 0
      %556 = vmatprep.subr.bf16.mxu0 0
      %557 = vmatpush1.bf16.msra.mxu0 %v552
      %558 = vmatprep.subr.bf16.mxu0 0
      %559 = vmatpush1.bf16.msra.mxu0 0
      %560 = vmatprep.subr.bf16.mxu0 0
      %561 = vmatpush1.bf16.msra.mxu0 0
      %562 = vmatprep.subr.bf16.mxu0 0
      %563 = vmatpush1.bf16.msra.mxu0 0
      %564 = vmatprep.subr.bf16.mxu0 0
      %565 = vmatpush1.bf16.msra.mxu0 0
      %566 = vmatprep.subr.bf16.mxu0 0
      %567 = vmatpush1.bf16.msra.mxu0 0
      %568 = vmatprep.subr.bf16.mxu0 0
      %569 = vmatpush1.bf16.msra.mxu0 0
      %570 = vmatprep.subr.bf16.mxu0 0
      %571 = vmatpush1.bf16.msra.mxu0 0
      %572 = vmatprep.subr.bf16.mxu0 0
      %573 = vmatpush1.bf16.msra.mxu0 0
      %574 = vmatprep.subr.bf16.mxu0 0
      %575 = vmatpush1.bf16.msra.mxu0 0
      %576 = vmatprep.subr.bf16.mxu0 0
      %577 = vmatpush1.bf16.msra.mxu0 0
      %578 = vmatprep.subr.bf16.mxu0 0
      %579 = vmatpush1.bf16.msra.mxu0 0
      %580 = vmatprep.subr.bf16.mxu0 0
      %581 = vmatpush1.bf16.msra.mxu0 0
      %582 = vmatprep.subr.bf16.mxu0 0
      %583 = vmatpush1.bf16.msra.mxu0 0
      %584 = vmatprep.subr.bf16.mxu0 0
      %585 = vmatpush1.bf16.msra.mxu0 0
      %586 = vmatprep.subr.bf16.mxu0 0
      %587 = vmatpush1.bf16.msra.mxu0 0
      %588 = vmatprep.mubr.bf16.mxu0 0
      %589 = vmatmul.mubr.bf16.gmra.mrb[0].mxu0 %v554
      %v590 = vpop.f32.mrb[0].mxu0
      %v591 = vadd.f32 0.0, %v590
      %v592 = vpop.f32.mrb[0].mxu0
      %v593 = vpop.f32.mrb[0].mxu0
      %v594 = vpop.f32.mrb[0].mxu0
      %595 = vdwg.mxu0
      %597 = vset.pattern.permute.xlu0 0
      %598 = vperm.xlu0 %597, %v550
      %v599 = vpop.permute.xlu0 %598
      %v601 = vmul.f32 %v591, %v599
      %603 = vset.pattern.permute.xlu0 0
      %604 = vperm.xlu0 %603, %v551
      %v605 = vpop.permute.xlu0 %604
      %v607 = vadd.f32 %v601, %v605
      %608 = vst [vmem:[%s278] sm:$0xff] %v607
      %v609 = vld [vmem:[%s429] sm:$0xff]
      %610 = vmatprep.subr.bf16.mxu0 0
      %611 = vmatpush1.bf16.msra.mxu0 %v609
      %612 = vmatprep.subr.bf16.mxu0 0
      %613 = vmatpush1.bf16.msra.mxu0 0
      %614 = vmatprep.subr.bf16.mxu0 0
      %615 = vmatpush1.bf16.msra.mxu0 0
      %616 = vmatprep.subr.bf16.mxu0 0
      %617 = vmatpush1.bf16.msra.mxu0 0
      %618 = vmatprep.subr.bf16.mxu0 0
      %619 = vmatpush1.bf16.msra.mxu0 0
      %620 = vmatprep.subr.bf16.mxu0 0
      %621 = vmatpush1.bf16.msra.mxu0 0
      %622 = vmatprep.subr.bf16.mxu0 0
      %623 = vmatpush1.bf16.msra.mxu0 0
      %624 = vmatprep.subr.bf16.mxu0 0
      %625 = vmatpush1.bf16.msra.mxu0 0
      %626 = vmatprep.subr.bf16.mxu0 0
      %627 = vmatpush1.bf16.msra.mxu0 0
      %628 = vmatprep.subr.bf16.mxu0 0
      %629 = vmatpush1.bf16.msra.mxu0 0
      %630 = vmatprep.subr.bf16.mxu0 0
      %631 = vmatpush1.bf16.msra.mxu0 0
      %632 = vmatprep.subr.bf16.mxu0 0
      %633 = vmatpush1.bf16.msra.mxu0 0
      %634 = vmatprep.subr.bf16.mxu0 0
      %635 = vmatpush1.bf16.msra.mxu0 0
      %636 = vmatprep.subr.bf16.mxu0 0
      %637 = vmatpush1.bf16.msra.mxu0 0
      %638 = vmatprep.subr.bf16.mxu0 0
      %639 = vmatpush1.bf16.msra.mxu0 0
      %640 = vmatprep.subr.bf16.mxu0 0
      %641 = vmatpush1.bf16.msra.mxu0 0
      %642 = vmatprep.mubr.bf16.mxu0 0
      %643 = vmatmul.mubr.bf16.gmra.mrb[0].mxu0 %v554
      %v644 = vpop.f32.mrb[0].mxu0
      %v645 = vadd.f32 0.0, %v644
      %v646 = vpop.f32.mrb[0].mxu0
      %v647 = vpop.f32.mrb[0].mxu0
      %v648 = vpop.f32.mrb[0].mxu0
      %649 = vdwg.mxu0
      %v650 = vmul.f32 %v645, %v599
      %v651 = vadd.f32 %v650, %v605
      %s652 = scalar_lea.vmem %s278, 8
      %653 = vst [vmem:[%s652] sm:$0xff] %v651
      %v654 = vld [vmem:[%s488] sm:$0xff]
      %655 = vmatprep.subr.bf16.mxu0 0
      %656 = vmatpush1.bf16.msra.mxu0 %v654
      %657 = vmatprep.subr.bf16.mxu0 0
      %658 = vmatpush1.bf16.msra.mxu0 0
      %659 = vmatprep.subr.bf16.mxu0 0
      %660 = vmatpush1.bf16.msra.mxu0 0
      %661 = vmatprep.subr.bf16.mxu0 0
      %662 = vmatpush1.bf16.msra.mxu0 0
      %663 = vmatprep.subr.bf16.mxu0 0
      %664 = vmatpush1.bf16.msra.mxu0 0
      %665 = vmatprep.subr.bf16.mxu0 0
      %666 = vmatpush1.bf16.msra.mxu0 0
      %667 = vmatprep.subr.bf16.mxu0 0
      %668 = vmatpush1.bf16.msra.mxu0 0
      %669 = vmatprep.subr.bf16.mxu0 0
      %670 = vmatpush1.bf16.msra.mxu0 0
      %671 = vmatprep.subr.bf16.mxu0 0
      %672 = vmatpush1.bf16.msra.mxu0 0
      %673 = vmatprep.subr.bf16.mxu0 0
      %674 = vmatpush1.bf16.msra.mxu0 0
      %675 = vmatprep.subr.bf16.mxu0 0
      %676 = vmatpush1.bf16.msra.mxu0 0
      %677 = vmatprep.subr.bf16.mxu0 0
      %678 = vmatpush1.bf16.msra.mxu0 0
      %679 = vmatprep.subr.bf16.mxu0 0
      %680 = vmatpush1.bf16.msra.mxu0 0
      %681 = vmatprep.subr.bf16.mxu0 0
      %682 = vmatpush1.bf16.msra.mxu0 0
      %683 = vmatprep.subr.bf16.mxu0 0
      %684 = vmatpush1.bf16.msra.mxu0 0
      %685 = vmatprep.subr.bf16.mxu0 0
      %686 = vmatpush1.bf16.msra.mxu0 0
      %687 = vmatprep.mubr.bf16.mxu0 0
      %688 = vmatmul.mubr.bf16.gmra.mrb[0].mxu0 %v554
      %v689 = vpop.f32.mrb[0].mxu0
      %v690 = vadd.f32 0.0, %v689
      %v691 = vpop.f32.mrb[0].mxu0
      %v692 = vpop.f32.mrb[0].mxu0
      %v693 = vpop.f32.mrb[0].mxu0
      %694 = vdwg.mxu0
      %v695 = vmul.f32 %v690, %v599
      %v696 = vadd.f32 %v695, %v605
      %s697 = scalar_lea.vmem %s278, 16
      %698 = vst [vmem:[%s697] sm:$0xff] %v696
      %v699 = vld [vmem:[%s547] sm:$0xff]
      %700 = vmatprep.subr.bf16.mxu0 0
      %701 = vmatpush1.bf16.msra.mxu0 %v699
      %702 = vmatprep.subr.bf16.mxu0 0
      %703 = vmatpush1.bf16.msra.mxu0 0
      %704 = vmatprep.subr.bf16.mxu0 0
      %705 = vmatpush1.bf16.msra.mxu0 0
      %706 = vmatprep.subr.bf16.mxu0 0
      %707 = vmatpush1.bf16.msra.mxu0 0
      %708 = vmatprep.subr.bf16.mxu0 0
      %709 = vmatpush1.bf16.msra.mxu0 0
      %710 = vmatprep.subr.bf16.mxu0 0
      %711 = vmatpush1.bf16.msra.mxu0 0
      %712 = vmatprep.subr.bf16.mxu0 0
      %713 = vmatpush1.bf16.msra.mxu0 0
      %714 = vmatprep.subr.bf16.mxu0 0
      %715 = vmatpush1.bf16.msra.mxu0 0
      %716 = vmatprep.subr.bf16.mxu0 0
      %717 = vmatpush1.bf16.msra.mxu0 0
      %718 = vmatprep.subr.bf16.mxu0 0
      %719 = vmatpush1.bf16.msra.mxu0 0
      %720 = vmatprep.subr.bf16.mxu0 0
      %721 = vmatpush1.bf16.msra.mxu0 0
      %722 = vmatprep.subr.bf16.mxu0 0
      %723 = vmatpush1.bf16.msra.mxu0 0
      %724 = vmatprep.subr.bf16.mxu0 0
      %725 = vmatpush1.bf16.msra.mxu0 0
      %726 = vmatprep.subr.bf16.mxu0 0
      %727 = vmatpush1.bf16.msra.mxu0 0
      %728 = vmatprep.subr.bf16.mxu0 0
      %729 = vmatpush1.bf16.msra.mxu0 0
      %730 = vmatprep.subr.bf16.mxu0 0
      %731 = vmatpush1.bf16.msra.mxu0 0
      %732 = vmatprep.mubr.bf16.mxu0 0
      %733 = vmatmul.mubr.bf16.gmra.mrb[0].mxu0 %v554
      %v734 = vpop.f32.mrb[0].mxu0
      %v735 = vadd.f32 0.0, %v734
      %v736 = vpop.f32.mrb[0].mxu0
      %v737 = vpop.f32.mrb[0].mxu0
      %v738 = vpop.f32.mrb[0].mxu0
      %739 = vdwg.mxu0
      %v740 = vmul.f32 %v735, %v599
      %v741 = vadd.f32 %v740, %v605
      %s742 = scalar_lea.vmem %s278, 24
      %743 = vst [vmem:[%s742] sm:$0xff] %v741
      %p744 = scmp.lt.s32.totalorder %s18, 1
      %s745 = scalar_select %p744, %s18, 1
      %s746 = smul.addr %s745, 4
      %s747 = smul.addr %s746, 8
      %s748 = scalar_lea.vmem %s7, %s747
      // Predicated region
      $region49: #{res_block_forward.3} parent=47 // pred_check
        %p749 = pneg %p188
      $region50: #{res_block_forward.3} parent=47 // pred_check_branch
        %751 = sbr.rel (%p749) target = $region52
      $region51: #{res_block_forward.3} parent=47 // pred_region
        _
      $region52: #{res_block_forward.3} parent=47 // pred_fallthru
        _
    $region48: #{res_block_forward.3} parent=5 // pred_fallthru
      _
    %p752 = scmp.le.s32.totalorder 2, %s13
    // Predicated region
    $region53: #{res_block_forward.3} parent=5 // pred_check
      %p753 = pneg %p752
    $region54: #{res_block_forward.3} parent=5 // pred_check_branch
      %755 = sbr.rel (%p753) target = $region56
    $region55: #{res_block_forward.3} parent=5 // pred_region
      %s756 = ssub.s32 %s13, 2
      // Predicated region
      $region57: #{res_block_forward.3} parent=55 // pred_check
        %p757 = pneg %p194
      $region58: #{res_block_forward.3} parent=55 // pred_check_branch
        %759 = sbr.rel (%p757) target = $region60
      $region59: #{res_block_forward.3} parent=55 // pred_region
        %p760 = scmp.lt.s32.totalorder %s19, 1
        %s761 = scalar_select %p760, %s19, 1
        %s762 = smul.addr %s761, 4
        %s763 = smul.addr %s762, 8
        %s764 = scalar_lea.vmem %s7, %s763
      $region60: #{res_block_forward.3} parent=55 // pred_fallthru
        _
    $region56: #{res_block_forward.3} parent=5 // pred_fallthru
      _
  $region6: #{res_block_forward.3} parent=0 // loop_footer
    %s17 = sadd.s32 1, %s13
  $region7: #{res_block_forward.3} parent=0 // loop_footer_branch
    %12 = sbr.rel target = $region3
  $region8: #{res_block_forward.3} parent=0 // loop_exit
    _

// kernel: res_block_forward.4
$region0: #{res_block_forward.4}
  #allocation0 [shape = 'u32[]', space=smem, size = 0x4, offset = 0x4, fixed_abs, tag = 'smem constant byte address 0x4 - core index']
  #allocation1 [shape = 'u32[144,128]{1,0:T(1,128)}', space=vmem, size = 0x12000, scoped, tag = 'internal scratch']
  #allocation2 [shape = 'bf16[10,16,128]{2,1,0:T(16,128)(2,1)}', space=vmem, size = 0xa000, scoped, tag = 'scratch operand']
  %s0 = inlined_call_operand.vmem [shape: bf16[2,8,64,256], index: 0, kind: input, shape index: {}]
  %s1 = inlined_call_operand.vmem [shape: bf16[16,144], index: 1, kind: input, shape index: {}]
  %s2 = inlined_call_operand.vmem [shape: f32[16,1], index: 2, kind: input, shape index: {}]
  %s3 = inlined_call_operand.vmem [shape: f32[16,1], index: 3, kind: input, shape index: {}]
  %s4 = inlined_call_operand.vmem [shape: bf16[8,48], index: 4, kind: input, shape index: {}]
  %s5 = inlined_call_operand.vmem [shape: f32[8,1], index: 5, kind: input, shape index: {}]
  %s6 = inlined_call_operand.vmem [shape: f32[8,1], index: 6, kind: input, shape index: {}]
  %s7 = inlined_call_operand.vmem [shape: f32[2,4,8,128], index: 7, kind: output, shape index: {}]
  %s8 = sld [smem:[#allocation0]]
  $region61: #{res_block_forward.4} parent=0
    _
  %s10 = ssub.s32 1, %s8
  %s11 = scalar_select 0, %s10, %s8
  loop: start=0, step=1, limit=4
  $region2: #{res_block_forward.4} parent=0 // loop_pre_header
    _
  $region3: #{res_block_forward.4} parent=0 // loop_header
    %s13 = sphi 0, %s17
    %p14 = scmp.ge.s32.totalorder %s13, 4
    %s23 = sphi 0, %s25
    %s26 = sphi 0, %s23
    %s27 = sphi 0, %s26
    %s43 = sphi 0, %s27
    %s47 = sphi 0, %s47
    %s49 = sphi 0, %s47
    %s50 = sphi 0, %s49
    %s64 = sphi 0, %s50
    %s68 = sphi 0, %s68
    %s70 = sphi 0, %s68
    %s71 = sphi 0, %s70
    %s85 = sphi 0, %s71
    %s89 = sphi 0, %s89
    %s91 = sphi 0, %s89
    %s92 = sphi 0, %s91
    %s106 = sphi 0, %s92
    %s110 = sphi 0, %s110
    %s112 = sphi 0, %s110
    %s113 = sphi 0, %s112
    %s127 = sphi 0, %s113
    %s131 = sphi 0, %s131
    %s133 = sphi 0, %s131
    %s134 = sphi 0, %s133
    %s148 = sphi 0, %s134
    %s152 = sphi 0, %s152
    %s154 = sphi 0, %s152
    %s155 = sphi 0, %s154
    %s169 = sphi 0, %s155
    %s175 = sphi 0, %s177
    %s178 = sphi 0, %s175
    %s179 = sphi 0, %s178
    %s195 = sphi 0, %s179
  $region4: #{res_block_forward.4} parent=0 // loop_header_branch
    %16 = sbr.rel (%p14) target = $region8
  $region5: #{res_block_forward.4} parent=0 // loop_body
    %s18 = ssub.s32 %s13, 1
    %s19 = ssub.s32 %s13, 2
    %s20 = sadd.s32 %s13, 1
    %s21 = ssub.s32 %s13, %s20
    %p22 = scmp.eq.s32.totalorder %s21, 0
    %s24 = sadd.s32 %s23, 1
    %s25 = scalar_select %p22, %s23, %s24
    %p28 = pneg %p22
    %p29 = scmp.eq.s32.totalorder %s13, 1
    %p30 = por %p28, %p29
    %p31 = scmp.ne.s32.totalorder %s23, %s26
    %p32 = scmp.eq.s32.totalorder %s13, 0
    %p33 = por %p31, %p32
    %p34 = scmp.ne.s32.totalorder %s23, %s26
    %p35 = scmp.eq.s32.totalorder %s18, 1
    %p36 = por %p34, %p35
    %p37 = scmp.ne.s32.totalorder %s26, %s27
    %p38 = scmp.eq.s32.totalorder %s18, 0
    %p39 = por %p37, %p38
    %p40 = scmp.ne.s32.totalorder %s26, %s27
    %p41 = scmp.eq.s32.totalorder %s19, 1
    %p42 = por %p40, %p41
    %p44 = scmp.ne.s32.totalorder %s27, %s43
    %p45 = scmp.eq.s32.totalorder %s19, 0
    %p46 = por %p44, %p45
    %s48 = sadd.s32 %s47, 1
    %p51 = scmp.eq.s32.totalorder %s13, 1
    %p52 = scmp.ne.s32.totalorder %s47, %s49
    %p53 = scmp.eq.s32.totalorder %s13, 0
    %p54 = por %p52, %p53
    %p55 = scmp.ne.s32.totalorder %s47, %s49
    %p56 = scmp.eq.s32.totalorder %s18, 1
    %p57 = por %p55, %p56
    %p58 = scmp.ne.s32.totalorder %s49, %s50
    %p59 = scmp.eq.s32.totalorder %s18, 0
    %p60 = por %p58, %p59
    %p61 = scmp.ne.s32.totalorder %s49, %s50
    %p62 = scmp.eq.s32.totalorder %s19, 1
    %p63 = por %p61, %p62
    %p65 = scmp.ne.s32.totalorder %s50, %s64
    %p66 = scmp.eq.s32.totalorder %s19, 0
    %p67 = por %p65, %p66
    %s69 = sadd.s32 %s68, 1
    %p72 = scmp.eq.s32.totalorder %s13, 1
    %p73 = scmp.ne.s32.totalorder %s68, %s70
    %p74 = scmp.eq.s32.totalorder %s13, 0
    %p75 = por %p73, %p74
    %p76 = scmp.ne.s32.totalorder %s68, %s70
    %p77 = scmp.eq.s32.totalorder %s18, 1
    %p78 = por %p76, %p77
    %p79 = scmp.ne.s32.totalorder %s70, %s71
    %p80 = scmp.eq.s32.totalorder %s18, 0
    %p81 = por %p79, %p80
    %p82 = scmp.ne.s32.totalorder %s70, %s71
    %p83 = scmp.eq.s32.totalorder %s19, 1
    %p84 = por %p82, %p83
    %p86 = scmp.ne.s32.totalorder %s71, %s85
    %p87 = scmp.eq.s32.totalorder %s19, 0
    %p88 = por %p86, %p87
    %s90 = sadd.s32 %s89, 1
    %p93 = scmp.eq.s32.totalorder %s13, 1
    %p94 = scmp.ne.s32.totalorder %s89, %s91
    %p95 = scmp.eq.s32.totalorder %s13, 0
    %p96 = por %p94, %p95
    %p97 = scmp.ne.s32.totalorder %s89, %s91
    %p98 = scmp.eq.s32.totalorder %s18, 1
    %p99 = por %p97, %p98
    %p100 = scmp.ne.s32.totalorder %s91, %s92
    %p101 = scmp.eq.s32.totalorder %s18, 0
    %p102 = por %p100, %p101
    %p103 = scmp.ne.s32.totalorder %s91, %s92
    %p104 = scmp.eq.s32.totalorder %s19, 1
    %p105 = por %p103, %p104
    %p107 = scmp.ne.s32.totalorder %s92, %s106
    %p108 = scmp.eq.s32.totalorder %s19, 0
    %p109 = por %p107, %p108
    %s111 = sadd.s32 %s110, 1
    %p114 = scmp.eq.s32.totalorder %s13, 1
    %p115 = scmp.ne.s32.totalorder %s110, %s112
    %p116 = scmp.eq.s32.totalorder %s13, 0
    %p117 = por %p115, %p116
    %p118 = scmp.ne.s32.totalorder %s110, %s112
    %p119 = scmp.eq.s32.totalorder %s18, 1
    %p120 = por %p118, %p119
    %p121 = scmp.ne.s32.totalorder %s112, %s113
    %p122 = scmp.eq.s32.totalorder %s18, 0
    %p123 = por %p121, %p122
    %p124 = scmp.ne.s32.totalorder %s112, %s113
    %p125 = scmp.eq.s32.totalorder %s19, 1
    %p126 = por %p124, %p125
    %p128 = scmp.ne.s32.totalorder %s113, %s127
    %p129 = scmp.eq.s32.totalorder %s19, 0
    %p130 = por %p128, %p129
    %s132 = sadd.s32 %s131, 1
    %p135 = scmp.eq.s32.totalorder %s13, 1
    %p136 = scmp.ne.s32.totalorder %s131, %s133
    %p137 = scmp.eq.s32.totalorder %s13, 0
    %p138 = por %p136, %p137
    %p139 = scmp.ne.s32.totalorder %s131, %s133
    %p140 = scmp.eq.s32.totalorder %s18, 1
    %p141 = por %p139, %p140
    %p142 = scmp.ne.s32.totalorder %s133, %s134
    %p143 = scmp.eq.s32.totalorder %s18, 0
    %p144 = por %p142, %p143
    %p145 = scmp.ne.s32.totalorder %s133, %s134
    %p146 = scmp.eq.s32.totalorder %s19, 1
    %p147 = por %p145, %p146
    %p149 = scmp.ne.s32.totalorder %s134, %s148
    %p150 = scmp.eq.s32.totalorder %s19, 0
    %p151 = por %p149, %p150
    %s153 = sadd.s32 %s152, 1
    %p156 = scmp.eq.s32.totalorder %s13, 1
    %p157 = scmp.ne.s32.totalorder %s152, %s154
    %p158 = scmp.eq.s32.totalorder %s13, 0
    %p159 = por %p157, %p158
    %p160 = scmp.ne.s32.totalorder %s152, %s154
    %p161 = scmp.eq.s32.totalorder %s18, 1
    %p162 = por %p160, %p161
    %p163 = scmp.ne.s32.totalorder %s154, %s155
    %p164 = scmp.eq.s32.totalorder %s18, 0
    %p165 = por %p163, %p164
    %p166 = scmp.ne.s32.totalorder %s154, %s155
    %p167 = scmp.eq.s32.totalorder %s19, 1
    %p168 = por %p166, %p167
    %p170 = scmp.ne.s32.totalorder %s155, %s169
    %p171 = scmp.eq.s32.totalorder %s19, 0
    %p172 = por %p170, %p171
    %s173 = ssub.s32 %s13, %s20
    %p174 = scmp.eq.s32.totalorder %s173, 0
    %s176 = sadd.s32 %s175, 1
    %s177 = scalar_select %p174, %s175, %s176
    %p180 = pneg %p174
    %p181 = scmp.eq.s32.totalorder %s13, 1
    %p182 = por %p180, %p181
    %p183 = scmp.ne.s32.totalorder %s175, %s178
    %p184 = scmp.eq.s32.totalorder %s13, 0
    %p185 = por %p183, %p184
    %p186 = scmp.ne.s32.totalorder %s175, %s178
    %p187 = scmp.eq.s32.totalorder %s18, 1
    %p188 = por %p186, %p187
    %p189 = scmp.ne.s32.totalorder %s178, %s179
    %p190 = scmp.eq.s32.totalorder %s18, 0
    %p191 = por %p189, %p190
    %p192 = scmp.ne.s32.totalorder %s178, %s179
    %p193 = scmp.eq.s32.totalorder %s19, 1
    %p194 = por %p192, %p193
    %p196 = scmp.ne.s32.totalorder %s179, %s195
    %p197 = scmp.eq.s32.totalorder %s19, 0
    %p198 = por %p196, %p197
    %p199 = scmp.le.s32.totalorder 1, %s13
    %p200 = scmp.lt.s32.totalorder %s13, 3
    %p201 = pnand %p199, %p200
    %p202 = pneg %p201
    // Predicated region
    $region9: #{res_block_forward.4} parent=5 // pred_check
      _
    $region10: #{res_block_forward.4} parent=5 // pred_check_branch
      %204 = sbr.rel (%p201) target = $region12
    $region11: #{res_block_forward.4} parent=5 // pred_region
      %s205 = ssub.s32 %s13, 1
      // Predicated region
      $region13: #{res_block_forward.4} parent=11 // pred_check
        %p206 = pneg %p60
      $region14: #{res_block_forward.4} parent=11 // pred_check_branch
        %208 = sbr.rel (%p206) target = $region16
      $region15: #{res_block_forward.4} parent=11 // pred_region
        _
      $region16: #{res_block_forward.4} parent=11 // pred_fallthru
        _
      // Predicated region
      $region17: #{res_block_forward.4} parent=11 // pred_check
        %p209 = pneg %p81
      $region18: #{res_block_forward.4} parent=11 // pred_check_branch
        %211 = sbr.rel (%p209) target = $region20
      $region19: #{res_block_forward.4} parent=11 // pred_region
        _
      $region20: #{res_block_forward.4} parent=11 // pred_fallthru
        _
      // Predicated region
      $region21: #{res_block_forward.4} parent=11 // pred_check
        %p212 = pneg %p102
      $region22: #{res_block_forward.4} parent=11 // pred_check_branch
        %214 = sbr.rel (%p212) target = $region24
      $region23: #{res_block_forward.4} parent=11 // pred_region
        _
      $region24: #{res_block_forward.4} parent=11 // pred_fallthru
        _
      // Predicated region
      $region25: #{res_block_forward.4} parent=11 // pred_check
        %p215 = pneg %p123
      $region26: #{res_block_forward.4} parent=11 // pred_check_branch
        %217 = sbr.rel (%p215) target = $region28
      $region27: #{res_block_forward.4} parent=11 // pred_region
        _
      $region28: #{res_block_forward.4} parent=11 // pred_fallthru
        _
      // Predicated region
      $region29: #{res_block_forward.4} parent=11 // pred_check
        %p218 = pneg %p144
      $region30: #{res_block_forward.4} parent=11 // pred_check_branch
        %220 = sbr.rel (%p218) target = $region32
      $region31: #{res_block_forward.4} parent=11 // pred_region
        _
      $region32: #{res_block_forward.4} parent=11 // pred_fallthru
        _
      // Predicated region
      $region33: #{res_block_forward.4} parent=11 // pred_check
        %p221 = pneg %p165
      $region34: #{res_block_forward.4} parent=11 // pred_check_branch
        %223 = sbr.rel (%p221) target = $region36
      $region35: #{res_block_forward.4} parent=11 // pred_region
        _
      $region36: #{res_block_forward.4} parent=11 // pred_fallthru
        _
    $region12: #{res_block_forward.4} parent=5 // pred_fallthru
      _
    %p224 = scmp.lt.s32.totalorder %s13, 2
    // Predicated region
    $region37: #{res_block_forward.4} parent=5 // pred_check
      %p225 = pneg %p224
    $region38: #{res_block_forward.4} parent=5 // pred_check_branch
      %227 = sbr.rel (%p225) target = $region40
    $region39: #{res_block_forward.4} parent=5 // pred_region
      // Predicated region
      $region41: #{res_block_forward.4} parent=39 // pred_check
        %p228 = pneg %p33
      $region42: #{res_block_forward.4} parent=39 // pred_check_branch
        %230 = sbr.rel (%p228) target = $region44
      $region43: #{res_block_forward.4} parent=39 // pred_region
        %p231 = scmp.lt.s32.totalorder %s13, 1
        %s232 = scalar_select %p231, %s13, 1
        %s233 = smul.addr %s232, 128
        %s234 = smul.addr %s233, 4
        %s235 = scalar_lea.vmem %s0, %s234
      $region44: #{res_block_forward.4} parent=39 // pred_fallthru
        _
    $region40: #{res_block_forward.4} parent=5 // pred_fallthru
      _
    %p236 = scmp.le.s32.totalorder 1, %s13
    %p237 = scmp.lt.s32.totalorder %s13, 3
    %p238 = pnand %p236, %p237
    %p239 = pneg %p238
    // Predicated region
    $region45: #{res_block_forward.4} parent=5 // pred_check
      _
    $region46: #{res_block_forward.4} parent=5 // pred_check_branch
      %241 = sbr.rel (%p238) target = $region48
    $region47: #{res_block_forward.4} parent=5 // pred_region
      %s242 = ssub.s32 %s13, 1
      %p243 = scmp.lt.s32.totalorder %s18, 1
      %s244 = scalar_select %p243, %s18, 1
      %s245 = smul.addr %s244, 128
      %s246 = smul.addr %s245, 4
      %s247 = scalar_lea.vmem %s0, %s246
      %p248 = pneg %p39
      %p249 = pneg %p36
      %p250 = pneg %p60
      %p251 = pneg %p57
      %p252 = pneg %p81
      %p253 = pneg %p78
      %p254 = pneg %p102
      %p255 = pneg %p99
      %p256 = pneg %p123
      %p257 = pneg %p120
      %p258 = pneg %p144
      %p259 = pneg %p141
      %p260 = pneg %p165
      %p261 = pneg %p162
      %p262 = pneg %p191
      %p263 = pneg %p188
      %p264 = scmp.lt.s32.totalorder %s18, 1
      %s265 = scalar_select %p264, %s18, 1
      %s266 = smul.addr %s265, 4
      %s267 = smul.addr %s266, 8
      %s268 = scalar_lea.vmem %s7, %s267
      %p269 = scmp.lt.s32.totalorder %s18, 1
      %s270 = scalar_select %p269, %s18, 1
      %s271 = smul.addr %s270, 128
      %s272 = smul.addr %s271, 4
      %s273 = scalar_lea.vmem %s0, %s272
      %p274 = scmp.lt.s32.totalorder %s18, 1
      %s275 = scalar_select %p274, %s18, 1
      %s276 = smul.addr %s275, 4
      %s277 = smul.addr %s276, 8
      %s278 = scalar_lea.vmem %s7, %s277
      %v280 = vld [vmem:[%s1] sm:$0xff]
      %v281 = vld [vmem:[%s1 + $0x8] sm:$0xff]
      %v282 = vld [vmem:[%s2] sm:$0xff]
      %v283 = vld [vmem:[%s2 + $0x8] sm:$0xff]
      %v284 = vld [vmem:[%s3] sm:$0xff]
      %v285 = vld [vmem:[%s3 + $0x8] sm:$0xff]
      %286 = vst [vmem:[#allocation2] sm:$0xff] 0
      %s287 = scalar_lea.vmem [#allocation2], 72
      %288 = vst [vmem:[%s287] sm:$0xff] 0
      %v289 = vld [vmem:[%s273] sm:$0xf]
      %v290 = vld [vmem:[%s273 + $0x8] sm:$0xf]
      %v291 = vld [vmem:[%s273 + $0x10] sm:$0xf]
      %v292 = vld [vmem:[%s273 + $0x18] sm:$0xf]
      %v293 = vld [vmem:[%s273] sm:$0xff]
      %v294 = vld [vmem:[%s273 + $0x8] sm:$0xff]
      %v295 = vld [vmem:[%s273 + $0x20] sm:$0xf]
      %v296 = vld [vmem:[%s273 + $0x28] sm:$0xf]
      %v297 = vld [vmem:[%s273 + $0x30] sm:$0xf]
      %v298 = vld [vmem:[%s273 + $0x38] sm:$0xf]
      %v299 = vld [vmem:[%s273 + $0x20] sm:$0xff]
      %v300 = vld [vmem:[%s273 + $0x28] sm:$0xff]
      %v301 = vld [vmem:[%s273 + $0x10] sm:$0xff]
      %v302 = vld [vmem:[%s273 + $0x18] sm:$0xff]
      %v305 = vunpack.c.l.b16 %v289
      %v306 = vunpack.c.l.b16 %v290
      %v307 = vpack.c.b16 %v306, %v305
      %v311 = vunpack.c.l.b16 %v291
      %v312 = vunpack.c.l.b16 %v292
      %v313 = vpack.c.b16 %v312, %v311
      %v317 = vunpack.c.l.b16 %v293
      %v318 = vunpack.c.h.b16 %v293
      %v319 = vunpack.c.l.b16 %v294
      %v320 = vunpack.c.h.b16 %v294
      %v321 = vpack.c.b16 %v319, %v317
      %v322 = vpack.c.b16 %v320, %v318
      %323 = vrot.lane.b32.xlu0 %v321, 127
      %v324 = vpop.permute.xlu0 %323
      %325 = vrot.lane.b32.xlu0 %v322, 127
      %v326 = vpop.permute.xlu0 %325
      %vm327 = vcmask 1039360
      %v328 = vsel %vm327, %v324, %v326
      %v332 = vunpack.c.l.b16 %v295
      %v333 = vunpack.c.l.b16 %v296
      %v334 = vpack.c.b16 %v333, %v332
      %v338 = vunpack.c.l.b16 %v297
      %v339 = vunpack.c.l.b16 %v298
      %v340 = vpack.c.b16 %v339, %v338
      %v344 = vunpack.c.l.b16 %v299
      %v345 = vunpack.c.h.b16 %v299
      %v346 = vunpack.c.l.b16 %v300
      %v347 = vunpack.c.h.b16 %v300
      %v348 = vpack.c.b16 %v346, %v344
      %v349 = vpack.c.b16 %v347, %v345
      %350 = vrot.lane.b32.xlu0 %v348, 127
      %v351 = vpop.permute.xlu0 %350
      %352 = vrot.lane.b32.xlu0 %v349, 127
      %v353 = vpop.permute.xlu0 %352
      %v354 = vsel %vm327, %v351, %v353
      %356 = vrot.lane.b32.xlu0 %v321, 119
      %v357 = vpop.permute.xlu0 %356
      %358 = vrot.lane.b32.xlu0 %v322, 119
      %v359 = vpop.permute.xlu0 %358
      %vm360 = vcmask 973824
      %v361 = vsel %vm360, %v357, %v359
      %v365 = vunpack.c.l.b16 %v301
      %v366 = vunpack.c.h.b16 %v301
      %v367 = vunpack.c.l.b16 %v302
      %v368 = vunpack.c.h.b16 %v302
      %v369 = vpack.c.b16 %v367, %v365
      %v370 = vpack.c.b16 %v368, %v366
      %371 = vrot.lane.b32.xlu0 %v369, 119
      %v372 = vpop.permute.xlu0 %371
      %373 = vrot.lane.b32.xlu0 %v370, 119
      %v374 = vpop.permute.xlu0 %373
      %v375 = vsel %vm360, %v372, %v374
      %377 = vrot.lane.b32.xlu0 %v321, 118
      %v378 = vpop.permute.xlu0 %377
      %379 = vrot.lane.b32.xlu0 %v322, 118
      %v380 = vpop.permute.xlu0 %379
      %vm381 = vcmask 965632
      %v382 = vsel %vm381, %v378, %v380
      %v386 = vunpack.c.l.b16 %v280
      %v387 = vunpack.c.h.b16 %v280
      %v388 = vunpack.c.l.b16 %v281
      %v389 = vunpack.c.h.b16 %v281
      %v390 = vpack.c.b16 %v388, %v386
      %v391 = vpack.c.b16 %v389, %v387
      %vm393 = vcmask 130048
      %v395 = vsel %vm393, %v391, 0
      %397 = vmatprep.subr.bf16.mxu0 0
      %398 = vmatpush1.bf16.msra.mxu0 %v307
      %399 = vmatprep.subr.bf16.mxu0 0
      %400 = vmatpush1.bf16.msra.mxu0 %v313
      %401 = vmatprep.subr.bf16.mxu0 0
      %402 = vmatpush1.bf16.msra.mxu0 %v328
      %403 = vmatprep.subr.bf16.mxu0 0
      %404 = vmatpush1.bf16.msra.mxu0 %v334
      %405 = vmatprep.subr.bf16.mxu0 0
      %406 = vmatpush1.bf16.msra.mxu0 %v340
      %407 = vmatprep.subr.bf16.mxu0 0
      %408 = vmatpush1.bf16.msra.mxu0 %v354
      %409 = vmatprep.subr.bf16.mxu0 0
      %410 = vmatpush1.bf16.msra.mxu0 %v361
      %411 = vmatprep.subr.bf16.mxu0 0
      %412 = vmatpush1.bf16.msra.mxu0 %v375
      %413 = vmatprep.subr.bf16.mxu0 0
      %414 = vmatpush1.bf16.msra.mxu0 %v382
      %415 = vmatprep.subr.bf16.mxu0 0
      %416 = vmatpush1.bf16.msra.mxu0 0
      %417 = vmatprep.subr.bf16.mxu0 0
      %418 = vmatpush1.bf16.msra.mxu0 0
      %419 = vmatprep.subr.bf16.mxu0 0
      %420 = vmatpush1.bf16.msra.mxu0 0
      %421 = vmatprep.subr.bf16.mxu0 0
      %422 = vmatpush1.bf16.msra.mxu0 0
      %423 = vmatprep.subr.bf16.mxu0 0
      %424 = vmatpush1.bf16.msra.mxu0 0
      %425 = vmatprep.subr.bf16.mxu0 0
      %426 = vmatpush1.bf16.msra.mxu0 0
      %427 = vmatprep.subr.bf16.mxu0 0
      %428 = vmatpush1.bf16.msra.mxu0 0
      %429 = vmatprep.mubr.bf16.mxu0 %v395
      %430 = vmatmul.mubr.bf16.gmra.mrb[0].mxu0 %v390
      %v431 = vpop.f32.mrb[0].mxu0
      %v432 = vadd.f32 0.0, %v431
      %v433 = vpop.f32.mrb[0].mxu0
      %v434 = vpop.f32.mrb[0].mxu0
      %v435 = vadd.f32 0.0, %v434
      %v436 = vpop.f32.mrb[0].mxu0
      %437 = vdwg.mxu0
      %439 = vset.pattern.permute.xlu0 0
      %440 = vperm.xlu0 %439, %v282
      %v441 = vpop.permute.xlu0 %440
      %444 = vset.pattern.permute.xlu0 0
      %445 = vperm.xlu0 %444, %v283
      %v446 = vpop.permute.xlu0 %445
      %v448 = vmul.f32 %v432, %v441
      %v449 = vmul.f32 %v435, %v446
      %451 = vset.pattern.permute.xlu0 0
      %452 = vperm.xlu0 %451, %v284
      %v453 = vpop.permute.xlu0 %452
      %456 = vset.pattern.permute.xlu0 0
      %457 = vperm.xlu0 %456, %v285
      %v458 = vpop.permute.xlu0 %457
      %v460 = vadd.f32 %v448, %v453
      %v461 = vadd.f32 %v449, %v458
      %v462 = vmax.f32 %v460, 0.0
      %v463 = vmax.f32 %v461, 0.0
      %v464 = vpack.c.bf16 %v463, %v462
      %s465 = scalar_lea.vmem [#allocation2], 8
      %466 = vst [vmem:[%s465] sm:$0xff] %v464
      %s467 = scalar_lea.vmem %s273, 64
      %v468 = vld [vmem:[%s467] sm:$0xf]
      %v469 = vld [vmem:[%s467 + $0x8] sm:$0xf]
      %v470 = vld [vmem:[%s467 + $0x10] sm:$0xf]
      %v471 = vld [vmem:[%s467 + $0x18] sm:$0xf]
      %v472 = vld [vmem:[%s467] sm:$0xff]
      %v473 = vld [vmem:[%s467 + $0x8] sm:$0xff]
      %v474 = vld [vmem:[%s467 + $0x20] sm:$0xf]
      %v475 = vld [vmem:[%s467 + $0x28] sm:$0xf]
      %v476 = vld [vmem:[%s467 + $0x30] sm:$0xf]
      %v477 = vld [vmem:[%s467 + $0x38] sm:$0xf]
      %v478 = vld [vmem:[%s467 + $0x20] sm:$0xff]
      %v479 = vld [vmem:[%s467 + $0x28] sm:$0xff]
      %v480 = vld [vmem:[%s467 + $0x10] sm:$0xff]
      %v481 = vld [vmem:[%s467 + $0x18] sm:$0xff]
      %v484 = vunpack.c.l.b16 %v468
      %v485 = vunpack.c.l.b16 %v469
      %v486 = vpack.c.b16 %v485, %v484
      %v490 = vunpack.c.l.b16 %v470
      %v491 = vunpack.c.l.b16 %v471
      %v492 = vpack.c.b16 %v491, %v490
      %v496 = vunpack.c.l.b16 %v472
      %v497 = vunpack.c.h.b16 %v472
      %v498 = vunpack.c.l.b16 %v473
      %v499 = vunpack.c.h.b16 %v473
      %v500 = vpack.c.b16 %v498, %v496
      %v501 = vpack.c.b16 %v499, %v497
      %502 = vrot.lane.b32.xlu0 %v500, 127
      %v503 = vpop.permute.xlu0 %502
      %504 = vrot.lane.b32.xlu0 %v501, 127
      %v505 = vpop.permute.xlu0 %504
      %v506 = vsel %vm327, %v503, %v505
      %v510 = vunpack.c.l.b16 %v474
      %v511 = vunpack.c.l.b16 %v475
      %v512 = vpack.c.b16 %v511, %v510
      %v516 = vunpack.c.l.b16 %v476
      %v517 = vunpack.c.l.b16 %v477
      %v518 = vpack.c.b16 %v517, %v516
      %v522 = vunpack.c.l.b16 %v478
      %v523 = vunpack.c.h.b16 %v478
      %v524 = vunpack.c.l.b16 %v479
      %v525 = vunpack.c.h.b16 %v479
      %v526 = vpack.c.b16 %v524, %v522
      %v527 = vpack.c.b16 %v525, %v523
      %528 = vrot.lane.b32.xlu0 %v526, 127
      %v529 = vpop.permute.xlu0 %528
      %530 = vrot.lane.b32.xlu0 %v527, 127
      %v531 = vpop.permute.xlu0 %530
      %v532 = vsel %vm327, %v529, %v531
      %534 = vrot.lane.b32.xlu0 %v500, 119
      %v535 = vpop.permute.xlu0 %534
      %536 = vrot.lane.b32.xlu0 %v501, 119
      %v537 = vpop.permute.xlu0 %536
      %v538 = vsel %vm360, %v535, %v537
      %v542 = vunpack.c.l.b16 %v480
      %v543 = vunpack.c.h.b16 %v480
      %v544 = vunpack.c.l.b16 %v481
      %v545 = vunpack.c.h.b16 %v481
      %v546 = vpack.c.b16 %v544, %v542
      %v547 = vpack.c.b16 %v545, %v543
      %548 = vrot.lane.b32.xlu0 %v546, 119
      %v549 = vpop.permute.xlu0 %548
      %550 = vrot.lane.b32.xlu0 %v547, 119
      %v551 = vpop.permute.xlu0 %550
      %v552 = vsel %vm360, %v549, %v551
      %554 = vrot.lane.b32.xlu0 %v500, 118
      %v555 = vpop.permute.xlu0 %554
      %556 = vrot.lane.b32.xlu0 %v501, 118
      %v557 = vpop.permute.xlu0 %556
      %v558 = vsel %vm381, %v555, %v557
      %560 = vmatprep.subr.bf16.mxu0 0
      %561 = vmatpush1.bf16.msra.mxu0 %v486
      %562 = vmatprep.subr.bf16.mxu0 0
      %563 = vmatpush1.bf16.msra.mxu0 %v492
      %564 = vmatprep.subr.bf16.mxu0 0
      %565 = vmatpush1.bf16.msra.mxu0 %v506
      %566 = vmatprep.subr.bf16.mxu0 0
      %567 = vmatpush1.bf16.msra.mxu0 %v512
      %568 = vmatprep.subr.bf16.mxu0 0
      %569 = vmatpush1.bf16.msra.mxu0 %v518
      %570 = vmatprep.subr.bf16.mxu0 0
      %571 = vmatpush1.bf16.msra.mxu0 %v532
      %572 = vmatprep.subr.bf16.mxu0 0
      %573 = vmatpush1.bf16.msra.mxu0 %v538
      %574 = vmatprep.subr.bf16.mxu0 0
      %575 = vmatpush1.bf16.msra.mxu0 %v552
      %576 = vmatprep.subr.bf16.mxu0 0
      %577 = vmatpush1.bf16.msra.mxu0 %v558
      %578 = vmatprep.subr.bf16.mxu0 0
      %579 = vmatpush1.bf16.msra.mxu0 0
      %580 = vmatprep.subr.bf16.mxu0 0
      %581 = vmatpush1.bf16.msra.mxu0 0
      %582 = vmatprep.subr.bf16.mxu0 0
      %583 = vmatpush1.bf16.msra.mxu0 0
      %584 = vmatprep.subr.bf16.mxu0 0
      %585 = vmatpush1.bf16.msra.mxu0 0
      %586 = vmatprep.subr.bf16.mxu0 0
      %587 = vmatpush1.bf16.msra.mxu0 0
      %588 = vmatprep.subr.bf16.mxu0 0
      %589 = vmatpush1.bf16.msra.mxu0 0
      %590 = vmatprep.subr.bf16.mxu0 0
      %591 = vmatpush1.bf16.msra.mxu0 0
      %592 = vmatprep.mubr.bf16.mxu0 %v395
      %593 = vmatmul.mubr.bf16.gmra.mrb[0].mxu0 %v390
      %v594 = vpop.f32.mrb[0].mxu0
      %v595 = vadd.f32 0.0, %v594
      %v596 = vpop.f32.mrb[0].mxu0
      %v597 = vpop.f32.mrb[0].mxu0
      %v598 = vadd.f32 0.0, %v597
      %v599 = vpop.f32.mrb[0].mxu0
      %600 = vdwg.mxu0
      %v601 = vmul.f32 %v595, %v441
      %v602 = vmul.f32 %v598, %v446
      %v603 = vadd.f32 %v601, %v453
      %v604 = vadd.f32 %v602, %v458
      %v605 = vmax.f32 %v603, 0.0
      %v606 = vmax.f32 %v604, 0.0
      %v607 = vpack.c.bf16 %v606, %v605
      %s608 = scalar_lea.vmem [#allocation2], 16
      %609 = vst [vmem:[%s608] sm:$0xff] %v607
      %s610 = scalar_lea.vmem %s273, 128
      %v611 = vld [vmem:[%s610] sm:$0xf]
      %v612 = vld [vmem:[%s610 + $0x8] sm:$0xf]
      %v613 = vld [vmem:[%s610 + $0x10] sm:$0xf]
      %v614 = vld [vmem:[%s610 + $0x18] sm:$0xf]
      %v615 = vld [vmem:[%s610] sm:$0xff]
      %v616 = vld [vmem:[%s610 + $0x8] sm:$0xff]
      %v617 = vld [vmem:[%s610 + $0x20] sm:$0xf]
      %v618 = vld [vmem:[%s610 + $0x28] sm:$0xf]
      %v619 = vld [vmem:[%s610 + $0x30] sm:$0xf]
      %v620 = vld [vmem:[%s610 + $0x38] sm:$0xf]
      %v621 = vld [vmem:[%s610 + $0x20] sm:$0xff]
      %v622 = vld [vmem:[%s610 + $0x28] sm:$0xff]
      %v623 = vld [vmem:[%s610 + $0x10] sm:$0xff]
      %v624 = vld [vmem:[%s610 + $0x18] sm:$0xff]
      %v627 = vunpack.c.l.b16 %v611
      %v628 = vunpack.c.l.b16 %v612
      %v629 = vpack.c.b16 %v628, %v627
      %v633 = vunpack.c.l.b16 %v613
      %v634 = vunpack.c.l.b16 %v614
      %v635 = vpack.c.b16 %v634, %v633
      %v639 = vunpack.c.l.b16 %v615
      %v640 = vunpack.c.h.b16 %v615
      %v641 = vunpack.c.l.b16 %v616
      %v642 = vunpack.c.h.b16 %v616
      %v643 = vpack.c.b16 %v641, %v639
      %v644 = vpack.c.b16 %v642, %v640
      %645 = vrot.lane.b32.xlu0 %v643, 127
      %v646 = vpop.permute.xlu0 %645
      %647 = vrot.lane.b32.xlu0 %v644, 127
      %v648 = vpop.permute.xlu0 %647
      %v649 = vsel %vm327, %v646, %v648
      %v653 = vunpack.c.l.b16 %v617
      %v654 = vunpack.c.l.b16 %v618
      %v655 = vpack.c.b16 %v654, %v653
      %v659 = vunpack.c.l.b16 %v619
      %v660 = vunpack.c.l.b16 %v620
      %v661 = vpack.c.b16 %v660, %v659
      %v665 = vunpack.c.l.b16 %v621
      %v666 = vunpack.c.h.b16 %v621
      %v667 = vunpack.c.l.b16 %v622
      %v668 = vunpack.c.h.b16 %v622
      %v669 = vpack.c.b16 %v667, %v665
      %v670 = vpack.c.b16 %v668, %v666
      %671 = vrot.lane.b32.xlu0 %v669, 127
      %v672 = vpop.permute.xlu0 %671
      %673 = vrot.lane.b32.xlu0 %v670, 127
      %v674 = vpop.permute.xlu0 %673
      %v675 = vsel %vm327, %v672, %v674
      %677 = vrot.lane.b32.xlu0 %v643, 119
      %v678 = vpop.permute.xlu0 %677
      %679 = vrot.lane.b32.xlu0 %v644, 119
      %v680 = vpop.permute.xlu0 %679
      %v681 = vsel %vm360, %v678, %v680
      %v685 = vunpack.c.l.b16 %v623
      %v686 = vunpack.c.h.b16 %v623
      %v687 = vunpack.c.l.b16 %v624
      %v688 = vunpack.c.h.b16 %v624
      %v689 = vpack.c.b16 %v687, %v685
      %v690 = vpack.c.b16 %v688, %v686
      %691 = vrot.lane.b32.xlu0 %v689, 119
      %v692 = vpop.permute.xlu0 %691
      %693 = vrot.lane.b32.xlu0 %v690, 119
      %v694 = vpop.permute.xlu0 %693
      %v695 = vsel %vm360, %v692, %v694
      %697 = vrot.lane.b32.xlu0 %v643, 118
      %v698 = vpop.permute.xlu0 %697
      %699 = vrot.lane.b32.xlu0 %v644, 118
      %v700 = vpop.permute.xlu0 %699
      %v701 = vsel %vm381, %v698, %v700
      %703 = vmatprep.subr.bf16.mxu0 0
      %704 = vmatpush1.bf16.msra.mxu0 %v629
      %705 = vmatprep.subr.bf16.mxu0 0
      %706 = vmatpush1.bf16.msra.mxu0 %v635
      %707 = vmatprep.subr.bf16.mxu0 0
      %708 = vmatpush1.bf16.msra.mxu0 %v649
      %709 = vmatprep.subr.bf16.mxu0 0
      %710 = vmatpush1.bf16.msra.mxu0 %v655
      %711 = vmatprep.subr.bf16.mxu0 0
      %712 = vmatpush1.bf16.msra.mxu0 %v661
      %713 = vmatprep.subr.bf16.mxu0 0
      %714 = vmatpush1.bf16.msra.mxu0 %v675
      %715 = vmatprep.subr.bf16.mxu0 0
      %716 = vmatpush1.bf16.msra.mxu0 %v681
      %717 = vmatprep.subr.bf16.mxu0 0
      %718 = vmatpush1.bf16.msra.mxu0 %v695
      %719 = vmatprep.subr.bf16.mxu0 0
      %720 = vmatpush1.bf16.msra.mxu0 %v701
      %721 = vmatprep.subr.bf16.mxu0 0
      %722 = vmatpush1.bf16.msra.mxu0 0
      %723 = vmatprep.subr.bf16.mxu0 0
      %724 = vmatpush1.bf16.msra.mxu0 0
      %725 = vmatprep.subr.bf16.mxu0 0
      %726 = vmatpush1.bf16.msra.mxu0 0
      %727 = vmatprep.subr.bf16.mxu0 0
      %728 = vmatpush1.bf16.msra.mxu0 0
      %729 = vmatprep.subr.bf16.mxu0 0
      %730 = vmatpush1.bf16.msra.mxu0 0
      %731 = vmatprep.subr.bf16.mxu0 0
      %732 = vmatpush1.bf16.msra.mxu0 0
      %733 = vmatprep.subr.bf16.mxu0 0
      %734 = vmatpush1.bf16.msra.mxu0 0
      %735 = vmatprep.mubr.bf16.mxu0 %v395
      %736 = vmatmul.mubr.bf16.gmra.mrb[0].mxu0 %v390
      %v737 = vpop.f32.mrb[0].mxu0
      %v738 = vadd.f32 0.0, %v737
      %v739 = vpop.f32.mrb[0].mxu0
      %v740 = vpop.f32.mrb[0].mxu0
      %v741 = vadd.f32 0.0, %v740
      %v742 = vpop.f32.mrb[0].mxu0
      %743 = vdwg.mxu0
      %v744 = vmul.f32 %v738, %v441
      %v745 = vmul.f32 %v741, %v446
      %v746 = vadd.f32 %v744, %v453
      %v747 = vadd.f32 %v745, %v458
      %v748 = vmax.f32 %v746, 0.0
      %v749 = vmax.f32 %v747, 0.0
      %v750 = vpack.c.bf16 %v749, %v748
      %s751 = scalar_lea.vmem [#allocation2], 24
      %752 = vst [vmem:[%s751] sm:$0xff] %v750
      %s753 = scalar_lea.vmem %s273, 192
      %v754 = vld [vmem:[%s753] sm:$0xf]
      %v755 = vld [vmem:[%s753 + $0x8] sm:$0xf]
      %v756 = vld [vmem:[%s753 + $0x10] sm:$0xf]
      %v757 = vld [vmem:[%s753 + $0x18] sm:$0xf]
      %v758 = vld [vmem:[%s753] sm:$0xff]
      %v759 = vld [vmem:[%s753 + $0x8] sm:$0xff]
      %v760 = vld [vmem:[%s753 + $0x20] sm:$0xf]
      %v761 = vld [vmem:[%s753 + $0x28] sm:$0xf]
      %v762 = vld [vmem:[%s753 + $0x30] sm:$0xf]
      %v763 = vld [vmem:[%s753 + $0x38] sm:$0xf]
      %v764 = vld [vmem:[%s753 + $0x20] sm:$0xff]
      %v765 = vld [vmem:[%s753 + $0x28] sm:$0xff]
      %v766 = vld [vmem:[%s753 + $0x10] sm:$0xff]
      %v767 = vld [vmem:[%s753 + $0x18] sm:$0xff]
      %v770 = vunpack.c.l.b16 %v754
      %v771 = vunpack.c.l.b16 %v755
      %v772 = vpack.c.b16 %v771, %v770
      %v776 = vunpack.c.l.b16 %v756
      %v777 = vunpack.c.l.b16 %v757
      %v778 = vpack.c.b16 %v777, %v776
      %v782 = vunpack.c.l.b16 %v758
      %v783 = vunpack.c.h.b16 %v758
      %v784 = vunpack.c.l.b16 %v759
      %v785 = vunpack.c.h.b16 %v759
      %v786 = vpack.c.b16 %v784, %v782
      %v787 = vpack.c.b16 %v785, %v783
      %788 = vrot.lane.b32.xlu0 %v786, 127
      %v789 = vpop.permute.xlu0 %788
      %790 = vrot.lane.b32.xlu0 %v787, 127
      %v791 = vpop.permute.xlu0 %790
      %v792 = vsel %vm327, %v789, %v791
      %v796 = vunpack.c.l.b16 %v760
      %v797 = vunpack.c.l.b16 %v761
      %v798 = vpack.c.b16 %v797, %v796
      %v802 = vunpack.c.l.b16 %v762
      %v803 = vunpack.c.l.b16 %v763
      %v804 = vpack.c.b16 %v803, %v802
      %v808 = vunpack.c.l.b16 %v764
      %v809 = vunpack.c.h.b16 %v764
      %v810 = vunpack.c.l.b16 %v765
      %v811 = vunpack.c.h.b16 %v765
      %v812 = vpack.c.b16 %v810, %v808
      %v813 = vpack.c.b16 %v811, %v809
      %814 = vrot.lane.b32.xlu0 %v812, 127
      %v815 = vpop.permute.xlu0 %814
      %816 = vrot.lane.b32.xlu0 %v813, 127
      %v817 = vpop.permute.xlu0 %816
      %v818 = vsel %vm327, %v815, %v817
      %820 = vrot.lane.b32.xlu0 %v786, 119
      %v821 = vpop.permute.xlu0 %820
      %822 = vrot.lane.b32.xlu0 %v787, 119
      %v823 = vpop.permute.xlu0 %822
      %v824 = vsel %vm360, %v821, %v823
      %v828 = vunpack.c.l.b16 %v766
      %v829 = vunpack.c.h.b16 %v766
      %v830 = vunpack.c.l.b16 %v767
      %v831 = vunpack.c.h.b16 %v767
      %v832 = vpack.c.b16 %v830, %v828
      %v833 = vpack.c.b16 %v831, %v829
      %834 = vrot.lane.b32.xlu0 %v832, 119
      %v835 = vpop.permute.xlu0 %834
      %836 = vrot.lane.b32.xlu0 %v833, 119
      %v837 = vpop.permute.xlu0 %836
      %v838 = vsel %vm360, %v835, %v837
      %840 = vrot.lane.b32.xlu0 %v786, 118
      %v841 = vpop.permute.xlu0 %840
      %842 = vrot.lane.b32.xlu0 %v787, 118
      %v843 = vpop.permute.xlu0 %842
      %v844 = vsel %vm381, %v841, %v843
      %846 = vmatprep.subr.bf16.mxu0 0
      %847 = vmatpush1.bf16.msra.mxu0 %v772
      %848 = vmatprep.subr.bf16.mxu0 0
      %849 = vmatpush1.bf16.msra.mxu0 %v778
      %850 = vmatprep.subr.bf16.mxu0 0
      %851 = vmatpush1.bf16.msra.mxu0 %v792
      %852 = vmatprep.subr.bf16.mxu0 0
      %853 = vmatpush1.bf16.msra.mxu0 %v798
      %854 = vmatprep.subr.bf16.mxu0 0
      %855 = vmatpush1.bf16.msra.mxu0 %v804
      %856 = vmatprep.subr.bf16.mxu0 0
      %857 = vmatpush1.bf16.msra.mxu0 %v818
      %858 = vmatprep.subr.bf16.mxu0 0
      %859 = vmatpush1.bf16.msra.mxu0 %v824
      %860 = vmatprep.subr.bf16.mxu0 0
      %861 = vmatpush1.bf16.msra.mxu0 %v838
      %862 = vmatprep.subr.bf16.mxu0 0
      %863 = vmatpush1.bf16.msra.mxu0 %v844
      %864 = vmatprep.subr.bf16.mxu0 0
      %865 = vmatpush1.bf16.msra.mxu0 0
      %866 = vmatprep.subr.bf16.mxu0 0
      %867 = vmatpush1.bf16.msra.mxu0 0
      %868 = vmatprep.subr.bf16.mxu0 0
      %869 = vmatpush1.bf16.msra.mxu0 0
      %870 = vmatprep.subr.bf16.mxu0 0
      %871 = vmatpush1.bf16.msra.mxu0 0
      %872 = vmatprep.subr.bf16.mxu0 0
      %873 = vmatpush1.bf16.msra.mxu0 0
      %874 = vmatprep.subr.bf16.mxu0 0
      %875 = vmatpush1.bf16.msra.mxu0 0
      %876 = vmatprep.subr.bf16.mxu0 0
      %877 = vmatpush1.bf16.msra.mxu0 0
      %878 = vmatprep.mubr.bf16.mxu0 %v395
      %879 = vmatmul.mubr.bf16.gmra.mrb[0].mxu0 %v390
      %v880 = vpop.f32.mrb[0].mxu0
      %v881 = vadd.f32 0.0, %v880
      %v882 = vpop.f32.mrb[0].mxu0
      %v883 = vpop.f32.mrb[0].mxu0
      %v884 = vadd.f32 0.0, %v883
      %v885 = vpop.f32.mrb[0].mxu0
      %886 = vdwg.mxu0
      %v887 = vmul.f32 %v881, %v441
      %v888 = vmul.f32 %v884, %v446
      %v889 = vadd.f32 %v887, %v453
      %v890 = vadd.f32 %v888, %v458
      %v891 = vmax.f32 %v889, 0.0
      %v892 = vmax.f32 %v890, 0.0
      %v893 = vpack.c.bf16 %v892, %v891
      %s894 = scalar_lea.vmem [#allocation2], 32
      %895 = vst [vmem:[%s894] sm:$0xff] %v893
      %s896 = scalar_lea.vmem %s273, 256
      %v897 = vld [vmem:[%s896] sm:$0xf]
      %v898 = vld [vmem:[%s896 + $0x8] sm:$0xf]
      %v899 = vld [vmem:[%s896 + $0x10] sm:$0xf]
      %v900 = vld [vmem:[%s896 + $0x18] sm:$0xf]
      %v901 = vld [vmem:[%s896] sm:$0xff]
      %v902 = vld [vmem:[%s896 + $0x8] sm:$0xff]
      %v903 = vld [vmem:[%s896 + $0x20] sm:$0xf]
      %v904 = vld [vmem:[%s896 + $0x28] sm:$0xf]
      %v905 = vld [vmem:[%s896 + $0x30] sm:$0xf]
      %v906 = vld [vmem:[%s896 + $0x38] sm:$0xf]
      %v907 = vld [vmem:[%s896 + $0x20] sm:$0xff]
      %v908 = vld [vmem:[%s896 + $0x28] sm:$0xff]
      %v909 = vld [vmem:[%s896 + $0x10] sm:$0xff]
      %v910 = vld [vmem:[%s896 + $0x18] sm:$0xff]
      %v913 = vunpack.c.l.b16 %v897
      %v914 = vunpack.c.l.b16 %v898
      %v915 = vpack.c.b16 %v914, %v913
      %v919 = vunpack.c.l.b16 %v899
      %v920 = vunpack.c.l.b16 %v900
      %v921 = vpack.c.b16 %v920, %v919
      %v925 = vunpack.c.l.b16 %v901
      %v926 = vunpack.c.h.b16 %v901
      %v927 = vunpack.c.l.b16 %v902
      %v928 = vunpack.c.h.b16 %v902
      %v929 = vpack.c.b16 %v927, %v925
      %v930 = vpack.c.b16 %v928, %v926
      %931 = vrot.lane.b32.xlu0 %v929, 127
      %v932 = vpop.permute.xlu0 %931
      %933 = vrot.lane.b32.xlu0 %v930, 127
      %v934 = vpop.permute.xlu0 %933
      %v935 = vsel %vm327, %v932, %v934
      %v939 = vunpack.c.l.b16 %v903
      %v940 = vunpack.c.l.b16 %v904
      %v941 = vpack.c.b16 %v940, %v939
      %v945 = vunpack.c.l.b16 %v905
      %v946 = vunpack.c.l.b16 %v906
      %v947 = vpack.c.b16 %v946, %v945
      %v951 = vunpack.c.l.b16 %v907
      %v952 = vunpack.c.h.b16 %v907
      %v953 = vunpack.c.l.b16 %v908
      %v954 = vunpack.c.h.b16 %v908
      %v955 = vpack.c.b16 %v953, %v951
      %v956 = vpack.c.b16 %v954, %v952
      %957 = vrot.lane.b32.xlu0 %v955, 127
      %v958 = vpop.permute.xlu0 %957
      %959 = vrot.lane.b32.xlu0 %v956, 127
      %v960 = vpop.permute.xlu0 %959
      %v961 = vsel %vm327, %v958, %v960
      %963 = vrot.lane.b32.xlu0 %v929, 119
      %v964 = vpop.permute.xlu0 %963
      %965 = vrot.lane.b32.xlu0 %v930, 119
      %v966 = vpop.permute.xlu0 %965
      %v967 = vsel %vm360, %v964, %v966
      %v971 = vunpack.c.l.b16 %v909
      %v972 = vunpack.c.h.b16 %v909
      %v973 = vunpack.c.l.b16 %v910
      %v974 = vunpack.c.h.b16 %v910
      %v975 = vpack.c.b16 %v973, %v971
      %v976 = vpack.c.b16 %v974, %v972
      %977 = vrot.lane.b32.xlu0 %v975, 119
      %v978 = vpop.permute.xlu0 %977
      %979 = vrot.lane.b32.xlu0 %v976, 119
      %v980 = vpop.permute.xlu0 %979
      %v981 = vsel %vm360, %v978, %v980
      %983 = vrot.lane.b32.xlu0 %v929, 118
      %v984 = vpop.permute.xlu0 %983
      %985 = vrot.lane.b32.xlu0 %v930, 118
      %v986 = vpop.permute.xlu0 %985
      %v987 = vsel %vm381, %v984, %v986
      %989 = vmatprep.subr.bf16.mxu0 0
      %990 = vmatpush1.bf16.msra.mxu0 %v915
      %991 = vmatprep.subr.bf16.mxu0 0
      %992 = vmatpush1.bf16.msra.mxu0 %v921
      %993 = vmatprep.subr.bf16.mxu0 0
      %994 = vmatpush1.bf16.msra.mxu0 %v935
      %995 = vmatprep.subr.bf16.mxu0 0
      %996 = vmatpush1.bf16.msra.mxu0 %v941
      %997 = vmatprep.subr.bf16.mxu0 0
      %998 = vmatpush1.bf16.msra.mxu0 %v947
      %999 = vmatprep.subr.bf16.mxu0 0
      %1000 = vmatpush1.bf16.msra.mxu0 %v961
      %1001 = vmatprep.subr.bf16.mxu0 0
      %1002 = vmatpush1.bf16.msra.mxu0 %v967
      %1003 = vmatprep.subr.bf16.mxu0 0
      %1004 = vmatpush1.bf16.msra.mxu0 %v981
      %1005 = vmatprep.subr.bf16.mxu0 0
      %1006 = vmatpush1.bf16.msra.mxu0 %v987
      %1007 = vmatprep.subr.bf16.mxu0 0
      %1008 = vmatpush1.bf16.msra.mxu0 0
      %1009 = vmatprep.subr.bf16.mxu0 0
      %1010 = vmatpush1.bf16.msra.mxu0 0
      %1011 = vmatprep.subr.bf16.mxu0 0
      %1012 = vmatpush1.bf16.msra.mxu0 0
      %1013 = vmatprep.subr.bf16.mxu0 0
      %1014 = vmatpush1.bf16.msra.mxu0 0
      %1015 = vmatprep.subr.bf16.mxu0 0
      %1016 = vmatpush1.bf16.msra.mxu0 0
      %1017 = vmatprep.subr.bf16.mxu0 0
      %1018 = vmatpush1.bf16.msra.mxu0 0
      %1019 = vmatprep.subr.bf16.mxu0 0
      %1020 = vmatpush1.bf16.msra.mxu0 0
      %1021 = vmatprep.mubr.bf16.mxu0 %v395
      %1022 = vmatmul.mubr.bf16.gmra.mrb[0].mxu0 %v390
      %v1023 = vpop.f32.mrb[0].mxu0
      %v1024 = vadd.f32 0.0, %v1023
      %v1025 = vpop.f32.mrb[0].mxu0
      %v1026 = vpop.f32.mrb[0].mxu0
      %v1027 = vadd.f32 0.0, %v1026
      %v1028 = vpop.f32.mrb[0].mxu0
      %1029 = vdwg.mxu0
      %v1030 = vmul.f32 %v1024, %v441
      %v1031 = vmul.f32 %v1027, %v446
      %v1032 = vadd.f32 %v1030, %v453
      %v1033 = vadd.f32 %v1031, %v458
      %v1034 = vmax.f32 %v1032, 0.0
      %v1035 = vmax.f32 %v1033, 0.0
      %v1036 = vpack.c.bf16 %v1035, %v1034
      %s1037 = scalar_lea.vmem [#allocation2], 40
      %1038 = vst [vmem:[%s1037] sm:$0xff] %v1036
      %s1039 = scalar_lea.vmem %s273, 320
      %v1040 = vld [vmem:[%s1039] sm:$0xf]
      %v1041 = vld [vmem:[%s1039 + $0x8] sm:$0xf]
      %v1042 = vld [vmem:[%s1039 + $0x10] sm:$0xf]
      %v1043 = vld [vmem:[%s1039 + $0x18] sm:$0xf]
      %v1044 = vld [vmem:[%s1039] sm:$0xff]
      %v1045 = vld [vmem:[%s1039 + $0x8] sm:$0xff]
      %v1046 = vld [vmem:[%s1039 + $0x20] sm:$0xf]
      %v1047 = vld [vmem:[%s1039 + $0x28] sm:$0xf]
      %v1048 = vld [vmem:[%s1039 + $0x30] sm:$0xf]
      %v1049 = vld [vmem:[%s1039 + $0x38] sm:$0xf]
      %v1050 = vld [vmem:[%s1039 + $0x20] sm:$0xff]
      %v1051 = vld [vmem:[%s1039 + $0x28] sm:$0xff]
      %v1052 = vld [vmem:[%s1039 + $0x10] sm:$0xff]
      %v1053 = vld [vmem:[%s1039 + $0x18] sm:$0xff]
      %v1056 = vunpack.c.l.b16 %v1040
      %v1057 = vunpack.c.l.b16 %v1041
      %v1058 = vpack.c.b16 %v1057, %v1056
      %v1062 = vunpack.c.l.b16 %v1042
      %v1063 = vunpack.c.l.b16 %v1043
      %v1064 = vpack.c.b16 %v1063, %v1062
      %v1068 = vunpack.c.l.b16 %v1044
      %v1069 = vunpack.c.h.b16 %v1044
      %v1070 = vunpack.c.l.b16 %v1045
      %v1071 = vunpack.c.h.b16 %v1045
      %v1072 = vpack.c.b16 %v1070, %v1068
      %v1073 = vpack.c.b16 %v1071, %v1069
      %1074 = vrot.lane.b32.xlu0 %v1072, 127
      %v1075 = vpop.permute.xlu0 %1074
      %1076 = vrot.lane.b32.xlu0 %v1073, 127
      %v1077 = vpop.permute.xlu0 %1076
      %v1078 = vsel %vm327, %v1075, %v1077
      %v1082 = vunpack.c.l.b16 %v1046
      %v1083 = vunpack.c.l.b16 %v1047
      %v1084 = vpack.c.b16 %v1083, %v1082
      %v1088 = vunpack.c.l.b16 %v1048
      %v1089 = vunpack.c.l.b16 %v1049
      %v1090 = vpack.c.b16 %v1089, %v1088
      %v1094 = vunpack.c.l.b16 %v1050
      %v1095 = vunpack.c.h.b16 %v1050
      %v1096 = vunpack.c.l.b16 %v1051
      %v1097 = vunpack.c.h.b16 %v1051
      %v1098 = vpack.c.b16 %v1096, %v1094
      %v1099 = vpack.c.b16 %v1097, %v1095
      %1100 = vrot.lane.b32.xlu0 %v1098, 127
      %v1101 = vpop.permute.xlu0 %1100
      %1102 = vrot.lane.b32.xlu0 %v1099, 127
      %v1103 = vpop.permute.xlu0 %1102
      %v1104 = vsel %vm327, %v1101, %v1103
      %1106 = vrot.lane.b32.xlu0 %v1072, 119
      %v1107 = vpop.permute.xlu0 %1106
      %1108 = vrot.lane.b32.xlu0 %v1073, 119
      %v1109 = vpop.permute.xlu0 %1108
      %v1110 = vsel %vm360, %v1107, %v1109
      %v1114 = vunpack.c.l.b16 %v1052
      %v1115 = vunpack.c.h.b16 %v1052
      %v1116 = vunpack.c.l.b16 %v1053
      %v1117 = vunpack.c.h.b16 %v1053
      %v1118 = vpack.c.b16 %v1116, %v1114
      %v1119 = vpack.c.b16 %v1117, %v1115
      %1120 = vrot.lane.b32.xlu0 %v1118, 119
      %v1121 = vpop.permute.xlu0 %1120
      %1122 = vrot.lane.b32.xlu0 %v1119, 119
      %v1123 = vpop.permute.xlu0 %1122
      %v1124 = vsel %vm360, %v1121, %v1123
      %1126 = vrot.lane.b32.xlu0 %v1072, 118
      %v1127 = vpop.permute.xlu0 %1126
      %1128 = vrot.lane.b32.xlu0 %v1073, 118
      %v1129 = vpop.permute.xlu0 %1128
      %v1130 = vsel %vm381, %v1127, %v1129
      %1132 = vmatprep.subr.bf16.mxu0 0
      %1133 = vmatpush1.bf16.msra.mxu0 %v1058
      %1134 = vmatprep.subr.bf16.mxu0 0
      %1135 = vmatpush1.bf16.msra.mxu0 %v1064
      %1136 = vmatprep.subr.bf16.mxu0 0
      %1137 = vmatpush1.bf16.msra.mxu0 %v1078
      %1138 = vmatprep.subr.bf16.mxu0 0
      %1139 = vmatpush1.bf16.msra.mxu0 %v1084
      %1140 = vmatprep.subr.bf16.mxu0 0
      %1141 = vmatpush1.bf16.msra.mxu0 %v1090
      %1142 = vmatprep.subr.bf16.mxu0 0
      %1143 = vmatpush1.bf16.msra.mxu0 %v1104
      %1144 = vmatprep.subr.bf16.mxu0 0
      %1145 = vmatpush1.bf16.msra.mxu0 %v1110
      %1146 = vmatprep.subr.bf16.mxu0 0
      %1147 = vmatpush1.bf16.msra.mxu0 %v1124
      %1148 = vmatprep.subr.bf16.mxu0 0
      %1149 = vmatpush1.bf16.msra.mxu0 %v1130
      %1150 = vmatprep.subr.bf16.mxu0 0
      %1151 = vmatpush1.bf16.msra.mxu0 0
      %1152 = vmatprep.subr.bf16.mxu0 0
      %1153 = vmatpush1.bf16.msra.mxu0 0
      %1154 = vmatprep.subr.bf16.mxu0 0
      %1155 = vmatpush1.bf16.msra.mxu0 0
      %1156 = vmatprep.subr.bf16.mxu0 0
      %1157 = vmatpush1.bf16.msra.mxu0 0
      %1158 = vmatprep.subr.bf16.mxu0 0
      %1159 = vmatpush1.bf16.msra.mxu0 0
      %1160 = vmatprep.subr.bf16.mxu0 0
      %1161 = vmatpush1.bf16.msra.mxu0 0
      %1162 = vmatprep.subr.bf16.mxu0 0
      %1163 = vmatpush1.bf16.msra.mxu0 0
      %1164 = vmatprep.mubr.bf16.mxu0 %v395
      %1165 = vmatmul.mubr.bf16.gmra.mrb[0].mxu0 %v390
      %v1166 = vpop.f32.mrb[0].mxu0
      %v1167 = vadd.f32 0.0, %v1166
      %v1168 = vpop.f32.mrb[0].mxu0
      %v1169 = vpop.f32.mrb[0].mxu0
      %v1170 = vadd.f32 0.0, %v1169
      %v1171 = vpop.f32.mrb[0].mxu0
      %1172 = vdwg.mxu0
      %v1173 = vmul.f32 %v1167, %v441
      %v1174 = vmul.f32 %v1170, %v446
      %v1175 = vadd.f32 %v1173, %v453
      %v1176 = vadd.f32 %v1174, %v458
      %v1177 = vmax.f32 %v1175, 0.0
      %v1178 = vmax.f32 %v1176, 0.0
      %v1179 = vpack.c.bf16 %v1178, %v1177
      %s1180 = scalar_lea.vmem [#allocation2], 48
      %1181 = vst [vmem:[%s1180] sm:$0xff] %v1179
      %s1182 = scalar_lea.vmem %s273, 384
      %v1183 = vld [vmem:[%s1182] sm:$0xf]
      %v1184 = vld [vmem:[%s1182 + $0x8] sm:$0xf]
      %v1185 = vld [vmem:[%s1182 + $0x10] sm:$0xf]
      %v1186 = vld [vmem:[%s1182 + $0x18] sm:$0xf]
      %v1187 = vld [vmem:[%s1182] sm:$0xff]
      %v1188 = vld [vmem:[%s1182 + $0x8] sm:$0xff]
      %v1189 = vld [vmem:[%s1182 + $0x20] sm:$0xf]
      %v1190 = vld [vmem:[%s1182 + $0x28] sm:$0xf]
      %v1191 = vld [vmem:[%s1182 + $0x30] sm:$0xf]
      %v1192 = vld [vmem:[%s1182 + $0x38] sm:$0xf]
      %v1193 = vld [vmem:[%s1182 + $0x20] sm:$0xff]
      %v1194 = vld [vmem:[%s1182 + $0x28] sm:$0xff]
      %v1195 = vld [vmem:[%s1182 + $0x10] sm:$0xff]
      %v1196 = vld [vmem:[%s1182 + $0x18] sm:$0xff]
      %v1199 = vunpack.c.l.b16 %v1183
      %v1200 = vunpack.c.l.b16 %v1184
      %v1201 = vpack.c.b16 %v1200, %v1199
      %v1205 = vunpack.c.l.b16 %v1185
      %v1206 = vunpack.c.l.b16 %v1186
      %v1207 = vpack.c.b16 %v1206, %v1205
      %v1211 = vunpack.c.l.b16 %v1187
      %v1212 = vunpack.c.h.b16 %v1187
      %v1213 = vunpack.c.l.b16 %v1188
      %v1214 = vunpack.c.h.b16 %v1188
      %v1215 = vpack.c.b16 %v1213, %v1211
      %v1216 = vpack.c.b16 %v1214, %v1212
      %1217 = vrot.lane.b32.xlu0 %v1215, 127
      %v1218 = vpop.permute.xlu0 %1217
      %1219 = vrot.lane.b32.xlu0 %v1216, 127
      %v1220 = vpop.permute.xlu0 %1219
      %v1221 = vsel %vm327, %v1218, %v1220
      %v1225 = vunpack.c.l.b16 %v1189
      %v1226 = vunpack.c.l.b16 %v1190
      %v1227 = vpack.c.b16 %v1226, %v1225
      %v1231 = vunpack.c.l.b16 %v1191
      %v1232 = vunpack.c.l.b16 %v1192
      %v1233 = vpack.c.b16 %v1232, %v1231
      %v1237 = vunpack.c.l.b16 %v1193
      %v1238 = vunpack.c.h.b16 %v1193
      %v1239 = vunpack.c.l.b16 %v1194
      %v1240 = vunpack.c.h.b16 %v1194
      %v1241 = vpack.c.b16 %v1239, %v1237
      %v1242 = vpack.c.b16 %v1240, %v1238
      %1243 = vrot.lane.b32.xlu0 %v1241, 127
      %v1244 = vpop.permute.xlu0 %1243
      %1245 = vrot.lane.b32.xlu0 %v1242, 127
      %v1246 = vpop.permute.xlu0 %1245
      %v1247 = vsel %vm327, %v1244, %v1246
      %1249 = vrot.lane.b32.xlu0 %v1215, 119
      %v1250 = vpop.permute.xlu0 %1249
      %1251 = vrot.lane.b32.xlu0 %v1216, 119
      %v1252 = vpop.permute.xlu0 %1251
      %v1253 = vsel %vm360, %v1250, %v1252
      %v1257 = vunpack.c.l.b16 %v1195
      %v1258 = vunpack.c.h.b16 %v1195
      %v1259 = vunpack.c.l.b16 %v1196
      %v1260 = vunpack.c.h.b16 %v1196
      %v1261 = vpack.c.b16 %v1259, %v1257
      %v1262 = vpack.c.b16 %v1260, %v1258
      %1263 = vrot.lane.b32.xlu0 %v1261, 119
      %v1264 = vpop.permute.xlu0 %1263
      %1265 = vrot.lane.b32.xlu0 %v1262, 119
      %v1266 = vpop.permute.xlu0 %1265
      %v1267 = vsel %vm360, %v1264, %v1266
      %1269 = vrot.lane.b32.xlu0 %v1215, 118
      %v1270 = vpop.permute.xlu0 %1269
      %1271 = vrot.lane.b32.xlu0 %v1216, 118
      %v1272 = vpop.permute.xlu0 %1271
      %v1273 = vsel %vm381, %v1270, %v1272
      %1275 = vmatprep.subr.bf16.mxu0 0
      %1276 = vmatpush1.bf16.msra.mxu0 %v1201
      %1277 = vmatprep.subr.bf16.mxu0 0
      %1278 = vmatpush1.bf16.msra.mxu0 %v1207
      %1279 = vmatprep.subr.bf16.mxu0 0
      %1280 = vmatpush1.bf16.msra.mxu0 %v1221
      %1281 = vmatprep.subr.bf16.mxu0 0
      %1282 = vmatpush1.bf16.msra.mxu0 %v1227
      %1283 = vmatprep.subr.bf16.mxu0 0
      %1284 = vmatpush1.bf16.msra.mxu0 %v1233
      %1285 = vmatprep.subr.bf16.mxu0 0
      %1286 = vmatpush1.bf16.msra.mxu0 %v1247
      %1287 = vmatprep.subr.bf16.mxu0 0
      %1288 = vmatpush1.bf16.msra.mxu0 %v1253
      %1289 = vmatprep.subr.bf16.mxu0 0
      %1290 = vmatpush1.bf16.msra.mxu0 %v1267
      %1291 = vmatprep.subr.bf16.mxu0 0
      %1292 = vmatpush1.bf16.msra.mxu0 %v1273
      %1293 = vmatprep.subr.bf16.mxu0 0
      %1294 = vmatpush1.bf16.msra.mxu0 0
      %1295 = vmatprep.subr.bf16.mxu0 0
      %1296 = vmatpush1.bf16.msra.mxu0 0
      %1297 = vmatprep.subr.bf16.mxu0 0
      %1298 = vmatpush1.bf16.msra.mxu0 0
      %1299 = vmatprep.subr.bf16.mxu0 0
      %1300 = vmatpush1.bf16.msra.mxu0 0
      %1301 = vmatprep.subr.bf16.mxu0 0
      %1302 = vmatpush1.bf16.msra.mxu0 0
      %1303 = vmatprep.subr.bf16.mxu0 0
      %1304 = vmatpush1.bf16.msra.mxu0 0
      %1305 = vmatprep.subr.bf16.mxu0 0
      %1306 = vmatpush1.bf16.msra.mxu0 0
      %1307 = vmatprep.mubr.bf16.mxu0 %v395
      %1308 = vmatmul.mubr.bf16.gmra.mrb[0].mxu0 %v390
      %v1309 = vpop.f32.mrb[0].mxu0
      %v1310 = vadd.f32 0.0, %v1309
      %v1311 = vpop.f32.mrb[0].mxu0
      %v1312 = vpop.f32.mrb[0].mxu0
      %v1313 = vadd.f32 0.0, %v1312
      %v1314 = vpop.f32.mrb[0].mxu0
      %1315 = vdwg.mxu0
      %v1316 = vmul.f32 %v1310, %v441
      %v1317 = vmul.f32 %v1313, %v446
      %v1318 = vadd.f32 %v1316, %v453
      %v1319 = vadd.f32 %v1317, %v458
      %v1320 = vmax.f32 %v1318, 0.0
      %v1321 = vmax.f32 %v1319, 0.0
      %v1322 = vpack.c.bf16 %v1321, %v1320
      %s1323 = scalar_lea.vmem [#allocation2], 56
      %1324 = vst [vmem:[%s1323] sm:$0xff] %v1322
      %s1325 = scalar_lea.vmem %s273, 448
      %v1326 = vld [vmem:[%s1325] sm:$0xf]
      %v1327 = vld [vmem:[%s1325 + $0x8] sm:$0xf]
      %v1328 = vld [vmem:[%s1325 + $0x10] sm:$0xf]
      %v1329 = vld [vmem:[%s1325 + $0x18] sm:$0xf]
      %v1330 = vld [vmem:[%s1325] sm:$0xff]
      %v1331 = vld [vmem:[%s1325 + $0x8] sm:$0xff]
      %v1332 = vld [vmem:[%s1325 + $0x20] sm:$0xf]
      %v1333 = vld [vmem:[%s1325 + $0x28] sm:$0xf]
      %v1334 = vld [vmem:[%s1325 + $0x30] sm:$0xf]
      %v1335 = vld [vmem:[%s1325 + $0x38] sm:$0xf]
      %v1336 = vld [vmem:[%s1325 + $0x20] sm:$0xff]
      %v1337 = vld [vmem:[%s1325 + $0x28] sm:$0xff]
      %v1338 = vld [vmem:[%s1325 + $0x10] sm:$0xff]
      %v1339 = vld [vmem:[%s1325 + $0x18] sm:$0xff]
      %v1342 = vunpack.c.l.b16 %v1326
      %v1343 = vunpack.c.l.b16 %v1327
      %v1344 = vpack.c.b16 %v1343, %v1342
      %v1348 = vunpack.c.l.b16 %v1328
      %v1349 = vunpack.c.l.b16 %v1329
      %v1350 = vpack.c.b16 %v1349, %v1348
      %v1354 = vunpack.c.l.b16 %v1330
      %v1355 = vunpack.c.h.b16 %v1330
      %v1356 = vunpack.c.l.b16 %v1331
      %v1357 = vunpack.c.h.b16 %v1331
      %v1358 = vpack.c.b16 %v1356, %v1354
      %v1359 = vpack.c.b16 %v1357, %v1355
      %1360 = vrot.lane.b32.xlu0 %v1358, 127
      %v1361 = vpop.permute.xlu0 %1360
      %1362 = vrot.lane.b32.xlu0 %v1359, 127
      %v1363 = vpop.permute.xlu0 %1362
      %v1364 = vsel %vm327, %v1361, %v1363
      %v1368 = vunpack.c.l.b16 %v1332
      %v1369 = vunpack.c.l.b16 %v1333
      %v1370 = vpack.c.b16 %v1369, %v1368
      %v1374 = vunpack.c.l.b16 %v1334
      %v1375 = vunpack.c.l.b16 %v1335
      %v1376 = vpack.c.b16 %v1375, %v1374
      %v1380 = vunpack.c.l.b16 %v1336
      %v1381 = vunpack.c.h.b16 %v1336
      %v1382 = vunpack.c.l.b16 %v1337
      %v1383 = vunpack.c.h.b16 %v1337
      %v1384 = vpack.c.b16 %v1382, %v1380
      %v1385 = vpack.c.b16 %v1383, %v1381
      %1386 = vrot.lane.b32.xlu0 %v1384, 127
      %v1387 = vpop.permute.xlu0 %1386
      %1388 = vrot.lane.b32.xlu0 %v1385, 127
      %v1389 = vpop.permute.xlu0 %1388
      %v1390 = vsel %vm327, %v1387, %v1389
      %1392 = vrot.lane.b32.xlu0 %v1358, 119
      %v1393 = vpop.permute.xlu0 %1392
      %1394 = vrot.lane.b32.xlu0 %v1359, 119
      %v1395 = vpop.permute.xlu0 %1394
      %v1396 = vsel %vm360, %v1393, %v1395
      %v1400 = vunpack.c.l.b16 %v1338
      %v1401 = vunpack.c.h.b16 %v1338
      %v1402 = vunpack.c.l.b16 %v1339
      %v1403 = vunpack.c.h.b16 %v1339
      %v1404 = vpack.c.b16 %v1402, %v1400
      %v1405 = vpack.c.b16 %v1403, %v1401
      %1406 = vrot.lane.b32.xlu0 %v1404, 119
      %v1407 = vpop.permute.xlu0 %1406
      %1408 = vrot.lane.b32.xlu0 %v1405, 119
      %v1409 = vpop.permute.xlu0 %1408
      %v1410 = vsel %vm360, %v1407, %v1409
      %1412 = vrot.lane.b32.xlu0 %v1358, 118
      %v1413 = vpop.permute.xlu0 %1412
      %1414 = vrot.lane.b32.xlu0 %v1359, 118
      %v1415 = vpop.permute.xlu0 %1414
      %v1416 = vsel %vm381, %v1413, %v1415
      %1418 = vmatprep.subr.bf16.mxu0 0
      %1419 = vmatpush1.bf16.msra.mxu0 %v1344
      %1420 = vmatprep.subr.bf16.mxu0 0
      %1421 = vmatpush1.bf16.msra.mxu0 %v1350
      %1422 = vmatprep.subr.bf16.mxu0 0
      %1423 = vmatpush1.bf16.msra.mxu0 %v1364
      %1424 = vmatprep.subr.bf16.mxu0 0
      %1425 = vmatpush1.bf16.msra.mxu0 %v1370
      %1426 = vmatprep.subr.bf16.mxu0 0
      %1427 = vmatpush1.bf16.msra.mxu0 %v1376
      %1428 = vmatprep.subr.bf16.mxu0 0
      %1429 = vmatpush1.bf16.msra.mxu0 %v1390
      %1430 = vmatprep.subr.bf16.mxu0 0
      %1431 = vmatpush1.bf16.msra.mxu0 %v1396
      %1432 = vmatprep.subr.bf16.mxu0 0
      %1433 = vmatpush1.bf16.msra.mxu0 %v1410
      %1434 = vmatprep.subr.bf16.mxu0 0
      %1435 = vmatpush1.bf16.msra.mxu0 %v1416
      %1436 = vmatprep.subr.bf16.mxu0 0
      %1437 = vmatpush1.bf16.msra.mxu0 0
      %1438 = vmatprep.subr.bf16.mxu0 0
      %1439 = vmatpush1.bf16.msra.mxu0 0
      %1440 = vmatprep.subr.bf16.mxu0 0
      %1441 = vmatpush1.bf16.msra.mxu0 0
      %1442 = vmatprep.subr.bf16.mxu0 0
      %1443 = vmatpush1.bf16.msra.mxu0 0
      %1444 = vmatprep.subr.bf16.mxu0 0
      %1445 = vmatpush1.bf16.msra.mxu0 0
      %1446 = vmatprep.subr.bf16.mxu0 0
      %1447 = vmatpush1.bf16.msra.mxu0 0
      %1448 = vmatprep.subr.bf16.mxu0 0
      %1449 = vmatpush1.bf16.msra.mxu0 0
      %1450 = vmatprep.mubr.bf16.mxu0 %v395
      %1451 = vmatmul.mubr.bf16.gmra.mrb[0].mxu0 %v390
      %v1452 = vpop.f32.mrb[0].mxu0
      %v1453 = vadd.f32 0.0, %v1452
      %v1454 = vpop.f32.mrb[0].mxu0
      %v1455 = vpop.f32.mrb[0].mxu0
      %v1456 = vadd.f32 0.0, %v1455
      %v1457 = vpop.f32.mrb[0].mxu0
      %1458 = vdwg.mxu0
      %v1459 = vmul.f32 %v1453, %v441
      %v1460 = vmul.f32 %v1456, %v446
      %v1461 = vadd.f32 %v1459, %v453
      %v1462 = vadd.f32 %v1460, %v458
      %v1463 = vmax.f32 %v1461, 0.0
      %v1464 = vmax.f32 %v1462, 0.0
      %v1465 = vpack.c.bf16 %v1464, %v1463
      %s1466 = scalar_lea.vmem [#allocation2], 64
      %1467 = vst [vmem:[%s1466] sm:$0xff] %v1465
      %v1468 = vld [vmem:[%s4] sm:$0xf]
      %v1469 = vld [vmem:[%s5] sm:$0xff]
      %v1470 = vld [vmem:[%s6] sm:$0xff]
      %v1471 = vld [vmem:[#allocation2] sm:$0xff]
      %v1472 = vld [vmem:[%s465] sm:$0xff]
      %v1473 = vld [vmem:[%s608] sm:$0xff]
      %vm1474 = vcmask 392192
      %v1476 = vsel %vm1474, %v1468, 0
      %1478 = vmatprep.subr.bf16.mxu0 0
      %1479 = vmatpush1.bf16.msra.mxu0 %v1471
      %1480 = vmatprep.subr.bf16.mxu0 0
      %1481 = vmatpush1.bf16.msra.mxu0 %v1472
      %1482 = vmatprep.subr.bf16.mxu0 0
      %1483 = vmatpush1.bf16.msra.mxu0 %v1473
      %1484 = vmatprep.subr.bf16.mxu0 0
      %1485 = vmatpush1.bf16.msra.mxu0 0
      %1486 = vmatprep.subr.bf16.mxu0 0
      %1487 = vmatpush1.bf16.msra.mxu0 0
      %1488 = vmatprep.subr.bf16.mxu0 0
      %1489 = vmatpush1.bf16.msra.mxu0 0
      %1490 = vmatprep.subr.bf16.mxu0 0
      %1491 = vmatpush1.bf16.msra.mxu0 0
      %1492 = vmatprep.subr.bf16.mxu0 0
      %1493 = vmatpush1.bf16.msra.mxu0 0
      %1494 = vmatprep.subr.bf16.mxu0 0
      %1495 = vmatpush1.bf16.msra.mxu0 0
      %1496 = vmatprep.subr.bf16.mxu0 0
      %1497 = vmatpush1.bf16.msra.mxu0 0
      %1498 = vmatprep.subr.bf16.mxu0 0
      %1499 = vmatpush1.bf16.msra.mxu0 0
      %1500 = vmatprep.subr.bf16.mxu0 0
      %1501 = vmatpush1.bf16.msra.mxu0 0
      %1502 = vmatprep.subr.bf16.mxu0 0
      %1503 = vmatpush1.bf16.msra.mxu0 0
      %1504 = vmatprep.subr.bf16.mxu0 0
      %1505 = vmatpush1.bf16.msra.mxu0 0
      %1506 = vmatprep.subr.bf16.mxu0 0
      %1507 = vmatpush1.bf16.msra.mxu0 0
      %1508 = vmatprep.subr.bf16.mxu0 0
      %1509 = vmatpush1.bf16.msra.mxu0 0
      %1510 = vmatprep.mubr.bf16.mxu0 0
      %1511 = vmatmul.mubr.bf16.gmra.mrb[0].mxu0 %v1476
      %v1512 = vpop.f32.mrb[0].mxu0
      %v1513 = vadd.f32 0.0, %v1512
      %v1514 = vpop.f32.mrb[0].mxu0
      %v1515 = vpop.f32.mrb[0].mxu0
      %v1516 = vpop.f32.mrb[0].mxu0
      %1517 = vdwg.mxu0
      %1519 = vset.pattern.permute.xlu0 0
      %1520 = vperm.xlu0 %1519, %v1469
      %v1521 = vpop.permute.xlu0 %1520
      %v1523 = vmul.f32 %v1513, %v1521
      %1525 = vset.pattern.permute.xlu0 0
      %1526 = vperm.xlu0 %1525, %v1470
      %v1527 = vpop.permute.xlu0 %1526
      %v1529 = vadd.f32 %v1523, %v1527
      %v1530 = vmax.f32 %v1529, 0.0
      %1531 = vst [vmem:[%s278] sm:$0xff] %v1530
      %v1532 = vld [vmem:[%s608] sm:$0xff]
      %v1533 = vld [vmem:[%s751] sm:$0xff]
      %v1534 = vld [vmem:[%s894] sm:$0xff]
      %1535 = vmatprep.subr.bf16.mxu0 0
      %1536 = vmatpush1.bf16.msra.mxu0 %v1532
      %1537 = vmatprep.subr.bf16.mxu0 0
      %1538 = vmatpush1.bf16.msra.mxu0 %v1533
      %1539 = vmatprep.subr.bf16.mxu0 0
      %1540 = vmatpush1.bf16.msra.mxu0 %v1534
      %1541 = vmatprep.subr.bf16.mxu0 0
      %1542 = vmatpush1.bf16.msra.mxu0 0
      %1543 = vmatprep.subr.bf16.mxu0 0
      %1544 = vmatpush1.bf16.msra.mxu0 0
      %1545 = vmatprep.subr.bf16.mxu0 0
      %1546 = vmatpush1.bf16.msra.mxu0 0
      %1547 = vmatprep.subr.bf16.mxu0 0
      %1548 = vmatpush1.bf16.msra.mxu0 0
      %1549 = vmatprep.subr.bf16.mxu0 0
      %1550 = vmatpush1.bf16.msra.mxu0 0
      %1551 = vmatprep.subr.bf16.mxu0 0
      %1552 = vmatpush1.bf16.msra.mxu0 0
      %1553 = vmatprep.subr.bf16.mxu0 0
      %1554 = vmatpush1.bf16.msra.mxu0 0
      %1555 = vmatprep.subr.bf16.mxu0 0
      %1556 = vmatpush1.bf16.msra.mxu0 0
      %1557 = vmatprep.subr.bf16.mxu0 0
      %1558 = vmatpush1.bf16.msra.mxu0 0
      %1559 = vmatprep.subr.bf16.mxu0 0
      %1560 = vmatpush1.bf16.msra.mxu0 0
      %1561 = vmatprep.subr.bf16.mxu0 0
      %1562 = vmatpush1.bf16.msra.mxu0 0
      %1563 = vmatprep.subr.bf16.mxu0 0
      %1564 = vmatpush1.bf16.msra.mxu0 0
      %1565 = vmatprep.subr.bf16.mxu0 0
      %1566 = vmatpush1.bf16.msra.mxu0 0
      %1567 = vmatprep.mubr.bf16.mxu0 0
      %1568 = vmatmul.mubr.bf16.gmra.mrb[0].mxu0 %v1476
      %v1569 = vpop.f32.mrb[0].mxu0
      %v1570 = vadd.f32 0.0, %v1569
      %v1571 = vpop.f32.mrb[0].mxu0
      %v1572 = vpop.f32.mrb[0].mxu0
      %v1573 = vpop.f32.mrb[0].mxu0
      %1574 = vdwg.mxu0
      %v1575 = vmul.f32 %v1570, %v1521
      %v1576 = vadd.f32 %v1575, %v1527
      %v1577 = vmax.f32 %v1576, 0.0
      %s1578 = scalar_lea.vmem %s278, 8
      %1579 = vst [vmem:[%s1578] sm:$0xff] %v1577
      %v1580 = vld [vmem:[%s894] sm:$0xff]
      %v1581 = vld [vmem:[%s1037] sm:$0xff]
      %v1582 = vld [vmem:[%s1180] sm:$0xff]
      %1583 = vmatprep.subr.bf16.mxu0 0
      %1584 = vmatpush1.bf16.msra.mxu0 %v1580
      %1585 = vmatprep.subr.bf16.mxu0 0
      %1586 = vmatpush1.bf16.msra.mxu0 %v1581
      %1587 = vmatprep.subr.bf16.mxu0 0
      %1588 = vmatpush1.bf16.msra.mxu0 %v1582
      %1589 = vmatprep.subr.bf16.mxu0 0
      %1590 = vmatpush1.bf16.msra.mxu0 0
      %1591 = vmatprep.subr.bf16.mxu0 0
      %1592 = vmatpush1.bf16.msra.mxu0 0
      %1593 = vmatprep.subr.bf16.mxu0 0
      %1594 = vmatpush1.bf16.msra.mxu0 0
      %1595 = vmatprep.subr.bf16.mxu0 0
      %1596 = vmatpush1.bf16.msra.mxu0 0
      %1597 = vmatprep.subr.bf16.mxu0 0
      %1598 = vmatpush1.bf16.msra.mxu0 0
      %1599 = vmatprep.subr.bf16.mxu0 0
      %1600 = vmatpush1.bf16.msra.mxu0 0
      %1601 = vmatprep.subr.bf16.mxu0 0
      %1602 = vmatpush1.bf16.msra.mxu0 0
      %1603 = vmatprep.subr.bf16.mxu0 0
      %1604 = vmatpush1.bf16.msra.mxu0 0
      %1605 = vmatprep.subr.bf16.mxu0 0
      %1606 = vmatpush1.bf16.msra.mxu0 0
      %1607 = vmatprep.subr.bf16.mxu0 0
      %1608 = vmatpush1.bf16.msra.mxu0 0
      %1609 = vmatprep.subr.bf16.mxu0 0
      %1610 = vmatpush1.bf16.msra.mxu0 0
      %1611 = vmatprep.subr.bf16.mxu0 0
      %1612 = vmatpush1.bf16.msra.mxu0 0
      %1613 = vmatprep.subr.bf16.mxu0 0
      %1614 = vmatpush1.bf16.msra.mxu0 0
      %1615 = vmatprep.mubr.bf16.mxu0 0
      %1616 = vmatmul.mubr.bf16.gmra.mrb[0].mxu0 %v1476
      %v1617 = vpop.f32.mrb[0].mxu0
      %v1618 = vadd.f32 0.0, %v1617
      %v1619 = vpop.f32.mrb[0].mxu0
      %v1620 = vpop.f32.mrb[0].mxu0
      %v1621 = vpop.f32.mrb[0].mxu0
      %1622 = vdwg.mxu0
      %v1623 = vmul.f32 %v1618, %v1521
      %v1624 = vadd.f32 %v1623, %v1527
      %v1625 = vmax.f32 %v1624, 0.0
      %s1626 = scalar_lea.vmem %s278, 16
      %1627 = vst [vmem:[%s1626] sm:$0xff] %v1625
      %v1628 = vld [vmem:[%s1180] sm:$0xff]
      %v1629 = vld [vmem:[%s1323] sm:$0xff]
      %v1630 = vld [vmem:[%s1466] sm:$0xff]
      %1631 = vmatprep.subr.bf16.mxu0 0
      %1632 = vmatpush1.bf16.msra.mxu0 %v1628
      %1633 = vmatprep.subr.bf16.mxu0 0
      %1634 = vmatpush1.bf16.msra.mxu0 %v1629
      %1635 = vmatprep.subr.bf16.mxu0 0
      %1636 = vmatpush1.bf16.msra.mxu0 %v1630
      %1637 = vmatprep.subr.bf16.mxu0 0
      %1638 = vmatpush1.bf16.msra.mxu0 0
      %1639 = vmatprep.subr.bf16.mxu0 0
      %1640 = vmatpush1.bf16.msra.mxu0 0
      %1641 = vmatprep.subr.bf16.mxu0 0
      %1642 = vmatpush1.bf16.msra.mxu0 0
      %1643 = vmatprep.subr.bf16.mxu0 0
      %1644 = vmatpush1.bf16.msra.mxu0 0
      %1645 = vmatprep.subr.bf16.mxu0 0
      %1646 = vmatpush1.bf16.msra.mxu0 0
      %1647 = vmatprep.subr.bf16.mxu0 0
      %1648 = vmatpush1.bf16.msra.mxu0 0
      %1649 = vmatprep.subr.bf16.mxu0 0
      %1650 = vmatpush1.bf16.msra.mxu0 0
      %1651 = vmatprep.subr.bf16.mxu0 0
      %1652 = vmatpush1.bf16.msra.mxu0 0
      %1653 = vmatprep.subr.bf16.mxu0 0
      %1654 = vmatpush1.bf16.msra.mxu0 0
      %1655 = vmatprep.subr.bf16.mxu0 0
      %1656 = vmatpush1.bf16.msra.mxu0 0
      %1657 = vmatprep.subr.bf16.mxu0 0
      %1658 = vmatpush1.bf16.msra.mxu0 0
      %1659 = vmatprep.subr.bf16.mxu0 0
      %1660 = vmatpush1.bf16.msra.mxu0 0
      %1661 = vmatprep.subr.bf16.mxu0 0
      %1662 = vmatpush1.bf16.msra.mxu0 0
      %1663 = vmatprep.mubr.bf16.mxu0 0
      %1664 = vmatmul.mubr.bf16.gmra.mrb[0].mxu0 %v1476
      %v1665 = vpop.f32.mrb[0].mxu0
      %v1666 = vadd.f32 0.0, %v1665
      %v1667 = vpop.f32.mrb[0].mxu0
      %v1668 = vpop.f32.mrb[0].mxu0
      %v1669 = vpop.f32.mrb[0].mxu0
      %1670 = vdwg.mxu0
      %v1671 = vmul.f32 %v1666, %v1521
      %v1672 = vadd.f32 %v1671, %v1527
      %v1673 = vmax.f32 %v1672, 0.0
      %s1674 = scalar_lea.vmem %s278, 24
      %1675 = vst [vmem:[%s1674] sm:$0xff] %v1673
      %p1676 = scmp.lt.s32.totalorder %s18, 1
      %s1677 = scalar_select %p1676, %s18, 1
      %s1678 = smul.addr %s1677, 4
      %s1679 = smul.addr %s1678, 8
      %s1680 = scalar_lea.vmem %s7, %s1679
      // Predicated region
      $region49: #{res_block_forward.4} parent=47 // pred_check
        %p1681 = pneg %p188
      $region50: #{res_block_forward.4} parent=47 // pred_check_branch
        %1683 = sbr.rel (%p1681) target = $region52
      $region51: #{res_block_forward.4} parent=47 // pred_region
        _
      $region52: #{res_block_forward.4} parent=47 // pred_fallthru
        _
    $region48: #{res_block_forward.4} parent=5 // pred_fallthru
      _
    %p1684 = scmp.le.s32.totalorder 2, %s13
    // Predicated region
    $region53: #{res_block_forward.4} parent=5 // pred_check
      %p1685 = pneg %p1684
    $region54: #{res_block_forward.4} parent=5 // pred_check_branch
      %1687 = sbr.rel (%p1685) target = $region56
    $region55: #{res_block_forward.4} parent=5 // pred_region
      %s1688 = ssub.s32 %s13, 2
      // Predicated region
      $region57: #{res_block_forward.4} parent=55 // pred_check
        %p1689 = pneg %p194
      $region58: #{res_block_forward.4} parent=55 // pred_check_branch
        %1691 = sbr.rel (%p1689) target = $region60
      $region59: #{res_block_forward.4} parent=55 // pred_region
        %p1692 = scmp.lt.s32.totalorder %s19, 1
        %s1693 = scalar_select %p1692, %s19, 1
        %s1694 = smul.addr %s1693, 4
        %s1695 = smul.addr %s1694, 8
        %s1696 = scalar_lea.vmem %s7, %s1695
      $region60: #{res_block_forward.4} parent=55 // pred_fallthru
        _
    $region56: #{res_block_forward.4} parent=5 // pred_fallthru
      _
  $region6: #{res_block_forward.4} parent=0 // loop_footer
    %s17 = sadd.s32 1, %s13
  $region7: #{res_block_forward.4} parent=0 // loop_footer_branch
    %12 = sbr.rel target = $region3
  $region8: #{res_block_forward.4} parent=0 // loop_exit
    _

// kernel: res_block_forward.5
$region0: #{res_block_forward.5}
  #allocation0 [shape = 'u32[]', space=smem, size = 0x4, offset = 0x4, fixed_abs, tag = 'smem constant byte address 0x4 - core index']
  #allocation1 [shape = 'u32[144,128]{1,0:T(1,128)}', space=vmem, size = 0x12000, scoped, tag = 'internal scratch']
  #allocation2 [shape = 'bf16[6,32,128]{2,1,0:T(16,128)(2,1)}', space=vmem, size = 0xc000, scoped, tag = 'scratch operand']
  %s0 = inlined_call_operand.vmem [shape: bf16[2,4,16,256], index: 0, kind: input, shape index: {}]
  %s1 = inlined_call_operand.vmem [shape: bf16[32,144], index: 1, kind: input, shape index: {}]
  %s2 = inlined_call_operand.vmem [shape: f32[32,1], index: 2, kind: input, shape index: {}]
  %s3 = inlined_call_operand.vmem [shape: f32[32,1], index: 3, kind: input, shape index: {}]
  %s4 = inlined_call_operand.vmem [shape: bf16[8,96], index: 4, kind: input, shape index: {}]
  %s5 = inlined_call_operand.vmem [shape: f32[8,1], index: 5, kind: input, shape index: {}]
  %s6 = inlined_call_operand.vmem [shape: f32[8,1], index: 6, kind: input, shape index: {}]
  %s7 = inlined_call_operand.vmem [shape: f32[2,4,8,128], index: 7, kind: input, shape index: {}]
  %s8 = inlined_call_operand.vmem [shape: f32[2,4,8,128], index: 8, kind: output, shape index: {}]
  %s9 = sld [smem:[#allocation0]]
  $region65: #{res_block_forward.5} parent=0
    _
  %s11 = ssub.s32 1, %s9
  %s12 = scalar_select 0, %s11, %s9
  loop: start=0, step=1, limit=4
  $region2: #{res_block_forward.5} parent=0 // loop_pre_header
    _
  $region3: #{res_block_forward.5} parent=0 // loop_header
    %s14 = sphi 0, %s18
    %p15 = scmp.ge.s32.totalorder %s14, 4
    %s24 = sphi 0, %s26
    %s27 = sphi 0, %s24
    %s28 = sphi 0, %s27
    %s44 = sphi 0, %s28
    %s48 = sphi 0, %s48
    %s50 = sphi 0, %s48
    %s51 = sphi 0, %s50
    %s65 = sphi 0, %s51
    %s69 = sphi 0, %s69
    %s71 = sphi 0, %s69
    %s72 = sphi 0, %s71
    %s86 = sphi 0, %s72
    %s90 = sphi 0, %s90
    %s92 = sphi 0, %s90
    %s93 = sphi 0, %s92
    %s107 = sphi 0, %s93
    %s111 = sphi 0, %s111
    %s113 = sphi 0, %s111
    %s114 = sphi 0, %s113
    %s128 = sphi 0, %s114
    %s132 = sphi 0, %s132
    %s134 = sphi 0, %s132
    %s135 = sphi 0, %s134
    %s149 = sphi 0, %s135
    %s153 = sphi 0, %s153
    %s155 = sphi 0, %s153
    %s156 = sphi 0, %s155
    %s170 = sphi 0, %s156
    %s176 = sphi 0, %s178
    %s179 = sphi 0, %s176
    %s180 = sphi 0, %s179
    %s196 = sphi 0, %s180
    %s202 = sphi 0, %s204
    %s205 = sphi 0, %s202
    %s206 = sphi 0, %s205
    %s222 = sphi 0, %s206
  $region4: #{res_block_forward.5} parent=0 // loop_header_branch
    %17 = sbr.rel (%p15) target = $region8
  $region5: #{res_block_forward.5} parent=0 // loop_body
    %s19 = ssub.s32 %s14, 1
    %s20 = ssub.s32 %s14, 2
    %s21 = sadd.s32 %s14, 1
    %s22 = ssub.s32 %s14, %s21
    %p23 = scmp.eq.s32.totalorder %s22, 0
    %s25 = sadd.s32 %s24, 1
    %s26 = scalar_select %p23, %s24, %s25
    %p29 = pneg %p23
    %p30 = scmp.eq.s32.totalorder %s14, 1
    %p31 = por %p29, %p30
    %p32 = scmp.ne.s32.totalorder %s24, %s27
    %p33 = scmp.eq.s32.totalorder %s14, 0
    %p34 = por %p32, %p33
    %p35 = scmp.ne.s32.totalorder %s24, %s27
    %p36 = scmp.eq.s32.totalorder %s19, 1
    %p37 = por %p35, %p36
    %p38 = scmp.ne.s32.totalorder %s27, %s28
    %p39 = scmp.eq.s32.totalorder %s19, 0
    %p40 = por %p38, %p39
    %p41 = scmp.ne.s32.totalorder %s27, %s28
    %p42 = scmp.eq.s32.totalorder %s20, 1
    %p43 = por %p41, %p42
    %p45 = scmp.ne.s32.totalorder %s28, %s44
    %p46 = scmp.eq.s32.totalorder %s20, 0
    %p47 = por %p45, %p46
    %s49 = sadd.s32 %s48, 1
    %p52 = scmp.eq.s32.totalorder %s14, 1
    %p53 = scmp.ne.s32.totalorder %s48, %s50
    %p54 = scmp.eq.s32.totalorder %s14, 0
    %p55 = por %p53, %p54
    %p56 = scmp.ne.s32.totalorder %s48, %s50
    %p57 = scmp.eq.s32.totalorder %s19, 1
    %p58 = por %p56, %p57
    %p59 = scmp.ne.s32.totalorder %s50, %s51
    %p60 = scmp.eq.s32.totalorder %s19, 0
    %p61 = por %p59, %p60
    %p62 = scmp.ne.s32.totalorder %s50, %s51
    %p63 = scmp.eq.s32.totalorder %s20, 1
    %p64 = por %p62, %p63
    %p66 = scmp.ne.s32.totalorder %s51, %s65
    %p67 = scmp.eq.s32.totalorder %s20, 0
    %p68 = por %p66, %p67
    %s70 = sadd.s32 %s69, 1
    %p73 = scmp.eq.s32.totalorder %s14, 1
    %p74 = scmp.ne.s32.totalorder %s69, %s71
    %p75 = scmp.eq.s32.totalorder %s14, 0
    %p76 = por %p74, %p75
    %p77 = scmp.ne.s32.totalorder %s69, %s71
    %p78 = scmp.eq.s32.totalorder %s19, 1
    %p79 = por %p77, %p78
    %p80 = scmp.ne.s32.totalorder %s71, %s72
    %p81 = scmp.eq.s32.totalorder %s19, 0
    %p82 = por %p80, %p81
    %p83 = scmp.ne.s32.totalorder %s71, %s72
    %p84 = scmp.eq.s32.totalorder %s20, 1
    %p85 = por %p83, %p84
    %p87 = scmp.ne.s32.totalorder %s72, %s86
    %p88 = scmp.eq.s32.totalorder %s20, 0
    %p89 = por %p87, %p88
    %s91 = sadd.s32 %s90, 1
    %p94 = scmp.eq.s32.totalorder %s14, 1
    %p95 = scmp.ne.s32.totalorder %s90, %s92
    %p96 = scmp.eq.s32.totalorder %s14, 0
    %p97 = por %p95, %p96
    %p98 = scmp.ne.s32.totalorder %s90, %s92
    %p99 = scmp.eq.s32.totalorder %s19, 1
    %p100 = por %p98, %p99
    %p101 = scmp.ne.s32.totalorder %s92, %s93
    %p102 = scmp.eq.s32.totalorder %s19, 0
    %p103 = por %p101, %p102
    %p104 = scmp.ne.s32.totalorder %s92, %s93
    %p105 = scmp.eq.s32.totalorder %s20, 1
    %p106 = por %p104, %p105
    %p108 = scmp.ne.s32.totalorder %s93, %s107
    %p109 = scmp.eq.s32.totalorder %s20, 0
    %p110 = por %p108, %p109
    %s112 = sadd.s32 %s111, 1
    %p115 = scmp.eq.s32.totalorder %s14, 1
    %p116 = scmp.ne.s32.totalorder %s111, %s113
    %p117 = scmp.eq.s32.totalorder %s14, 0
    %p118 = por %p116, %p117
    %p119 = scmp.ne.s32.totalorder %s111, %s113
    %p120 = scmp.eq.s32.totalorder %s19, 1
    %p121 = por %p119, %p120
    %p122 = scmp.ne.s32.totalorder %s113, %s114
    %p123 = scmp.eq.s32.totalorder %s19, 0
    %p124 = por %p122, %p123
    %p125 = scmp.ne.s32.totalorder %s113, %s114
    %p126 = scmp.eq.s32.totalorder %s20, 1
    %p127 = por %p125, %p126
    %p129 = scmp.ne.s32.totalorder %s114, %s128
    %p130 = scmp.eq.s32.totalorder %s20, 0
    %p131 = por %p129, %p130
    %s133 = sadd.s32 %s132, 1
    %p136 = scmp.eq.s32.totalorder %s14, 1
    %p137 = scmp.ne.s32.totalorder %s132, %s134
    %p138 = scmp.eq.s32.totalorder %s14, 0
    %p139 = por %p137, %p138
    %p140 = scmp.ne.s32.totalorder %s132, %s134
    %p141 = scmp.eq.s32.totalorder %s19, 1
    %p142 = por %p140, %p141
    %p143 = scmp.ne.s32.totalorder %s134, %s135
    %p144 = scmp.eq.s32.totalorder %s19, 0
    %p145 = por %p143, %p144
    %p146 = scmp.ne.s32.totalorder %s134, %s135
    %p147 = scmp.eq.s32.totalorder %s20, 1
    %p148 = por %p146, %p147
    %p150 = scmp.ne.s32.totalorder %s135, %s149
    %p151 = scmp.eq.s32.totalorder %s20, 0
    %p152 = por %p150, %p151
    %s154 = sadd.s32 %s153, 1
    %p157 = scmp.eq.s32.totalorder %s14, 1
    %p158 = scmp.ne.s32.totalorder %s153, %s155
    %p159 = scmp.eq.s32.totalorder %s14, 0
    %p160 = por %p158, %p159
    %p161 = scmp.ne.s32.totalorder %s153, %s155
    %p162 = scmp.eq.s32.totalorder %s19, 1
    %p163 = por %p161, %p162
    %p164 = scmp.ne.s32.totalorder %s155, %s156
    %p165 = scmp.eq.s32.totalorder %s19, 0
    %p166 = por %p164, %p165
    %p167 = scmp.ne.s32.totalorder %s155, %s156
    %p168 = scmp.eq.s32.totalorder %s20, 1
    %p169 = por %p167, %p168
    %p171 = scmp.ne.s32.totalorder %s156, %s170
    %p172 = scmp.eq.s32.totalorder %s20, 0
    %p173 = por %p171, %p172
    %s174 = ssub.s32 %s14, %s21
    %p175 = scmp.eq.s32.totalorder %s174, 0
    %s177 = sadd.s32 %s176, 1
    %s178 = scalar_select %p175, %s176, %s177
    %p181 = pneg %p175
    %p182 = scmp.eq.s32.totalorder %s14, 1
    %p183 = por %p181, %p182
    %p184 = scmp.ne.s32.totalorder %s176, %s179
    %p185 = scmp.eq.s32.totalorder %s14, 0
    %p186 = por %p184, %p185
    %p187 = scmp.ne.s32.totalorder %s176, %s179
    %p188 = scmp.eq.s32.totalorder %s19, 1
    %p189 = por %p187, %p188
    %p190 = scmp.ne.s32.totalorder %s179, %s180
    %p191 = scmp.eq.s32.totalorder %s19, 0
    %p192 = por %p190, %p191
    %p193 = scmp.ne.s32.totalorder %s179, %s180
    %p194 = scmp.eq.s32.totalorder %s20, 1
    %p195 = por %p193, %p194
    %p197 = scmp.ne.s32.totalorder %s180, %s196
    %p198 = scmp.eq.s32.totalorder %s20, 0
    %p199 = por %p197, %p198
    %s200 = ssub.s32 %s14, %s21
    %p201 = scmp.eq.s32.totalorder %s200, 0
    %s203 = sadd.s32 %s202, 1
    %s204 = scalar_select %p201, %s202, %s203
    %p207 = pneg %p201
    %p208 = scmp.eq.s32.totalorder %s14, 1
    %p209 = por %p207, %p208
    %p210 = scmp.ne.s32.totalorder %s202, %s205
    %p211 = scmp.eq.s32.totalorder %s14, 0
    %p212 = por %p210, %p211
    %p213 = scmp.ne.s32.totalorder %s202, %s205
    %p214 = scmp.eq.s32.totalorder %s19, 1
    %p215 = por %p213, %p214
    %p216 = scmp.ne.s32.totalorder %s205, %s206
    %p217 = scmp.eq.s32.totalorder %s19, 0
    %p218 = por %p216, %p217
    %p219 = scmp.ne.s32.totalorder %s205, %s206
    %p220 = scmp.eq.s32.totalorder %s20, 1
    %p221 = por %p219, %p220
    %p223 = scmp.ne.s32.totalorder %s206, %s222
    %p224 = scmp.eq.s32.totalorder %s20, 0
    %p225 = por %p223, %p224
    %p226 = scmp.le.s32.totalorder 1, %s14
    %p227 = scmp.lt.s32.totalorder %s14, 3
    %p228 = pnand %p226, %p227
    %p229 = pneg %p228
    // Predicated region
    $region9: #{res_block_forward.5} parent=5 // pred_check
      _
    $region10: #{res_block_forward.5} parent=5 // pred_check_branch
      %231 = sbr.rel (%p228) target = $region12
    $region11: #{res_block_forward.5} parent=5 // pred_region
      %s232 = ssub.s32 %s14, 1
      // Predicated region
      $region13: #{res_block_forward.5} parent=11 // pred_check
        %p233 = pneg %p61
      $region14: #{res_block_forward.5} parent=11 // pred_check_branch
        %235 = sbr.rel (%p233) target = $region16
      $region15: #{res_block_forward.5} parent=11 // pred_region
        _
      $region16: #{res_block_forward.5} parent=11 // pred_fallthru
        _
      // Predicated region
      $region17: #{res_block_forward.5} parent=11 // pred_check
        %p236 = pneg %p82
      $region18: #{res_block_forward.5} parent=11 // pred_check_branch
        %238 = sbr.rel (%p236) target = $region20
      $region19: #{res_block_forward.5} parent=11 // pred_region
        _
      $region20: #{res_block_forward.5} parent=11 // pred_fallthru
        _
      // Predicated region
      $region21: #{res_block_forward.5} parent=11 // pred_check
        %p239 = pneg %p103
      $region22: #{res_block_forward.5} parent=11 // pred_check_branch
        %241 = sbr.rel (%p239) target = $region24
      $region23: #{res_block_forward.5} parent=11 // pred_region
        _
      $region24: #{res_block_forward.5} parent=11 // pred_fallthru
        _
      // Predicated region
      $region25: #{res_block_forward.5} parent=11 // pred_check
        %p242 = pneg %p124
      $region26: #{res_block_forward.5} parent=11 // pred_check_branch
        %244 = sbr.rel (%p242) target = $region28
      $region27: #{res_block_forward.5} parent=11 // pred_region
        _
      $region28: #{res_block_forward.5} parent=11 // pred_fallthru
        _
      // Predicated region
      $region29: #{res_block_forward.5} parent=11 // pred_check
        %p245 = pneg %p145
      $region30: #{res_block_forward.5} parent=11 // pred_check_branch
        %247 = sbr.rel (%p245) target = $region32
      $region31: #{res_block_forward.5} parent=11 // pred_region
        _
      $region32: #{res_block_forward.5} parent=11 // pred_fallthru
        _
      // Predicated region
      $region33: #{res_block_forward.5} parent=11 // pred_check
        %p248 = pneg %p166
      $region34: #{res_block_forward.5} parent=11 // pred_check_branch
        %250 = sbr.rel (%p248) target = $region36
      $region35: #{res_block_forward.5} parent=11 // pred_region
        _
      $region36: #{res_block_forward.5} parent=11 // pred_fallthru
        _
    $region12: #{res_block_forward.5} parent=5 // pred_fallthru
      _
    %p251 = scmp.lt.s32.totalorder %s14, 2
    // Predicated region
    $region37: #{res_block_forward.5} parent=5 // pred_check
      %p252 = pneg %p251
    $region38: #{res_block_forward.5} parent=5 // pred_check_branch
      %254 = sbr.rel (%p252) target = $region40
    $region39: #{res_block_forward.5} parent=5 // pred_region
      // Predicated region
      $region41: #{res_block_forward.5} parent=39 // pred_check
        %p255 = pneg %p34
      $region42: #{res_block_forward.5} parent=39 // pred_check_branch
        %257 = sbr.rel (%p255) target = $region44
      $region43: #{res_block_forward.5} parent=39 // pred_region
        %p258 = scmp.lt.s32.totalorder %s14, 1
        %s259 = scalar_select %p258, %s14, 1
        %s260 = smul.addr %s259, 16
        %s261 = smul.addr %s260, 4
        %s262 = scalar_lea.vmem %s0, %s261
      $region44: #{res_block_forward.5} parent=39 // pred_fallthru
        _
      // Predicated region
      $region45: #{res_block_forward.5} parent=39 // pred_check
        %p263 = pneg %p186
      $region46: #{res_block_forward.5} parent=39 // pred_check_branch
        %265 = sbr.rel (%p263) target = $region48
      $region47: #{res_block_forward.5} parent=39 // pred_region
        %p266 = scmp.lt.s32.totalorder %s14, 1
        %s267 = scalar_select %p266, %s14, 1
        %s268 = smul.addr %s267, 4
        %s269 = smul.addr %s268, 8
        %s270 = scalar_lea.vmem %s7, %s269
      $region48: #{res_block_forward.5} parent=39 // pred_fallthru
        _
    $region40: #{res_block_forward.5} parent=5 // pred_fallthru
      _
    %p271 = scmp.le.s32.totalorder 1, %s14
    %p272 = scmp.lt.s32.totalorder %s14, 3
    %p273 = pnand %p271, %p272
    %p274 = pneg %p273
    // Predicated region
    $region49: #{res_block_forward.5} parent=5 // pred_check
      _
    $region50: #{res_block_forward.5} parent=5 // pred_check_branch
      %276 = sbr.rel (%p273) target = $region52
    $region51: #{res_block_forward.5} parent=5 // pred_region
      %s277 = ssub.s32 %s14, 1
      %p278 = scmp.lt.s32.totalorder %s19, 1
      %s279 = scalar_select %p278, %s19, 1
      %s280 = smul.addr %s279, 16
      %s281 = smul.addr %s280, 4
      %s282 = scalar_lea.vmem %s0, %s281
      %p283 = pneg %p40
      %p284 = pneg %p37
      %p285 = pneg %p61
      %p286 = pneg %p58
      %p287 = pneg %p82
      %p288 = pneg %p79
      %p289 = pneg %p103
      %p290 = pneg %p100
      %p291 = pneg %p124
      %p292 = pneg %p121
      %p293 = pneg %p145
      %p294 = pneg %p142
      %p295 = pneg %p166
      %p296 = pneg %p163
      %p297 = scmp.lt.s32.totalorder %s19, 1
      %s298 = scalar_select %p297, %s19, 1
      %s299 = smul.addr %s298, 4
      %s300 = smul.addr %s299, 8
      %s301 = scalar_lea.vmem %s7, %s300
      %p302 = pneg %p192
      %p303 = pneg %p189
      %p304 = pneg %p218
      %p305 = pneg %p215
      %p306 = scmp.lt.s32.totalorder %s19, 1
      %s307 = scalar_select %p306, %s19, 1
      %s308 = smul.addr %s307, 4
      %s309 = smul.addr %s308, 8
      %s310 = scalar_lea.vmem %s8, %s309
      %p311 = scmp.lt.s32.totalorder %s19, 1
      %s312 = scalar_select %p311, %s19, 1
      %s313 = smul.addr %s312, 16
      %s314 = smul.addr %s313, 4
      %s315 = scalar_lea.vmem %s0, %s314
      %p316 = scmp.lt.s32.totalorder %s19, 1
      %s317 = scalar_select %p316, %s19, 1
      %s318 = smul.addr %s317, 4
      %s319 = smul.addr %s318, 8
      %s320 = scalar_lea.vmem %s7, %s319
      %p321 = scmp.lt.s32.totalorder %s19, 1
      %s322 = scalar_select %p321, %s19, 1
      %s323 = smul.addr %s322, 4
      %s324 = smul.addr %s323, 8
      %s325 = scalar_lea.vmem %s8, %s324
      %v327 = vld [vmem:[%s1] sm:$0xff]
      %v328 = vld [vmem:[%s1 + $0x8] sm:$0xff]
      %v329 = vld [vmem:[%s1 + $0x10] sm:$0xff]
      %v330 = vld [vmem:[%s1 + $0x18] sm:$0xff]
      %v331 = vld [vmem:[%s2] sm:$0xff]
      %v332 = vld [vmem:[%s2 + $0x8] sm:$0xff]
      %v333 = vld [vmem:[%s2 + $0x10] sm:$0xff]
      %v334 = vld [vmem:[%s2 + $0x18] sm:$0xff]
      %v335 = vld [vmem:[%s3] sm:$0xff]
      %v336 = vld [vmem:[%s3 + $0x8] sm:$0xff]
      %v337 = vld [vmem:[%s3 + $0x10] sm:$0xff]
      %v338 = vld [vmem:[%s3 + $0x18] sm:$0xff]
      %339 = vst [vmem:[#allocation2] sm:$0xff] 0
      %340 = vst [vmem:[#allocation2 + $0x8] sm:$0xff] 0
      %s341 = scalar_lea.vmem [#allocation2], 80
      %342 = vst [vmem:[%s341] sm:$0xff] 0
      %343 = vst [vmem:[%s341 + $0x8] sm:$0xff] 0
      %v344 = vld [vmem:[%s315] sm:$0xf]
      %v345 = vld [vmem:[%s315 + $0x8] sm:$0xf]
      %v346 = vld [vmem:[%s315] sm:$0xff]
      %v347 = vld [vmem:[%s315 + $0x8] sm:$0xff]
      %v350 = vunpack.c.l.b16 %v344
      %v351 = vunpack.c.l.b16 %v345
      %v352 = vpack.c.b16 %v351, %v350
      %v356 = vunpack.c.l.b16 %v346
      %v357 = vunpack.c.h.b16 %v346
      %v358 = vunpack.c.l.b16 %v347
      %v359 = vunpack.c.h.b16 %v347
      %v360 = vpack.c.b16 %v358, %v356
      %v361 = vpack.c.b16 %v359, %v357
      %362 = vrot.lane.b32.xlu0 %v360, 127
      %v363 = vpop.permute.xlu0 %362
      %364 = vrot.lane.b32.xlu0 %v361, 127
      %v365 = vpop.permute.xlu0 %364
      %vm366 = vcmask 1039360
      %v367 = vsel %vm366, %v363, %v365
      %369 = vrot.lane.b32.xlu0 %v360, 126
      %v370 = vpop.permute.xlu0 %369
      %371 = vrot.lane.b32.xlu0 %v361, 126
      %v372 = vpop.permute.xlu0 %371
      %vm373 = vcmask 1031168
      %v374 = vsel %vm373, %v370, %v372
      %376 = vrot.lane.b32.xlu0 %v360, 118
      %v377 = vpop.permute.xlu0 %376
      %378 = vrot.lane.b32.xlu0 %v361, 118
      %v379 = vpop.permute.xlu0 %378
      %vm380 = vcmask 965632
      %v381 = vsel %vm380, %v377, %v379
      %383 = vrot.lane.b32.xlu0 %v360, 117
      %v384 = vpop.permute.xlu0 %383
      %385 = vrot.lane.b32.xlu0 %v361, 117
      %v386 = vpop.permute.xlu0 %385
      %vm387 = vcmask 957440
      %v388 = vsel %vm387, %v384, %v386
      %390 = vrot.lane.b32.xlu0 %v360, 116
      %v391 = vpop.permute.xlu0 %390
      %392 = vrot.lane.b32.xlu0 %v361, 116
      %v393 = vpop.permute.xlu0 %392
      %vm394 = vcmask 949248
      %v395 = vsel %vm394, %v391, %v393
      %397 = vrot.lane.b32.xlu0 %v360, 108
      %v398 = vpop.permute.xlu0 %397
      %399 = vrot.lane.b32.xlu0 %v361, 108
      %v400 = vpop.permute.xlu0 %399
      %vm401 = vcmask 883712
      %v402 = vsel %vm401, %v398, %v400
      %404 = vrot.lane.b32.xlu0 %v360, 107
      %v405 = vpop.permute.xlu0 %404
      %406 = vrot.lane.b32.xlu0 %v361, 107
      %v407 = vpop.permute.xlu0 %406
      %vm408 = vcmask 875520
      %v409 = vsel %vm408, %v405, %v407
      %411 = vrot.lane.b32.xlu0 %v360, 106
      %v412 = vpop.permute.xlu0 %411
      %413 = vrot.lane.b32.xlu0 %v361, 106
      %v414 = vpop.permute.xlu0 %413
      %vm415 = vcmask 867328
      %v416 = vsel %vm415, %v412, %v414
      %v422 = vunpack.c.l.b16 %v327
      %v423 = vunpack.c.h.b16 %v327
      %v424 = vunpack.c.l.b16 %v328
      %v425 = vunpack.c.h.b16 %v328
      %v426 = vunpack.c.l.b16 %v329
      %v427 = vunpack.c.h.b16 %v329
      %v428 = vunpack.c.l.b16 %v330
      %v429 = vunpack.c.h.b16 %v330
      %v430 = vpack.c.b16 %v424, %v422
      %v431 = vpack.c.b16 %v425, %v423
      %v432 = vpack.c.b16 %v428, %v426
      %v433 = vpack.c.b16 %v429, %v427
      %vm436 = vcmask 130048
      %v438 = vsel %vm436, %v431, 0
      %v441 = vsel %vm436, %v433, 0
      %443 = vmatprep.subr.bf16.mxu0 0
      %444 = vmatpush1.bf16.msra.mxu0 %v352
      %445 = vmatprep.subr.bf16.mxu0 0
      %446 = vmatpush1.bf16.msra.mxu0 %v367
      %447 = vmatprep.subr.bf16.mxu0 0
      %448 = vmatpush1.bf16.msra.mxu0 %v374
      %449 = vmatprep.subr.bf16.mxu0 0
      %450 = vmatpush1.bf16.msra.mxu0 %v381
      %451 = vmatprep.subr.bf16.mxu0 0
      %452 = vmatpush1.bf16.msra.mxu0 %v388
      %453 = vmatprep.subr.bf16.mxu0 0
      %454 = vmatpush1.bf16.msra.mxu0 %v395
      %455 = vmatprep.subr.bf16.mxu0 0
      %456 = vmatpush1.bf16.msra.mxu0 %v402
      %457 = vmatprep.subr.bf16.mxu0 0
      %458 = vmatpush1.bf16.msra.mxu0 %v409
      %459 = vmatprep.subr.bf16.mxu0 0
      %460 = vmatpush1.bf16.msra.mxu0 %v416
      %461 = vmatprep.subr.bf16.mxu0 0
      %462 = vmatpush1.bf16.msra.mxu0 0
      %463 = vmatprep.subr.bf16.mxu0 0
      %464 = vmatpush1.bf16.msra.mxu0 0
      %465 = vmatprep.subr.bf16.mxu0 0
      %466 = vmatpush1.bf16.msra.mxu0 0
      %467 = vmatprep.subr.bf16.mxu0 0
      %468 = vmatpush1.bf16.msra.mxu0 0
      %469 = vmatprep.subr.bf16.mxu0 0
      %470 = vmatpush1.bf16.msra.mxu0 0
      %471 = vmatprep.subr.bf16.mxu0 0
      %472 = vmatpush1.bf16.msra.mxu0 0
      %473 = vmatprep.subr.bf16.mxu0 0
      %474 = vmatpush1.bf16.msra.mxu0 0
      %475 = vmatprep.mubr.bf16.mxu0 %v438
      %476 = vmatmul.mubr.bf16.gmra.mrb[0].mxu0 %v430
      %v477 = vpop.f32.mrb[0].mxu0
      %v478 = vadd.f32 0.0, %v477
      %v479 = vpop.f32.mrb[0].mxu0
      %v480 = vpop.f32.mrb[0].mxu0
      %v481 = vadd.f32 0.0, %v480
      %v482 = vpop.f32.mrb[0].mxu0
      %483 = vmatprep.mubr.bf16.mxu0 %v441
      %484 = vmatmul.mubr.bf16.gmra.mrb[0].mxu0 %v432
      %v485 = vpop.f32.mrb[0].mxu0
      %v486 = vadd.f32 0.0, %v485
      %v487 = vpop.f32.mrb[0].mxu0
      %v488 = vpop.f32.mrb[0].mxu0
      %v489 = vadd.f32 0.0, %v488
      %v490 = vpop.f32.mrb[0].mxu0
      %491 = vdwg.mxu0
      %493 = vset.pattern.permute.xlu0 0
      %494 = vperm.xlu0 %493, %v331
      %v495 = vpop.permute.xlu0 %494
      %498 = vset.pattern.permute.xlu0 0
      %499 = vperm.xlu0 %498, %v332
      %v500 = vpop.permute.xlu0 %499
      %503 = vset.pattern.permute.xlu0 0
      %504 = vperm.xlu0 %503, %v333
      %v505 = vpop.permute.xlu0 %504
      %508 = vset.pattern.permute.xlu0 0
      %509 = vperm.xlu0 %508, %v334
      %v510 = vpop.permute.xlu0 %509
      %v512 = vmul.f32 %v478, %v495
      %v513 = vmul.f32 %v481, %v500
      %v514 = vmul.f32 %v486, %v505
      %v515 = vmul.f32 %v489, %v510
      %517 = vset.pattern.permute.xlu0 0
      %518 = vperm.xlu0 %517, %v335
      %v519 = vpop.permute.xlu0 %518
      %522 = vset.pattern.permute.xlu0 0
      %523 = vperm.xlu0 %522, %v336
      %v524 = vpop.permute.xlu0 %523
      %527 = vset.pattern.permute.xlu0 0
      %528 = vperm.xlu0 %527, %v337
      %v529 = vpop.permute.xlu0 %528
      %532 = vset.pattern.permute.xlu0 0
      %533 = vperm.xlu0 %532, %v338
      %v534 = vpop.permute.xlu0 %533
      %v536 = vadd.f32 %v512, %v519
      %v537 = vadd.f32 %v513, %v524
      %v538 = vadd.f32 %v514, %v529
      %v539 = vadd.f32 %v515, %v534
      %v540 = vmax.f32 %v536, 0.0
      %v541 = vmax.f32 %v537, 0.0
      %v542 = vmax.f32 %v538, 0.0
      %v543 = vmax.f32 %v539, 0.0
      %v544 = vpack.c.bf16 %v541, %v540
      %v545 = vpack.c.bf16 %v543, %v542
      %s546 = scalar_lea.vmem [#allocation2], 16
      %547 = vst [vmem:[%s546] sm:$0xff] %v544
      %548 = vst [vmem:[%s546 + $0x8] sm:$0xff] %v545
      %s549 = scalar_lea.vmem %s315, 16
      %v550 = vld [vmem:[%s549] sm:$0xf]
      %v551 = vld [vmem:[%s549 + $0x8] sm:$0xf]
      %v552 = vld [vmem:[%s549] sm:$0xff]
      %v553 = vld [vmem:[%s549 + $0x8] sm:$0xff]
      %v556 = vunpack.c.l.b16 %v550
      %v557 = vunpack.c.l.b16 %v551
      %v558 = vpack.c.b16 %v557, %v556
      %v562 = vunpack.c.l.b16 %v552
      %v563 = vunpack.c.h.b16 %v552
      %v564 = vunpack.c.l.b16 %v553
      %v565 = vunpack.c.h.b16 %v553
      %v566 = vpack.c.b16 %v564, %v562
      %v567 = vpack.c.b16 %v565, %v563
      %568 = vrot.lane.b32.xlu0 %v566, 127
      %v569 = vpop.permute.xlu0 %568
      %570 = vrot.lane.b32.xlu0 %v567, 127
      %v571 = vpop.permute.xlu0 %570
      %v572 = vsel %vm366, %v569, %v571
      %574 = vrot.lane.b32.xlu0 %v566, 126
      %v575 = vpop.permute.xlu0 %574
      %576 = vrot.lane.b32.xlu0 %v567, 126
      %v577 = vpop.permute.xlu0 %576
      %v578 = vsel %vm373, %v575, %v577
      %580 = vrot.lane.b32.xlu0 %v566, 118
      %v581 = vpop.permute.xlu0 %580
      %582 = vrot.lane.b32.xlu0 %v567, 118
      %v583 = vpop.permute.xlu0 %582
      %v584 = vsel %vm380, %v581, %v583
      %586 = vrot.lane.b32.xlu0 %v566, 117
      %v587 = vpop.permute.xlu0 %586
      %588 = vrot.lane.b32.xlu0 %v567, 117
      %v589 = vpop.permute.xlu0 %588
      %v590 = vsel %vm387, %v587, %v589
      %592 = vrot.lane.b32.xlu0 %v566, 116
      %v593 = vpop.permute.xlu0 %592
      %594 = vrot.lane.b32.xlu0 %v567, 116
      %v595 = vpop.permute.xlu0 %594
      %v596 = vsel %vm394, %v593, %v595
      %598 = vrot.lane.b32.xlu0 %v566, 108
      %v599 = vpop.permute.xlu0 %598
      %600 = vrot.lane.b32.xlu0 %v567, 108
      %v601 = vpop.permute.xlu0 %600
      %v602 = vsel %vm401, %v599, %v601
      %604 = vrot.lane.b32.xlu0 %v566, 107
      %v605 = vpop.permute.xlu0 %604
      %606 = vrot.lane.b32.xlu0 %v567, 107
      %v607 = vpop.permute.xlu0 %606
      %v608 = vsel %vm408, %v605, %v607
      %610 = vrot.lane.b32.xlu0 %v566, 106
      %v611 = vpop.permute.xlu0 %610
      %612 = vrot.lane.b32.xlu0 %v567, 106
      %v613 = vpop.permute.xlu0 %612
      %v614 = vsel %vm415, %v611, %v613
      %616 = vmatprep.subr.bf16.mxu0 0
      %617 = vmatpush1.bf16.msra.mxu0 %v558
      %618 = vmatprep.subr.bf16.mxu0 0
      %619 = vmatpush1.bf16.msra.mxu0 %v572
      %620 = vmatprep.subr.bf16.mxu0 0
      %621 = vmatpush1.bf16.msra.mxu0 %v578
      %622 = vmatprep.subr.bf16.mxu0 0
      %623 = vmatpush1.bf16.msra.mxu0 %v584
      %624 = vmatprep.subr.bf16.mxu0 0
      %625 = vmatpush1.bf16.msra.mxu0 %v590
      %626 = vmatprep.subr.bf16.mxu0 0
      %627 = vmatpush1.bf16.msra.mxu0 %v596
      %628 = vmatprep.subr.bf16.mxu0 0
      %629 = vmatpush1.bf16.msra.mxu0 %v602
      %630 = vmatprep.subr.bf16.mxu0 0
      %631 = vmatpush1.bf16.msra.mxu0 %v608
      %632 = vmatprep.subr.bf16.mxu0 0
      %633 = vmatpush1.bf16.msra.mxu0 %v614
      %634 = vmatprep.subr.bf16.mxu0 0
      %635 = vmatpush1.bf16.msra.mxu0 0
      %636 = vmatprep.subr.bf16.mxu0 0
      %637 = vmatpush1.bf16.msra.mxu0 0
      %638 = vmatprep.subr.bf16.mxu0 0
      %639 = vmatpush1.bf16.msra.mxu0 0
      %640 = vmatprep.subr.bf16.mxu0 0
      %641 = vmatpush1.bf16.msra.mxu0 0
      %642 = vmatprep.subr.bf16.mxu0 0
      %643 = vmatpush1.bf16.msra.mxu0 0
      %644 = vmatprep.subr.bf16.mxu0 0
      %645 = vmatpush1.bf16.msra.mxu0 0
      %646 = vmatprep.subr.bf16.mxu0 0
      %647 = vmatpush1.bf16.msra.mxu0 0
      %648 = vmatprep.mubr.bf16.mxu0 %v438
      %649 = vmatmul.mubr.bf16.gmra.mrb[0].mxu0 %v430
      %v650 = vpop.f32.mrb[0].mxu0
      %v651 = vadd.f32 0.0, %v650
      %v652 = vpop.f32.mrb[0].mxu0
      %v653 = vpop.f32.mrb[0].mxu0
      %v654 = vadd.f32 0.0, %v653
      %v655 = vpop.f32.mrb[0].mxu0
      %656 = vmatprep.mubr.bf16.mxu0 %v441
      %657 = vmatmul.mubr.bf16.gmra.mrb[0].mxu0 %v432
      %v658 = vpop.f32.mrb[0].mxu0
      %v659 = vadd.f32 0.0, %v658
      %v660 = vpop.f32.mrb[0].mxu0
      %v661 = vpop.f32.mrb[0].mxu0
      %v662 = vadd.f32 0.0, %v661
      %v663 = vpop.f32.mrb[0].mxu0
      %664 = vdwg.mxu0
      %v665 = vmul.f32 %v651, %v495
      %v666 = vmul.f32 %v654, %v500
      %v667 = vmul.f32 %v659, %v505
      %v668 = vmul.f32 %v662, %v510
      %v669 = vadd.f32 %v665, %v519
      %v670 = vadd.f32 %v666, %v524
      %v671 = vadd.f32 %v667, %v529
      %v672 = vadd.f32 %v668, %v534
      %v673 = vmax.f32 %v669, 0.0
      %v674 = vmax.f32 %v670, 0.0
      %v675 = vmax.f32 %v671, 0.0
      %v676 = vmax.f32 %v672, 0.0
      %v677 = vpack.c.bf16 %v674, %v673
      %v678 = vpack.c.bf16 %v676, %v675
      %s679 = scalar_lea.vmem [#allocation2], 32
      %680 = vst [vmem:[%s679] sm:$0xff] %v677
      %681 = vst [vmem:[%s679 + $0x8] sm:$0xff] %v678
      %s682 = scalar_lea.vmem %s315, 32
      %v683 = vld [vmem:[%s682] sm:$0xf]
      %v684 = vld [vmem:[%s682 + $0x8] sm:$0xf]
      %v685 = vld [vmem:[%s682] sm:$0xff]
      %v686 = vld [vmem:[%s682 + $0x8] sm:$0xff]
      %v689 = vunpack.c.l.b16 %v683
      %v690 = vunpack.c.l.b16 %v684
      %v691 = vpack.c.b16 %v690, %v689
      %v695 = vunpack.c.l.b16 %v685
      %v696 = vunpack.c.h.b16 %v685
      %v697 = vunpack.c.l.b16 %v686
      %v698 = vunpack.c.h.b16 %v686
      %v699 = vpack.c.b16 %v697, %v695
      %v700 = vpack.c.b16 %v698, %v696
      %701 = vrot.lane.b32.xlu0 %v699, 127
      %v702 = vpop.permute.xlu0 %701
      %703 = vrot.lane.b32.xlu0 %v700, 127
      %v704 = vpop.permute.xlu0 %703
      %v705 = vsel %vm366, %v702, %v704
      %707 = vrot.lane.b32.xlu0 %v699, 126
      %v708 = vpop.permute.xlu0 %707
      %709 = vrot.lane.b32.xlu0 %v700, 126
      %v710 = vpop.permute.xlu0 %709
      %v711 = vsel %vm373, %v708, %v710
      %713 = vrot.lane.b32.xlu0 %v699, 118
      %v714 = vpop.permute.xlu0 %713
      %715 = vrot.lane.b32.xlu0 %v700, 118
      %v716 = vpop.permute.xlu0 %715
      %v717 = vsel %vm380, %v714, %v716
      %719 = vrot.lane.b32.xlu0 %v699, 117
      %v720 = vpop.permute.xlu0 %719
      %721 = vrot.lane.b32.xlu0 %v700, 117
      %v722 = vpop.permute.xlu0 %721
      %v723 = vsel %vm387, %v720, %v722
      %725 = vrot.lane.b32.xlu0 %v699, 116
      %v726 = vpop.permute.xlu0 %725
      %727 = vrot.lane.b32.xlu0 %v700, 116
      %v728 = vpop.permute.xlu0 %727
      %v729 = vsel %vm394, %v726, %v728
      %731 = vrot.lane.b32.xlu0 %v699, 108
      %v732 = vpop.permute.xlu0 %731
      %733 = vrot.lane.b32.xlu0 %v700, 108
      %v734 = vpop.permute.xlu0 %733
      %v735 = vsel %vm401, %v732, %v734
      %737 = vrot.lane.b32.xlu0 %v699, 107
      %v738 = vpop.permute.xlu0 %737
      %739 = vrot.lane.b32.xlu0 %v700, 107
      %v740 = vpop.permute.xlu0 %739
      %v741 = vsel %vm408, %v738, %v740
      %743 = vrot.lane.b32.xlu0 %v699, 106
      %v744 = vpop.permute.xlu0 %743
      %745 = vrot.lane.b32.xlu0 %v700, 106
      %v746 = vpop.permute.xlu0 %745
      %v747 = vsel %vm415, %v744, %v746
      %749 = vmatprep.subr.bf16.mxu0 0
      %750 = vmatpush1.bf16.msra.mxu0 %v691
      %751 = vmatprep.subr.bf16.mxu0 0
      %752 = vmatpush1.bf16.msra.mxu0 %v705
      %753 = vmatprep.subr.bf16.mxu0 0
      %754 = vmatpush1.bf16.msra.mxu0 %v711
      %755 = vmatprep.subr.bf16.mxu0 0
      %756 = vmatpush1.bf16.msra.mxu0 %v717
      %757 = vmatprep.subr.bf16.mxu0 0
      %758 = vmatpush1.bf16.msra.mxu0 %v723
      %759 = vmatprep.subr.bf16.mxu0 0
      %760 = vmatpush1.bf16.msra.mxu0 %v729
      %761 = vmatprep.subr.bf16.mxu0 0
      %762 = vmatpush1.bf16.msra.mxu0 %v735
      %763 = vmatprep.subr.bf16.mxu0 0
      %764 = vmatpush1.bf16.msra.mxu0 %v741
      %765 = vmatprep.subr.bf16.mxu0 0
      %766 = vmatpush1.bf16.msra.mxu0 %v747
      %767 = vmatprep.subr.bf16.mxu0 0
      %768 = vmatpush1.bf16.msra.mxu0 0
      %769 = vmatprep.subr.bf16.mxu0 0
      %770 = vmatpush1.bf16.msra.mxu0 0
      %771 = vmatprep.subr.bf16.mxu0 0
      %772 = vmatpush1.bf16.msra.mxu0 0
      %773 = vmatprep.subr.bf16.mxu0 0
      %774 = vmatpush1.bf16.msra.mxu0 0
      %775 = vmatprep.subr.bf16.mxu0 0
      %776 = vmatpush1.bf16.msra.mxu0 0
      %777 = vmatprep.subr.bf16.mxu0 0
      %778 = vmatpush1.bf16.msra.mxu0 0
      %779 = vmatprep.subr.bf16.mxu0 0
      %780 = vmatpush1.bf16.msra.mxu0 0
      %781 = vmatprep.mubr.bf16.mxu0 %v438
      %782 = vmatmul.mubr.bf16.gmra.mrb[0].mxu0 %v430
      %v783 = vpop.f32.mrb[0].mxu0
      %v784 = vadd.f32 0.0, %v783
      %v785 = vpop.f32.mrb[0].mxu0
      %v786 = vpop.f32.mrb[0].mxu0
      %v787 = vadd.f32 0.0, %v786
      %v788 = vpop.f32.mrb[0].mxu0
      %789 = vmatprep.mubr.bf16.mxu0 %v441
      %790 = vmatmul.mubr.bf16.gmra.mrb[0].mxu0 %v432
      %v791 = vpop.f32.mrb[0].mxu0
      %v792 = vadd.f32 0.0, %v791
      %v793 = vpop.f32.mrb[0].mxu0
      %v794 = vpop.f32.mrb[0].mxu0
      %v795 = vadd.f32 0.0, %v794
      %v796 = vpop.f32.mrb[0].mxu0
      %797 = vdwg.mxu0
      %v798 = vmul.f32 %v784, %v495
      %v799 = vmul.f32 %v787, %v500
      %v800 = vmul.f32 %v792, %v505
      %v801 = vmul.f32 %v795, %v510
      %v802 = vadd.f32 %v798, %v519
      %v803 = vadd.f32 %v799, %v524
      %v804 = vadd.f32 %v800, %v529
      %v805 = vadd.f32 %v801, %v534
      %v806 = vmax.f32 %v802, 0.0
      %v807 = vmax.f32 %v803, 0.0
      %v808 = vmax.f32 %v804, 0.0
      %v809 = vmax.f32 %v805, 0.0
      %v810 = vpack.c.bf16 %v807, %v806
      %v811 = vpack.c.bf16 %v809, %v808
      %s812 = scalar_lea.vmem [#allocation2], 48
      %813 = vst [vmem:[%s812] sm:$0xff] %v810
      %814 = vst [vmem:[%s812 + $0x8] sm:$0xff] %v811
      %s815 = scalar_lea.vmem %s315, 48
      %v816 = vld [vmem:[%s815] sm:$0xf]
      %v817 = vld [vmem:[%s815 + $0x8] sm:$0xf]
      %v818 = vld [vmem:[%s815] sm:$0xff]
      %v819 = vld [vmem:[%s815 + $0x8] sm:$0xff]
      %v822 = vunpack.c.l.b16 %v816
      %v823 = vunpack.c.l.b16 %v817
      %v824 = vpack.c.b16 %v823, %v822
      %v828 = vunpack.c.l.b16 %v818
      %v829 = vunpack.c.h.b16 %v818
      %v830 = vunpack.c.l.b16 %v819
      %v831 = vunpack.c.h.b16 %v819
      %v832 = vpack.c.b16 %v830, %v828
      %v833 = vpack.c.b16 %v831, %v829
      %834 = vrot.lane.b32.xlu0 %v832, 127
      %v835 = vpop.permute.xlu0 %834
      %836 = vrot.lane.b32.xlu0 %v833, 127
      %v837 = vpop.permute.xlu0 %836
      %v838 = vsel %vm366, %v835, %v837
      %840 = vrot.lane.b32.xlu0 %v832, 126
      %v841 = vpop.permute.xlu0 %840
      %842 = vrot.lane.b32.xlu0 %v833, 126
      %v843 = vpop.permute.xlu0 %842
      %v844 = vsel %vm373, %v841, %v843
      %846 = vrot.lane.b32.xlu0 %v832, 118
      %v847 = vpop.permute.xlu0 %846
      %848 = vrot.lane.b32.xlu0 %v833, 118
      %v849 = vpop.permute.xlu0 %848
      %v850 = vsel %vm380, %v847, %v849
      %852 = vrot.lane.b32.xlu0 %v832, 117
      %v853 = vpop.permute.xlu0 %852
      %854 = vrot.lane.b32.xlu0 %v833, 117
      %v855 = vpop.permute.xlu0 %854
      %v856 = vsel %vm387, %v853, %v855
      %858 = vrot.lane.b32.xlu0 %v832, 116
      %v859 = vpop.permute.xlu0 %858
      %860 = vrot.lane.b32.xlu0 %v833, 116
      %v861 = vpop.permute.xlu0 %860
      %v862 = vsel %vm394, %v859, %v861
      %864 = vrot.lane.b32.xlu0 %v832, 108
      %v865 = vpop.permute.xlu0 %864
      %866 = vrot.lane.b32.xlu0 %v833, 108
      %v867 = vpop.permute.xlu0 %866
      %v868 = vsel %vm401, %v865, %v867
      %870 = vrot.lane.b32.xlu0 %v832, 107
      %v871 = vpop.permute.xlu0 %870
      %872 = vrot.lane.b32.xlu0 %v833, 107
      %v873 = vpop.permute.xlu0 %872
      %v874 = vsel %vm408, %v871, %v873
      %876 = vrot.lane.b32.xlu0 %v832, 106
      %v877 = vpop.permute.xlu0 %876
      %878 = vrot.lane.b32.xlu0 %v833, 106
      %v879 = vpop.permute.xlu0 %878
      %v880 = vsel %vm415, %v877, %v879
      %882 = vmatprep.subr.bf16.mxu0 0
      %883 = vmatpush1.bf16.msra.mxu0 %v824
      %884 = vmatprep.subr.bf16.mxu0 0
      %885 = vmatpush1.bf16.msra.mxu0 %v838
      %886 = vmatprep.subr.bf16.mxu0 0
      %887 = vmatpush1.bf16.msra.mxu0 %v844
      %888 = vmatprep.subr.bf16.mxu0 0
      %889 = vmatpush1.bf16.msra.mxu0 %v850
      %890 = vmatprep.subr.bf16.mxu0 0
      %891 = vmatpush1.bf16.msra.mxu0 %v856
      %892 = vmatprep.subr.bf16.mxu0 0
      %893 = vmatpush1.bf16.msra.mxu0 %v862
      %894 = vmatprep.subr.bf16.mxu0 0
      %895 = vmatpush1.bf16.msra.mxu0 %v868
      %896 = vmatprep.subr.bf16.mxu0 0
      %897 = vmatpush1.bf16.msra.mxu0 %v874
      %898 = vmatprep.subr.bf16.mxu0 0
      %899 = vmatpush1.bf16.msra.mxu0 %v880
      %900 = vmatprep.subr.bf16.mxu0 0
      %901 = vmatpush1.bf16.msra.mxu0 0
      %902 = vmatprep.subr.bf16.mxu0 0
      %903 = vmatpush1.bf16.msra.mxu0 0
      %904 = vmatprep.subr.bf16.mxu0 0
      %905 = vmatpush1.bf16.msra.mxu0 0
      %906 = vmatprep.subr.bf16.mxu0 0
      %907 = vmatpush1.bf16.msra.mxu0 0
      %908 = vmatprep.subr.bf16.mxu0 0
      %909 = vmatpush1.bf16.msra.mxu0 0
      %910 = vmatprep.subr.bf16.mxu0 0
      %911 = vmatpush1.bf16.msra.mxu0 0
      %912 = vmatprep.subr.bf16.mxu0 0
      %913 = vmatpush1.bf16.msra.mxu0 0
      %914 = vmatprep.mubr.bf16.mxu0 %v438
      %915 = vmatmul.mubr.bf16.gmra.mrb[0].mxu0 %v430
      %v916 = vpop.f32.mrb[0].mxu0
      %v917 = vadd.f32 0.0, %v916
      %v918 = vpop.f32.mrb[0].mxu0
      %v919 = vpop.f32.mrb[0].mxu0
      %v920 = vadd.f32 0.0, %v919
      %v921 = vpop.f32.mrb[0].mxu0
      %922 = vmatprep.mubr.bf16.mxu0 %v441
      %923 = vmatmul.mubr.bf16.gmra.mrb[0].mxu0 %v432
      %v924 = vpop.f32.mrb[0].mxu0
      %v925 = vadd.f32 0.0, %v924
      %v926 = vpop.f32.mrb[0].mxu0
      %v927 = vpop.f32.mrb[0].mxu0
      %v928 = vadd.f32 0.0, %v927
      %v929 = vpop.f32.mrb[0].mxu0
      %930 = vdwg.mxu0
      %v931 = vmul.f32 %v917, %v495
      %v932 = vmul.f32 %v920, %v500
      %v933 = vmul.f32 %v925, %v505
      %v934 = vmul.f32 %v928, %v510
      %v935 = vadd.f32 %v931, %v519
      %v936 = vadd.f32 %v932, %v524
      %v937 = vadd.f32 %v933, %v529
      %v938 = vadd.f32 %v934, %v534
      %v939 = vmax.f32 %v935, 0.0
      %v940 = vmax.f32 %v936, 0.0
      %v941 = vmax.f32 %v937, 0.0
      %v942 = vmax.f32 %v938, 0.0
      %v943 = vpack.c.bf16 %v940, %v939
      %v944 = vpack.c.bf16 %v942, %v941
      %s945 = scalar_lea.vmem [#allocation2], 64
      %946 = vst [vmem:[%s945] sm:$0xff] %v943
      %947 = vst [vmem:[%s945 + $0x8] sm:$0xff] %v944
      %v948 = vld [vmem:[%s4] sm:$0xf]
      %v949 = vld [vmem:[%s5] sm:$0xff]
      %v950 = vld [vmem:[%s6] sm:$0xff]
      %v951 = vld [vmem:[#allocation2] sm:$0xff]
      %v952 = vld [vmem:[#allocation2 + $0x8] sm:$0xff]
      %v953 = vld [vmem:[%s546] sm:$0xff]
      %v954 = vld [vmem:[%s546 + $0x8] sm:$0xff]
      %v955 = vld [vmem:[%s679] sm:$0xff]
      %v956 = vld [vmem:[%s679 + $0x8] sm:$0xff]
      %vm957 = vcmask 785408
      %v959 = vsel %vm957, %v948, 0
      %961 = vmatprep.subr.bf16.mxu0 0
      %962 = vmatpush1.bf16.msra.mxu0 %v951
      %963 = vmatprep.subr.bf16.mxu0 0
      %964 = vmatpush1.bf16.msra.mxu0 %v952
      %965 = vmatprep.subr.bf16.mxu0 0
      %966 = vmatpush1.bf16.msra.mxu0 %v953
      %967 = vmatprep.subr.bf16.mxu0 0
      %968 = vmatpush1.bf16.msra.mxu0 %v954
      %969 = vmatprep.subr.bf16.mxu0 0
      %970 = vmatpush1.bf16.msra.mxu0 %v955
      %971 = vmatprep.subr.bf16.mxu0 0
      %972 = vmatpush1.bf16.msra.mxu0 %v956
      %973 = vmatprep.subr.bf16.mxu0 0
      %974 = vmatpush1.bf16.msra.mxu0 0
      %975 = vmatprep.subr.bf16.mxu0 0
      %976 = vmatpush1.bf16.msra.mxu0 0
      %977 = vmatprep.subr.bf16.mxu0 0
      %978 = vmatpush1.bf16.msra.mxu0 0
      %979 = vmatprep.subr.bf16.mxu0 0
      %980 = vmatpush1.bf16.msra.mxu0 0
      %981 = vmatprep.subr.bf16.mxu0 0
      %982 = vmatpush1.bf16.msra.mxu0 0
      %983 = vmatprep.subr.bf16.mxu0 0
      %984 = vmatpush1.bf16.msra.mxu0 0
      %985 = vmatprep.subr.bf16.mxu0 0
      %986 = vmatpush1.bf16.msra.mxu0 0
      %987 = vmatprep.subr.bf16.mxu0 0
      %988 = vmatpush1.bf16.msra.mxu0 0
      %989 = vmatprep.subr.bf16.mxu0 0
      %990 = vmatpush1.bf16.msra.mxu0 0
      %991 = vmatprep.subr.bf16.mxu0 0
      %992 = vmatpush1.bf16.msra.mxu0 0
      %993 = vmatprep.mubr.bf16.mxu0 0
      %994 = vmatmul.mubr.bf16.gmra.mrb[0].mxu0 %v959
      %v995 = vpop.f32.mrb[0].mxu0
      %v996 = vadd.f32 0.0, %v995
      %v997 = vpop.f32.mrb[0].mxu0
      %v998 = vpop.f32.mrb[0].mxu0
      %v999 = vpop.f32.mrb[0].mxu0
      %1000 = vdwg.mxu0
      %1002 = vset.pattern.permute.xlu0 0
      %1003 = vperm.xlu0 %1002, %v949
      %v1004 = vpop.permute.xlu0 %1003
      %v1006 = vmul.f32 %v996, %v1004
      %1008 = vset.pattern.permute.xlu0 0
      %1009 = vperm.xlu0 %1008, %v950
      %v1010 = vpop.permute.xlu0 %1009
      %v1012 = vadd.f32 %v1006, %v1010
      %v1013 = vld [vmem:[%s320] sm:$0xff]
      %v1014 = vadd.f32 %v1012, %v1013
      %v1015 = vmax.f32 %v1014, 0.0
      %1016 = vst [vmem:[%s325] sm:$0xff] %v1015
      %v1017 = vld [vmem:[%s546] sm:$0xff]
      %v1018 = vld [vmem:[%s546 + $0x8] sm:$0xff]
      %v1019 = vld [vmem:[%s679] sm:$0xff]
      %v1020 = vld [vmem:[%s679 + $0x8] sm:$0xff]
      %v1021 = vld [vmem:[%s812] sm:$0xff]
      %v1022 = vld [vmem:[%s812 + $0x8] sm:$0xff]
      %1023 = vmatprep.subr.bf16.mxu0 0
      %1024 = vmatpush1.bf16.msra.mxu0 %v1017
      %1025 = vmatprep.subr.bf16.mxu0 0
      %1026 = vmatpush1.bf16.msra.mxu0 %v1018
      %1027 = vmatprep.subr.bf16.mxu0 0
      %1028 = vmatpush1.bf16.msra.mxu0 %v1019
      %1029 = vmatprep.subr.bf16.mxu0 0
      %1030 = vmatpush1.bf16.msra.mxu0 %v1020
      %1031 = vmatprep.subr.bf16.mxu0 0
      %1032 = vmatpush1.bf16.msra.mxu0 %v1021
      %1033 = vmatprep.subr.bf16.mxu0 0
      %1034 = vmatpush1.bf16.msra.mxu0 %v1022
      %1035 = vmatprep.subr.bf16.mxu0 0
      %1036 = vmatpush1.bf16.msra.mxu0 0
      %1037 = vmatprep.subr.bf16.mxu0 0
      %1038 = vmatpush1.bf16.msra.mxu0 0
      %1039 = vmatprep.subr.bf16.mxu0 0
      %1040 = vmatpush1.bf16.msra.mxu0 0
      %1041 = vmatprep.subr.bf16.mxu0 0
      %1042 = vmatpush1.bf16.msra.mxu0 0
      %1043 = vmatprep.subr.bf16.mxu0 0
      %1044 = vmatpush1.bf16.msra.mxu0 0
      %1045 = vmatprep.subr.bf16.mxu0 0
      %1046 = vmatpush1.bf16.msra.mxu0 0
      %1047 = vmatprep.subr.bf16.mxu0 0
      %1048 = vmatpush1.bf16.msra.mxu0 0
      %1049 = vmatprep.subr.bf16.mxu0 0
      %1050 = vmatpush1.bf16.msra.mxu0 0
      %1051 = vmatprep.subr.bf16.mxu0 0
      %1052 = vmatpush1.bf16.msra.mxu0 0
      %1053 = vmatprep.subr.bf16.mxu0 0
      %1054 = vmatpush1.bf16.msra.mxu0 0
      %1055 = vmatprep.mubr.bf16.mxu0 0
      %1056 = vmatmul.mubr.bf16.gmra.mrb[0].mxu0 %v959
      %v1057 = vpop.f32.mrb[0].mxu0
      %v1058 = vadd.f32 0.0, %v1057
      %v1059 = vpop.f32.mrb[0].mxu0
      %v1060 = vpop.f32.mrb[0].mxu0
      %v1061 = vpop.f32.mrb[0].mxu0
      %1062 = vdwg.mxu0
      %v1063 = vmul.f32 %v1058, %v1004
      %v1064 = vadd.f32 %v1063, %v1010
      %s1065 = scalar_lea.vmem %s320, 8
      %v1066 = vld [vmem:[%s1065] sm:$0xff]
      %v1067 = vadd.f32 %v1064, %v1066
      %v1068 = vmax.f32 %v1067, 0.0
      %s1069 = scalar_lea.vmem %s325, 8
      %1070 = vst [vmem:[%s1069] sm:$0xff] %v1068
      %v1071 = vld [vmem:[%s679] sm:$0xff]
      %v1072 = vld [vmem:[%s679 + $0x8] sm:$0xff]
      %v1073 = vld [vmem:[%s812] sm:$0xff]
      %v1074 = vld [vmem:[%s812 + $0x8] sm:$0xff]
      %v1075 = vld [vmem:[%s945] sm:$0xff]
      %v1076 = vld [vmem:[%s945 + $0x8] sm:$0xff]
      %1077 = vmatprep.subr.bf16.mxu0 0
      %1078 = vmatpush1.bf16.msra.mxu0 %v1071
      %1079 = vmatprep.subr.bf16.mxu0 0
      %1080 = vmatpush1.bf16.msra.mxu0 %v1072
      %1081 = vmatprep.subr.bf16.mxu0 0
      %1082 = vmatpush1.bf16.msra.mxu0 %v1073
      %1083 = vmatprep.subr.bf16.mxu0 0
      %1084 = vmatpush1.bf16.msra.mxu0 %v1074
      %1085 = vmatprep.subr.bf16.mxu0 0
      %1086 = vmatpush1.bf16.msra.mxu0 %v1075
      %1087 = vmatprep.subr.bf16.mxu0 0
      %1088 = vmatpush1.bf16.msra.mxu0 %v1076
      %1089 = vmatprep.subr.bf16.mxu0 0
      %1090 = vmatpush1.bf16.msra.mxu0 0
      %1091 = vmatprep.subr.bf16.mxu0 0
      %1092 = vmatpush1.bf16.msra.mxu0 0
      %1093 = vmatprep.subr.bf16.mxu0 0
      %1094 = vmatpush1.bf16.msra.mxu0 0
      %1095 = vmatprep.subr.bf16.mxu0 0
      %1096 = vmatpush1.bf16.msra.mxu0 0
      %1097 = vmatprep.subr.bf16.mxu0 0
      %1098 = vmatpush1.bf16.msra.mxu0 0
      %1099 = vmatprep.subr.bf16.mxu0 0
      %1100 = vmatpush1.bf16.msra.mxu0 0
      %1101 = vmatprep.subr.bf16.mxu0 0
      %1102 = vmatpush1.bf16.msra.mxu0 0
      %1103 = vmatprep.subr.bf16.mxu0 0
      %1104 = vmatpush1.bf16.msra.mxu0 0
      %1105 = vmatprep.subr.bf16.mxu0 0
      %1106 = vmatpush1.bf16.msra.mxu0 0
      %1107 = vmatprep.subr.bf16.mxu0 0
      %1108 = vmatpush1.bf16.msra.mxu0 0
      %1109 = vmatprep.mubr.bf16.mxu0 0
      %1110 = vmatmul.mubr.bf16.gmra.mrb[0].mxu0 %v959
      %v1111 = vpop.f32.mrb[0].mxu0
      %v1112 = vadd.f32 0.0, %v1111
      %v1113 = vpop.f32.mrb[0].mxu0
      %v1114 = vpop.f32.mrb[0].mxu0
      %v1115 = vpop.f32.mrb[0].mxu0
      %1116 = vdwg.mxu0
      %v1117 = vmul.f32 %v1112, %v1004
      %v1118 = vadd.f32 %v1117, %v1010
      %s1119 = scalar_lea.vmem %s320, 16
      %v1120 = vld [vmem:[%s1119] sm:$0xff]
      %v1121 = vadd.f32 %v1118, %v1120
      %v1122 = vmax.f32 %v1121, 0.0
      %s1123 = scalar_lea.vmem %s325, 16
      %1124 = vst [vmem:[%s1123] sm:$0xff] %v1122
      %v1125 = vld [vmem:[%s812] sm:$0xff]
      %v1126 = vld [vmem:[%s812 + $0x8] sm:$0xff]
      %v1127 = vld [vmem:[%s945] sm:$0xff]
      %v1128 = vld [vmem:[%s945 + $0x8] sm:$0xff]
      %v1129 = vld [vmem:[%s341] sm:$0xff]
      %v1130 = vld [vmem:[%s341 + $0x8] sm:$0xff]
      %1131 = vmatprep.subr.bf16.mxu0 0
      %1132 = vmatpush1.bf16.msra.mxu0 %v1125
      %1133 = vmatprep.subr.bf16.mxu0 0
      %1134 = vmatpush1.bf16.msra.mxu0 %v1126
      %1135 = vmatprep.subr.bf16.mxu0 0
      %1136 = vmatpush1.bf16.msra.mxu0 %v1127
      %1137 = vmatprep.subr.bf16.mxu0 0
      %1138 = vmatpush1.bf16.msra.mxu0 %v1128
      %1139 = vmatprep.subr.bf16.mxu0 0
      %1140 = vmatpush1.bf16.msra.mxu0 %v1129
      %1141 = vmatprep.subr.bf16.mxu0 0
      %1142 = vmatpush1.bf16.msra.mxu0 %v1130
      %1143 = vmatprep.subr.bf16.mxu0 0
      %1144 = vmatpush1.bf16.msra.mxu0 0
      %1145 = vmatprep.subr.bf16.mxu0 0
      %1146 = vmatpush1.bf16.msra.mxu0 0
      %1147 = vmatprep.subr.bf16.mxu0 0
      %1148 = vmatpush1.bf16.msra.mxu0 0
      %1149 = vmatprep.subr.bf16.mxu0 0
      %1150 = vmatpush1.bf16.msra.mxu0 0
      %1151 = vmatprep.subr.bf16.mxu0 0
      %1152 = vmatpush1.bf16.msra.mxu0 0
      %1153 = vmatprep.subr.bf16.mxu0 0
      %1154 = vmatpush1.bf16.msra.mxu0 0
      %1155 = vmatprep.subr.bf16.mxu0 0
      %1156 = vmatpush1.bf16.msra.mxu0 0
      %1157 = vmatprep.subr.bf16.mxu0 0
      %1158 = vmatpush1.bf16.msra.mxu0 0
      %1159 = vmatprep.subr.bf16.mxu0 0
      %1160 = vmatpush1.bf16.msra.mxu0 0
      %1161 = vmatprep.subr.bf16.mxu0 0
      %1162 = vmatpush1.bf16.msra.mxu0 0
      %1163 = vmatprep.mubr.bf16.mxu0 0
      %1164 = vmatmul.mubr.bf16.gmra.mrb[0].mxu0 %v959
      %v1165 = vpop.f32.mrb[0].mxu0
      %v1166 = vadd.f32 0.0, %v1165
      %v1167 = vpop.f32.mrb[0].mxu0
      %v1168 = vpop.f32.mrb[0].mxu0
      %v1169 = vpop.f32.mrb[0].mxu0
      %1170 = vdwg.mxu0
      %v1171 = vmul.f32 %v1166, %v1004
      %v1172 = vadd.f32 %v1171, %v1010
      %s1173 = scalar_lea.vmem %s320, 24
      %v1174 = vld [vmem:[%s1173] sm:$0xff]
      %v1175 = vadd.f32 %v1172, %v1174
      %v1176 = vmax.f32 %v1175, 0.0
      %s1177 = scalar_lea.vmem %s325, 24
      %1178 = vst [vmem:[%s1177] sm:$0xff] %v1176
      %p1179 = scmp.lt.s32.totalorder %s19, 1
      %s1180 = scalar_select %p1179, %s19, 1
      %s1181 = smul.addr %s1180, 4
      %s1182 = smul.addr %s1181, 8
      %s1183 = scalar_lea.vmem %s8, %s1182
      // Predicated region
      $region53: #{res_block_forward.5} parent=51 // pred_check
        %p1184 = pneg %p215
      $region54: #{res_block_forward.5} parent=51 // pred_check_branch
        %1186 = sbr.rel (%p1184) target = $region56
      $region55: #{res_block_forward.5} parent=51 // pred_region
        _
      $region56: #{res_block_forward.5} parent=51 // pred_fallthru
        _
    $region52: #{res_block_forward.5} parent=5 // pred_fallthru
      _
    %p1187 = scmp.le.s32.totalorder 2, %s14
    // Predicated region
    $region57: #{res_block_forward.5} parent=5 // pred_check
      %p1188 = pneg %p1187
    $region58: #{res_block_forward.5} parent=5 // pred_check_branch
      %1190 = sbr.rel (%p1188) target = $region60
    $region59: #{res_block_forward.5} parent=5 // pred_region
      %s1191 = ssub.s32 %s14, 2
      // Predicated region
      $region61: #{res_block_forward.5} parent=59 // pred_check
        %p1192 = pneg %p221
      $region62: #{res_block_forward.5} parent=59 // pred_check_branch
        %1194 = sbr.rel (%p1192) target = $region64
      $region63: #{res_block_forward.5} parent=59 // pred_region
        %p1195 = scmp.lt.s32.totalorder %s20, 1
        %s1196 = scalar_select %p1195, %s20, 1
        %s1197 = smul.addr %s1196, 4
        %s1198 = smul.addr %s1197, 8
        %s1199 = scalar_lea.vmem %s8, %s1198
      $region64: #{res_block_forward.5} parent=59 // pred_fallthru
        _
    $region60: #{res_block_forward.5} parent=5 // pred_fallthru
      _
  $region6: #{res_block_forward.5} parent=0 // loop_footer
    %s18 = sadd.s32 1, %s14
  $region7: #{res_block_forward.5} parent=0 // loop_footer_branch
    %13 = sbr.rel target = $region3
  $region8: #{res_block_forward.5} parent=0 // loop_exit
    _

</llo_original>
